<compile_context>
chip_gen: v6e
topology: v6e:2x2x1
jax: 0.10.0
libtpu: 0.0.40
codegen_flags: <defaults>
</compile_context>

<pallas_src>
import math
from functools import partial

import numpy as np
import jax
import jax.numpy as jnp
from jax.experimental import pallas as pl
from jax.experimental.pallas import tpu as pltpu

_VMEM_LIMIT = 32 * 1024 * 1024  # safe on v5e/v6e/v7x for these small blocks


def _round_up(x, m):
    return ((x + m - 1) // m) * m


# ----------------------------------------------------------------------------- kernels

def _conv_gn_relu_kernel(x_ref, w_ref, g_ref, bt_ref, oh_ref, oht_ref, o_ref,
                         *, eps, inv_n):
    """Fused (im2col'ed 3x3 conv) + GroupNorm + ReLU for one batch element.

    x_ref:  [1, HW, 9*Cin]  bf16 columns
    w_ref:  [9*Cin, Cout]   bf16
    g_ref / bt_ref: [1, Cout] f32 (GN gamma / beta)
    oh_ref: [Cout, G] f32 channel->group one-hot; oht_ref: [G, Cout]
    o_ref:  [1, HW, Cout]   bf16
    """
    x = x_ref[0]                                                   # [HW, K] bf16
    acc = jnp.dot(x, w_ref[...], preferred_element_type=jnp.float32)  # [HW, C] f32 (MXU)

    oh = oh_ref[...]
    oht = oht_ref[...]
    # two-pass GroupNorm over (HW, C/G) per group -- all on the VMEM-resident acc
    s1 = jnp.dot(jnp.sum(acc, axis=0, keepdims=True), oh,
                 preferred_element_type=jnp.float32)               # [1, G]
    mean_c = jnp.dot(s1 * inv_n, oht, preferred_element_type=jnp.float32)  # [1, C]
    d = acc - mean_c
    s2 = jnp.dot(jnp.sum(d * d, axis=0, keepdims=True), oh,
                 preferred_element_type=jnp.float32)               # [1, G]
    var_c = jnp.dot(s2 * inv_n, oht, preferred_element_type=jnp.float32)   # [1, C]

    y = d * jax.lax.rsqrt(var_c + eps)
    y = y * g_ref[...] + bt_ref[...]
    o_ref[0] = jnp.maximum(y, 0.0).astype(o_ref.dtype)


def conv3x3_gn_relu(cols, w, gamma, beta, num_groups, eps=1e-5):
    """cols: [B, HW, 9*Cin] bf16 -> fused conv+GN+ReLU -> [B, HW, Cout] bf16."""
    B, HW, K = cols.shape
    Cout = w.shape[1]
    cs = Cout // num_groups
    oh = (jnp.arange(Cout)[:, None] // cs ==
          jnp.arange(num_groups)[None, :]).astype(jnp.float32)
    # TODO(synk): for real FPN levels (e.g. 200x272 maps) tile this kernel over HW with an
    # "arbitrary" reduction axis for the GN statistics instead of one full-map block per batch
    # (the (1, HW, 9*Cin) block would not fit v7x's 64 MiB VMEM).
    return pl.pallas_call(
        partial(_conv_gn_relu_kernel, eps=eps, inv_n=1.0 / float(HW * cs)),
        out_shape=jax.ShapeDtypeStruct((B, HW, Cout), jnp.bfloat16),
        grid=(B,),
        in_specs=[pl.BlockSpec((1, HW, K), lambda b: (b, 0, 0)),
                  pl.BlockSpec((K, Cout), lambda b: (0, 0)),
                  pl.BlockSpec((1, Cout), lambda b: (0, 0)),
                  pl.BlockSpec((1, Cout), lambda b: (0, 0)),
                  pl.BlockSpec((Cout, num_groups), lambda b: (0, 0)),
                  pl.BlockSpec((num_groups, Cout), lambda b: (0, 0))],
        out_specs=pl.BlockSpec((1, HW, Cout), lambda b: (b, 0, 0)),
        compiler_params=pltpu.CompilerParams(dimension_semantics=("parallel",),
                                             vmem_limit_bytes=_VMEM_LIMIT),
    )(cols.astype(jnp.bfloat16), w.astype(jnp.bfloat16),
      gamma.reshape(1, Cout).astype(jnp.float32),
      beta.reshape(1, Cout).astype(jnp.float32), oh, oh.T)


def _fused_head_kernel(*refs, has_b1):
    """y = (relu(x @ w1 [+ b1])) @ w2 + b2, intermediate stays in VMEM."""
    if has_b1:
        x_ref, w1_ref, b1_ref, w2_ref, b2_ref, o_ref = refs
    else:
        x_ref, w1_ref, w2_ref, b2_ref, o_ref = refs
        b1_ref = None
    t = jnp.dot(x_ref[...], w1_ref[...], preferred_element_type=jnp.float32)
    if has_b1:
        t = t + b1_ref[...]
    t = jnp.maximum(t, 0.0)
    y = jnp.dot(t.astype(jnp.bfloat16), w2_ref[...],
                preferred_element_type=jnp.float32)
    o_ref[...] = y + b2_ref[...]


def fused_head(x, w1, w2, b2, b1=None, tm_max=512):
    """x:[M,K1] -> relu(x@w1[+b1]) @ w2 + b2 -> [M,N] f32. Matmul operands in bf16."""
    M, K1 = x.shape
    C1 = w1.shape[1]
    N = w2.shape[1]
    tm = min(tm_max, _round_up(M, 8))
    M_pad = _round_up(M, tm)
    if M_pad != M:
        x = jnp.pad(x, ((0, M_pad - M), (0, 0)))
    has_b1 = b1 is not None

    in_specs = [pl.BlockSpec((tm, K1), lambda i: (i, 0)),
                pl.BlockSpec((K1, C1), lambda i: (0, 0))]
    args = [x.astype(jnp.bfloat16), w1.astype(jnp.bfloat16)]
    if has_b1:
        in_specs.append(pl.BlockSpec((1, C1), lambda i: (0, 0)))
        args.append(b1.reshape(1, C1).astype(jnp.float32))
    in_specs += [pl.BlockSpec((C1, N), lambda i: (0, 0)),
                 pl.BlockSpec((1, N), lambda i: (0, 0))]
    args += [w2.astype(jnp.bfloat16), b2.reshape(1, N).astype(jnp.float32)]

    out = pl.pallas_call(
        partial(_fused_head_kernel, has_b1=has_b1),
        out_shape=jax.ShapeDtypeStruct((M_pad, N), jnp.float32),
        grid=(pl.cdiv(M_pad, tm),),
        in_specs=in_specs,
        out_specs=pl.BlockSpec((tm, N), lambda i: (i, 0)),
        compiler_params=pltpu.CompilerParams(dimension_semantics=("parallel",),
                                             vmem_limit_bytes=_VMEM_LIMIT),
    )(*args)
    return out[:M] if M_pad != M else out


# ----------------------------------------------------------------------------- JAX glue

def im2col3x3(x):
    """x:[B,H,W,C] NHWC (bf16), pad=1, stride=1 -> columns [B, H*W, 9*C] (k-major, c-minor)."""
    B, H, W, C = x.shape
    xp = jnp.pad(x, ((0, 0), (1, 1), (1, 1), (0, 0)))
    cols = [xp[:, ky:ky + H, kx:kx + W, :] for ky in range(3) for kx in range(3)]
    return jnp.stack(cols, axis=3).reshape(B, H * W, 9 * C)


# TODO(synk): deformable-conv bilinear sampling is a data-dependent gather; it is done in
# plain JAX/XLA here (shared between the cls and refine branches via channel concat), and
# only the 9-tap weighted contraction + heads run on the MXU in Pallas. A Pallas version
# would use PrefetchScalarGridSpec with offsets prefetched to SMEM.
def deform_sample(x, offset):
    """x:[B,H,W,C], offset:[B,H,W,2K] interleaved (dy,dx) per kernel point (mmcv DeformConv
    convention, zero padding outside). Returns sampled taps [B, H*W, K, C] in f32."""
    B, H, W, C = x.shape
    K = offset.shape[-1] // 2
    kk = int(round(math.sqrt(K)))
    half = (kk - 1) // 2
    xf = x.reshape(B, H * W, C)
    gi = jnp.arange(H, dtype=jnp.float32).reshape(1, H, 1)
    gj = jnp.arange(W, dtype=jnp.float32).reshape(1, 1, W)
    gather = jax.vmap(lambda xb, ib: xb[ib])  # per-batch gather
    samples = []
    for k in range(K):
        ky = k // kk - half
        kx = k % kk - half
        py = gi + ky + offset[..., 2 * k]        # [B,H,W]
        px = gj + kx + offset[..., 2 * k + 1]
        y0 = jnp.floor(py)
        x0 = jnp.floor(px)
        ly = py - y0
        lx = px - x0
        acc = jnp.zeros((B, H, W, C), jnp.float32)
        for dy_c, dx_c in ((0, 0), (0, 1), (1, 0), (1, 1)):
            cy = y0 + dy_c
            cx = x0 + dx_c
            wgt = (ly if dy_c else (1.0 - ly)) * (lx if dx_c else (1.0 - lx))
            valid = (cy >= 0) & (cy <= H - 1) & (cx >= 0) & (cx <= W - 1)
            cyi = jnp.clip(cy, 0, H - 1).astype(jnp.int32)
            cxi = jnp.clip(cx, 0, W - 1).astype(jnp.int32)
            idx = (cyi * W + cxi).reshape(B, H * W)
            v = gather(xf, idx).reshape(B, H, W, C)
            acc = acc + jnp.where(valid, wgt, 0.0)[..., None] * v.astype(jnp.float32)
        samples.append(acc)
    return jnp.stack(samples, axis=3).reshape(B, H * W, K, C)


# ----------------------------------------------------------------------------- params

def init_params(key, *, num_classes, in_channels, feat_channels, point_feat_channels,
                stacked_convs, num_points):
    pts_out_dim = 2 * num_points
    keys = list(jax.random.split(key, 2 * stacked_convs + 6))
    ki = iter(keys)

    def conv3x3_mat(cin, cout):
        w = jax.random.normal(next(ki), (cout, cin, 3, 3), jnp.float32) * 0.01
        return jnp.transpose(w, (2, 3, 1, 0)).reshape(9 * cin, cout)   # [(k,c), o]

    def conv1x1_mat(cin, cout):
        w = jax.random.normal(next(ki), (cout, cin, 1, 1), jnp.float32) * 0.01
        return w.reshape(cout, cin).T                                   # [c, o]

    p = {'cls_convs': [], 'reg_convs': []}
    for i in range(stacked_convs):
        chn = in_channels if i == 0 else feat_channels
        p['cls_convs'].append(dict(w=conv3x3_mat(chn, feat_channels),
                                   gamma=jnp.ones((feat_channels,), jnp.float32),
                                   beta=jnp.zeros((feat_channels,), jnp.float32)))
    for i in range(stacked_convs):
        chn = in_channels if i == 0 else feat_channels
        p['reg_convs'].append(dict(w=conv3x3_mat(chn, feat_channels),
                                   gamma=jnp.ones((feat_channels,), jnp.float32),
                                   beta=jnp.zeros((feat_channels,), jnp.float32)))
    # DeformConv2d weights (no bias in mmcv DeformConv2d)
    p['cls_dcn_w'] = conv3x3_mat(feat_channels, point_feat_channels)
    p['refine_dcn_w'] = conv3x3_mat(feat_channels, point_feat_channels)
    # 1x1 heads
    p['cls_out_w'] = conv1x1_mat(point_feat_channels, num_classes)
    p['cls_out_b'] = jnp.full((num_classes,), -math.log((1 - 0.01) / 0.01), jnp.float32)
    p['init_conv_w'] = conv1x1_mat(feat_channels, point_feat_channels)
    p['init_conv_b'] = jnp.zeros((point_feat_channels,), jnp.float32)
    p['init_out_w'] = conv1x1_mat(point_feat_channels, pts_out_dim)
    p['init_out_b'] = jnp.zeros((pts_out_dim,), jnp.float32)
    p['refine_out_w'] = conv1x1_mat(point_feat_channels, pts_out_dim)
    p['refine_out_b'] = jnp.zeros((pts_out_dim,), jnp.float32)
    return p


def make_dcn_base_offset(num_points):
    kk = int(round(math.sqrt(num_points)))
    pad = (kk - 1) // 2
    base = np.arange(-pad, pad + 1).astype(np.float64)
    base_y = np.repeat(base, kk)
    base_x = np.tile(base, kk)
    return jnp.asarray(np.stack([base_y, base_x], axis=1).reshape(-1), jnp.float32)  # [2K]


# ----------------------------------------------------------------------------- forward

def single_forward(p, x_nchw, dcn_base_offset, *, num_points, gn_groups):
    x = jnp.transpose(x_nchw, (0, 2, 3, 1)).astype(jnp.bfloat16)   # NHWC, bf16 for the MXU
    B, H, W, _ = x.shape
    feat_ch = p['cls_convs'][0]['gamma'].shape[0]

    def tower(feat, convs):
        for layer in convs:
            cols = im2col3x3(feat)                                  # [B, HW, 9*Cin] bf16
            y = conv3x3_gn_relu(cols, layer['w'], layer['gamma'], layer['beta'], gn_groups)
            feat = y.reshape(B, H, W, feat_ch)                      # bf16
        return feat

    cls_feat = tower(x, p['cls_convs'])
    pts_feat = tower(x, p['reg_convs'])

    # pts init branch: fused (1x1 conv -> relu -> 1x1 conv); output kept in f32
    pf = pts_feat.reshape(B * H * W, feat_ch)
    pts_out_init = fused_head(pf, p['init_conv_w'], p['init_out_w'], p['init_out_b'],
                              b1=p['init_conv_b'])
    pts_out_init = pts_out_init.reshape(B, H, W, 2 * num_points)
    # center_init=True, use_grid_points=False -> points_init == 0
    # gradient_mul trick has identical forward value; dcn_offset = pts - base
    dcn_offset = pts_out_init - dcn_base_offset                     # f32, [B,H,W,2K]

    # Shared deformable sampling for both branches (identical offsets): sample the
    # channel-concatenated [cls_feat | pts_feat] map once, then split.
    feat_cat = jnp.concatenate([cls_feat, pts_feat], axis=-1)       # [B,H,W,2*Cf] bf16
    cols_cat = deform_sample(feat_cat, dcn_offset)                  # [B, HW, K, 2*Cf] f32
    cls_cols = cols_cat[..., :feat_ch].reshape(B * H * W, num_points * feat_ch)
    ref_cols = cols_cat[..., feat_ch:].reshape(B * H * W, num_points * feat_ch)

    # classification branch: fused (deform-conv matmul -> relu -> 1x1 conv)
    cls_out = fused_head(cls_cols, p['cls_dcn_w'], p['cls_out_w'], p['cls_out_b'])
    cls_out = cls_out.reshape(B, H, W, -1)

    # refinement branch: fused (deform-conv matmul -> relu -> 1x1 conv), f32 residual add
    ref = fused_head(ref_cols, p['refine_dcn_w'], p['refine_out_w'], p['refine_out_b'])
    pts_out_refine = ref.reshape(B, H, W, 2 * num_points) + pts_out_init

    to_nchw = lambda a: jnp.transpose(a, (0, 3, 1, 2))
    return to_nchw(cls_out), to_nchw(pts_out_init), to_nchw(pts_out_refine)


_single_forward_jit = jax.jit(single_forward, static_argnames=("num_points", "gn_groups"))


def forward(p, feats, *, num_points, gn_groups, dcn_base_offset):
    outs = [_single_forward_jit(p, f, dcn_base_offset,
                                num_points=num_points, gn_groups=gn_groups) for f in feats]
    cls_list, init_list, refine_list = (list(t) for t in zip(*outs))
    return cls_list, init_list, refine_list


# ----------------------------------------------------------------------------- main

if __name__ == "__main__":
    num_classes = 4
    in_channels = 16
    feat_channels = 32
    point_feat_channels = 32
    stacked_convs = 2
    num_points = 9
    gn_groups = 4

    key = jax.random.PRNGKey(0)
    pkey, xk1, xk2 = jax.random.split(key, 3)
    params = init_params(pkey,
                         num_classes=num_classes,
                         in_channels=in_channels,
                         feat_channels=feat_channels,
                         point_feat_channels=point_feat_channels,
                         stacked_convs=stacked_convs,
                         num_points=num_points)
    dcn_base_offset = make_dcn_base_offset(num_points)

    # two FPN levels (NCHW, like the PyTorch module)
    feats = [jax.random.normal(xk1, (2, in_channels, 8, 8), jnp.float32),
             jax.random.normal(xk2, (2, in_channels, 4, 4), jnp.float32)]

    cls_list, init_list, refine_list = forward(
        params, feats,
        num_points=num_points, gn_groups=gn_groups, dcn_base_offset=dcn_base_offset)

    for o in cls_list + init_list + refine_list:
        jax.block_until_ready(o)

    # sanity: shapes match PyTorch module contract
    assert cls_list[0].shape == (2, num_classes, 8, 8)
    assert init_list[0].shape == (2, 2 * num_points, 8, 8)
    assert refine_list[1].shape == (2, 2 * num_points, 4, 4)
    print("KERNEL_OK")
</pallas_src>

<mosaic_0001>
module attributes {stable_mosaic.version = 11 : i64} {
  func.func @_conv_gn_relu_kernel(%arg0: i32, %arg1: memref<1x64x144xbf16, #tpu.memory_space<vmem>>, %arg2: memref<144x32xbf16, #tpu.memory_space<vmem>>, %arg3: memref<1x32xf32, #tpu.memory_space<vmem>>, %arg4: memref<1x32xf32, #tpu.memory_space<vmem>>, %arg5: memref<32x4xf32, #tpu.memory_space<vmem>>, %arg6: memref<4x32xf32, #tpu.memory_space<vmem>>, %arg7: memref<1x64x32xbf16, #tpu.memory_space<vmem>>) attributes {dimension_semantics = [#tpu.dimension_semantics<parallel>], iteration_bounds = array<i64: 2>, scalar_prefetch = 0 : i64, scratch_operands = 0 : i64, tpu.core_type = #tpu.core_type<tc>, window_params = [{transform_indices = @transform_0, window_bounds = array<i64: 1, 64, 144>}, {pipeline_mode = #tpu.pipeline_mode<synchronous>, transform_indices = @transform_1, window_bounds = array<i64: 144, 32>}, {pipeline_mode = #tpu.pipeline_mode<synchronous>, transform_indices = @transform_2, window_bounds = array<i64: 1, 32>}, {pipeline_mode = #tpu.pipeline_mode<synchronous>, transform_indices = @transform_3, window_bounds = array<i64: 1, 32>}, {pipeline_mode = #tpu.pipeline_mode<synchronous>, transform_indices = @transform_4, window_bounds = array<i64: 32, 4>}, {pipeline_mode = #tpu.pipeline_mode<synchronous>, transform_indices = @transform_5, window_bounds = array<i64: 4, 32>}, {transform_indices = @transform_6, window_bounds = array<i64: 1, 64, 32>}]} {
    %c0 = arith.constant 0 : index
    %c0_0 = arith.constant 0 : index
    %c0_1 = arith.constant 0 : index
    %0 = vector.load %arg1[%c0, %c0_0, %c0_1] : memref<1x64x144xbf16, #tpu.memory_space<vmem>>, vector<1x64x144xbf16>
    %1 = vector.shape_cast %0 : vector<1x64x144xbf16> to vector<64x144xbf16>
    %c0_2 = arith.constant 0 : index
    %c0_3 = arith.constant 0 : index
    %2 = vector.load %arg2[%c0_2, %c0_3] : memref<144x32xbf16, #tpu.memory_space<vmem>>, vector<144x32xbf16>
    %cst = arith.constant dense<0.000000e+00> : vector<64x32xf32>
    %3 = tpu.matmul %1, %2, %cst {dimension_numbers = #tpu.dot_dimension_numbers<[1], [0], [0], [1], [0, 0, 1, 1], [], []>} : vector<64x144xbf16>, vector<144x32xbf16>, vector<64x32xf32> -> vector<64x32xf32>
    %c0_4 = arith.constant 0 : index
    %c0_5 = arith.constant 0 : index
    %4 = vector.load %arg5[%c0_4, %c0_5] : memref<32x4xf32, #tpu.memory_space<vmem>>, vector<32x4xf32>
    %c0_6 = arith.constant 0 : index
    %c0_7 = arith.constant 0 : index
    %5 = vector.load %arg6[%c0_6, %c0_7] : memref<4x32xf32, #tpu.memory_space<vmem>>, vector<4x32xf32>
    %cst_8 = arith.constant dense<0.000000e+00> : vector<32xf32>
    %6 = vector.multi_reduction <add>, %3, %cst_8 [0] : vector<64x32xf32> to vector<32xf32>
    %7 = vector.shape_cast %6 : vector<32xf32> to vector<1x32xf32>
    %cst_9 = arith.constant dense<0.000000e+00> : vector<1x4xf32>
    %8 = tpu.matmul %7, %4, %cst_9 {dimension_numbers = #tpu.dot_dimension_numbers<[1], [0], [0], [1], [0, 0, 1, 1], [], []>} : vector<1x32xf32>, vector<32x4xf32>, vector<1x4xf32> -> vector<1x4xf32>
    %cst_10 = arith.constant 0.001953125 : f32
    %9 = vector.broadcast %cst_10 : f32 to vector<1x4xf32>
    %10 = arith.mulf %8, %9 : vector<1x4xf32>
    %cst_11 = arith.constant dense<0.000000e+00> : vector<1x32xf32>
    %11 = tpu.matmul %10, %5, %cst_11 {dimension_numbers = #tpu.dot_dimension_numbers<[1], [0], [0], [1], [0, 0, 1, 1], [], []>} : vector<1x4xf32>, vector<4x32xf32>, vector<1x32xf32> -> vector<1x32xf32>
    %12 = vector.broadcast %11 : vector<1x32xf32> to vector<64x32xf32>
    %13 = arith.subf %3, %12 : vector<64x32xf32>
    %14 = arith.mulf %13, %13 : vector<64x32xf32>
    %cst_12 = arith.constant dense<0.000000e+00> : vector<32xf32>
    %15 = vector.multi_reduction <add>, %14, %cst_12 [0] : vector<64x32xf32> to vector<32xf32>
    %16 = vector.shape_cast %15 : vector<32xf32> to vector<1x32xf32>
    %cst_13 = arith.constant dense<0.000000e+00> : vector<1x4xf32>
    %17 = tpu.matmul %16, %4, %cst_13 {dimension_numbers = #tpu.dot_dimension_numbers<[1], [0], [0], [1], [0, 0, 1, 1], [], []>} : vector<1x32xf32>, vector<32x4xf32>, vector<1x4xf32> -> vector<1x4xf32>
    %cst_14 = arith.constant 0.001953125 : f32
    %18 = vector.broadcast %cst_14 : f32 to vector<1x4xf32>
    %19 = arith.mulf %17, %18 : vector<1x4xf32>
    %cst_15 = arith.constant dense<0.000000e+00> : vector<1x32xf32>
    %20 = tpu.matmul %19, %5, %cst_15 {dimension_numbers = #tpu.dot_dimension_numbers<[1], [0], [0], [1], [0, 0, 1, 1], [], []>} : vector<1x4xf32>, vector<4x32xf32>, vector<1x32xf32> -> vector<1x32xf32>
    %cst_16 = arith.constant 9.99999974E-6 : f32
    %21 = vector.broadcast %cst_16 : f32 to vector<1x32xf32>
    %22 = arith.addf %20, %21 : vector<1x32xf32>
    %23 = math.rsqrt %22 : vector<1x32xf32>
    %24 = vector.broadcast %23 : vector<1x32xf32> to vector<64x32xf32>
    %25 = arith.mulf %13, %24 : vector<64x32xf32>
    %c0_17 = arith.constant 0 : index
    %c0_18 = arith.constant 0 : index
    %26 = vector.load %arg3[%c0_17, %c0_18] : memref<1x32xf32, #tpu.memory_space<vmem>>, vector<1x32xf32>
    %27 = vector.broadcast %26 : vector<1x32xf32> to vector<64x32xf32>
    %28 = arith.mulf %25, %27 : vector<64x32xf32>
    %c0_19 = arith.constant 0 : index
    %c0_20 = arith.constant 0 : index
    %29 = vector.load %arg4[%c0_19, %c0_20] : memref<1x32xf32, #tpu.memory_space<vmem>>, vector<1x32xf32>
    %30 = vector.broadcast %29 : vector<1x32xf32> to vector<64x32xf32>
    %31 = arith.addf %28, %30 : vector<64x32xf32>
    %cst_21 = arith.constant 0.000000e+00 : f32
    %32 = vector.broadcast %cst_21 : f32 to vector<64x32xf32>
    %33 = arith.maximumf %31, %32 : vector<64x32xf32>
    %34 = arith.truncf %33 : vector<64x32xf32> to vector<64x32xbf16>
    %c0_22 = arith.constant 0 : index
    %c0_23 = arith.constant 0 : index
    %c0_24 = arith.constant 0 : index
    %35 = vector.load %arg7[%c0_22, %c0_23, %c0_24] : memref<1x64x32xbf16, #tpu.memory_space<vmem>>, vector<1x64x32xbf16>
    %36 = vector.shape_cast %35 : vector<1x64x32xbf16> to vector<64x32xbf16>
    %37 = vector.shape_cast %34 : vector<64x32xbf16> to vector<1x64x32xbf16>
    tpu.vector_store %arg7[%c0_22, %c0_23, %c0_24], %37 {strides = array<i32>} : memref<1x64x32xbf16, #tpu.memory_space<vmem>>, vector<1x64x32xbf16>,
    return
  }
  func.func @transform_0(%arg0: i32) -> (i32, i32, i32) {
    %c0_i32 = arith.constant 0 : i32
    %c0_i32_0 = arith.constant 0 : i32
    %c0_i32_1 = arith.constant 0 : i32
    return %arg0, %c0_i32, %c0_i32_0 : i32, i32, i32
  }
  func.func @transform_1(%arg0: i32) -> (i32, i32) {
    %c0_i32 = arith.constant 0 : i32
    %c0_i32_0 = arith.constant 0 : i32
    %c0_i32_1 = arith.constant 0 : i32
    return %c0_i32, %c0_i32_0 : i32, i32
  }
  func.func @transform_2(%arg0: i32) -> (i32, i32) {
    %c0_i32 = arith.constant 0 : i32
    %c0_i32_0 = arith.constant 0 : i32
    %c0_i32_1 = arith.constant 0 : i32
    return %c0_i32, %c0_i32_0 : i32, i32
  }
  func.func @transform_3(%arg0: i32) -> (i32, i32) {
    %c0_i32 = arith.constant 0 : i32
    %c0_i32_0 = arith.constant 0 : i32
    %c0_i32_1 = arith.constant 0 : i32
    return %c0_i32, %c0_i32_0 : i32, i32
  }
  func.func @transform_4(%arg0: i32) -> (i32, i32) {
    %c0_i32 = arith.constant 0 : i32
    %c0_i32_0 = arith.constant 0 : i32
    %c0_i32_1 = arith.constant 0 : i32
    return %c0_i32, %c0_i32_0 : i32, i32
  }
  func.func @transform_5(%arg0: i32) -> (i32, i32) {
    %c0_i32 = arith.constant 0 : i32
    %c0_i32_0 = arith.constant 0 : i32
    %c0_i32_1 = arith.constant 0 : i32
    return %c0_i32, %c0_i32_0 : i32, i32
  }
  func.func @transform_6(%arg0: i32) -> (i32, i32, i32) {
    %c0_i32 = arith.constant 0 : i32
    %c0_i32_0 = arith.constant 0 : i32
    %c0_i32_1 = arith.constant 0 : i32
    return %arg0, %c0_i32, %c0_i32_0 : i32, i32, i32
  }
}

module attributes {stable_mosaic.version = 11 : i64} {
  func.func @_conv_gn_relu_kernel(%arg0: i32, %arg1: memref<1x64x288xbf16, #tpu.memory_space<vmem>>, %arg2: memref<288x32xbf16, #tpu.memory_space<vmem>>, %arg3: memref<1x32xf32, #tpu.memory_space<vmem>>, %arg4: memref<1x32xf32, #tpu.memory_space<vmem>>, %arg5: memref<32x4xf32, #tpu.memory_space<vmem>>, %arg6: memref<4x32xf32, #tpu.memory_space<vmem>>, %arg7: memref<1x64x32xbf16, #tpu.memory_space<vmem>>) attributes {dimension_semantics = [#tpu.dimension_semantics<parallel>], iteration_bounds = array<i64: 2>, scalar_prefetch = 0 : i64, scratch_operands = 0 : i64, tpu.core_type = #tpu.core_type<tc>, window_params = [{transform_indices = @transform_0, window_bounds = array<i64: 1, 64, 288>}, {pipeline_mode = #tpu.pipeline_mode<synchronous>, transform_indices = @transform_1, window_bounds = array<i64: 288, 32>}, {pipeline_mode = #tpu.pipeline_mode<synchronous>, transform_indices = @transform_2, window_bounds = array<i64: 1, 32>}, {pipeline_mode = #tpu.pipeline_mode<synchronous>, transform_indices = @transform_3, window_bounds = array<i64: 1, 32>}, {pipeline_mode = #tpu.pipeline_mode<synchronous>, transform_indices = @transform_4, window_bounds = array<i64: 32, 4>}, {pipeline_mode = #tpu.pipeline_mode<synchronous>, transform_indices = @transform_5, window_bounds = array<i64: 4, 32>}, {transform_indices = @transform_6, window_bounds = array<i64: 1, 64, 32>}]} {
    %c0 = arith.constant 0 : index
    %c0_0 = arith.constant 0 : index
    %c0_1 = arith.constant 0 : index
    %0 = vector.load %arg1[%c0, %c0_0, %c0_1] : memref<1x64x288xbf16, #tpu.memory_space<vmem>>, vector<1x64x288xbf16>
    %1 = vector.shape_cast %0 : vector<1x64x288xbf16> to vector<64x288xbf16>
    %c0_2 = arith.constant 0 : index
    %c0_3 = arith.constant 0 : index
    %2 = vector.load %arg2[%c0_2, %c0_3] : memref<288x32xbf16, #tpu.memory_space<vmem>>, vector<288x32xbf16>
    %cst = arith.constant dense<0.000000e+00> : vector<64x32xf32>
    %3 = tpu.matmul %1, %2, %cst {dimension_numbers = #tpu.dot_dimension_numbers<[1], [0], [0], [1], [0, 0, 1, 1], [], []>} : vector<64x288xbf16>, vector<288x32xbf16>, vector<64x32xf32> -> vector<64x32xf32>
    %c0_4 = arith.constant 0 : index
    %c0_5 = arith.constant 0 : index
    %4 = vector.load %arg5[%c0_4, %c0_5] : memref<32x4xf32, #tpu.memory_space<vmem>>, vector<32x4xf32>
    %c0_6 = arith.constant 0 : index
    %c0_7 = arith.constant 0 : index
    %5 = vector.load %arg6[%c0_6, %c0_7] : memref<4x32xf32, #tpu.memory_space<vmem>>, vector<4x32xf32>
    %cst_8 = arith.constant dense<0.000000e+00> : vector<32xf32>
    %6 = vector.multi_reduction <add>, %3, %cst_8 [0] : vector<64x32xf32> to vector<32xf32>
    %7 = vector.shape_cast %6 : vector<32xf32> to vector<1x32xf32>
    %cst_9 = arith.constant dense<0.000000e+00> : vector<1x4xf32>
    %8 = tpu.matmul %7, %4, %cst_9 {dimension_numbers = #tpu.dot_dimension_numbers<[1], [0], [0], [1], [0, 0, 1, 1], [], []>} : vector<1x32xf32>, vector<32x4xf32>, vector<1x4xf32> -> vector<1x4xf32>
    %cst_10 = arith.constant 0.001953125 : f32
    %9 = vector.broadcast %cst_10 : f32 to vector<1x4xf32>
    %10 = arith.mulf %8, %9 : vector<1x4xf32>
    %cst_11 = arith.constant dense<0.000000e+00> : vector<1x32xf32>
    %11 = tpu.matmul %10, %5, %cst_11 {dimension_numbers = #tpu.dot_dimension_numbers<[1], [0], [0], [1], [0, 0, 1, 1], [], []>} : vector<1x4xf32>, vector<4x32xf32>, vector<1x32xf32> -> vector<1x32xf32>
    %12 = vector.broadcast %11 : vector<1x32xf32> to vector<64x32xf32>
    %13 = arith.subf %3, %12 : vector<64x32xf32>
    %14 = arith.mulf %13, %13 : vector<64x32xf32>
    %cst_12 = arith.constant dense<0.000000e+00> : vector<32xf32>
    %15 = vector.multi_reduction <add>, %14, %cst_12 [0] : vector<64x32xf32> to vector<32xf32>
    %16 = vector.shape_cast %15 : vector<32xf32> to vector<1x32xf32>
    %cst_13 = arith.constant dense<0.000000e+00> : vector<1x4xf32>
    %17 = tpu.matmul %16, %4, %cst_13 {dimension_numbers = #tpu.dot_dimension_numbers<[1], [0], [0], [1], [0, 0, 1, 1], [], []>} : vector<1x32xf32>, vector<32x4xf32>, vector<1x4xf32> -> vector<1x4xf32>
    %cst_14 = arith.constant 0.001953125 : f32
    %18 = vector.broadcast %cst_14 : f32 to vector<1x4xf32>
    %19 = arith.mulf %17, %18 : vector<1x4xf32>
    %cst_15 = arith.constant dense<0.000000e+00> : vector<1x32xf32>
    %20 = tpu.matmul %19, %5, %cst_15 {dimension_numbers = #tpu.dot_dimension_numbers<[1], [0], [0], [1], [0, 0, 1, 1], [], []>} : vector<1x4xf32>, vector<4x32xf32>, vector<1x32xf32> -> vector<1x32xf32>
    %cst_16 = arith.constant 9.99999974E-6 : f32
    %21 = vector.broadcast %cst_16 : f32 to vector<1x32xf32>
    %22 = arith.addf %20, %21 : vector<1x32xf32>
    %23 = math.rsqrt %22 : vector<1x32xf32>
    %24 = vector.broadcast %23 : vector<1x32xf32> to vector<64x32xf32>
    %25 = arith.mulf %13, %24 : vector<64x32xf32>
    %c0_17 = arith.constant 0 : index
    %c0_18 = arith.constant 0 : index
    %26 = vector.load %arg3[%c0_17, %c0_18] : memref<1x32xf32, #tpu.memory_space<vmem>>, vector<1x32xf32>
    %27 = vector.broadcast %26 : vector<1x32xf32> to vector<64x32xf32>
    %28 = arith.mulf %25, %27 : vector<64x32xf32>
    %c0_19 = arith.constant 0 : index
    %c0_20 = arith.constant 0 : index
    %29 = vector.load %arg4[%c0_19, %c0_20] : memref<1x32xf32, #tpu.memory_space<vmem>>, vector<1x32xf32>
    %30 = vector.broadcast %29 : vector<1x32xf32> to vector<64x32xf32>
    %31 = arith.addf %28, %30 : vector<64x32xf32>
    %cst_21 = arith.constant 0.000000e+00 : f32
    %32 = vector.broadcast %cst_21 : f32 to vector<64x32xf32>
    %33 = arith.maximumf %31, %32 : vector<64x32xf32>
    %34 = arith.truncf %33 : vector<64x32xf32> to vector<64x32xbf16>
    %c0_22 = arith.constant 0 : index
    %c0_23 = arith.constant 0 : index
    %c0_24 = arith.constant 0 : index
    %35 = vector.load %arg7[%c0_22, %c0_23, %c0_24] : memref<1x64x32xbf16, #tpu.memory_space<vmem>>, vector<1x64x32xbf16>
    %36 = vector.shape_cast %35 : vector<1x64x32xbf16> to vector<64x32xbf16>
    %37 = vector.shape_cast %34 : vector<64x32xbf16> to vector<1x64x32xbf16>
    tpu.vector_store %arg7[%c0_22, %c0_23, %c0_24], %37 {strides = array<i32>} : memref<1x64x32xbf16, #tpu.memory_space<vmem>>, vector<1x64x32xbf16>,
    return
  }
  func.func @transform_0(%arg0: i32) -> (i32, i32, i32) {
    %c0_i32 = arith.constant 0 : i32
    %c0_i32_0 = arith.constant 0 : i32
    %c0_i32_1 = arith.constant 0 : i32
    return %arg0, %c0_i32, %c0_i32_0 : i32, i32, i32
  }
  func.func @transform_1(%arg0: i32) -> (i32, i32) {
    %c0_i32 = arith.constant 0 : i32
    %c0_i32_0 = arith.constant 0 : i32
    %c0_i32_1 = arith.constant 0 : i32
    return %c0_i32, %c0_i32_0 : i32, i32
  }
  func.func @transform_2(%arg0: i32) -> (i32, i32) {
    %c0_i32 = arith.constant 0 : i32
    %c0_i32_0 = arith.constant 0 : i32
    %c0_i32_1 = arith.constant 0 : i32
    return %c0_i32, %c0_i32_0 : i32, i32
  }
  func.func @transform_3(%arg0: i32) -> (i32, i32) {
    %c0_i32 = arith.constant 0 : i32
    %c0_i32_0 = arith.constant 0 : i32
    %c0_i32_1 = arith.constant 0 : i32
    return %c0_i32, %c0_i32_0 : i32, i32
  }
  func.func @transform_4(%arg0: i32) -> (i32, i32) {
    %c0_i32 = arith.constant 0 : i32
    %c0_i32_0 = arith.constant 0 : i32
    %c0_i32_1 = arith.constant 0 : i32
    return %c0_i32, %c0_i32_0 : i32, i32
  }
  func.func @transform_5(%arg0: i32) -> (i32, i32) {
    %c0_i32 = arith.constant 0 : i32
    %c0_i32_0 = arith.constant 0 : i32
    %c0_i32_1 = arith.constant 0 : i32
    return %c0_i32, %c0_i32_0 : i32, i32
  }
  func.func @transform_6(%arg0: i32) -> (i32, i32, i32) {
    %c0_i32 = arith.constant 0 : i32
    %c0_i32_0 = arith.constant 0 : i32
    %c0_i32_1 = arith.constant 0 : i32
    return %arg0, %c0_i32, %c0_i32_0 : i32, i32, i32
  }
}

module attributes {stable_mosaic.version = 11 : i64} {
  func.func @_fused_head_kernel(%arg0: i32, %arg1: memref<128x32xbf16, #tpu.memory_space<vmem>>, %arg2: memref<32x32xbf16, #tpu.memory_space<vmem>>, %arg3: memref<1x32xf32, #tpu.memory_space<vmem>>, %arg4: memref<32x18xbf16, #tpu.memory_space<vmem>>, %arg5: memref<1x18xf32, #tpu.memory_space<vmem>>, %arg6: memref<128x18xf32, #tpu.memory_space<vmem>>) attributes {dimension_semantics = [#tpu.dimension_semantics<parallel>], iteration_bounds = array<i64: 1>, scalar_prefetch = 0 : i64, scratch_operands = 0 : i64, tpu.core_type = #tpu.core_type<tc>, window_params = [{transform_indices = @transform_0, window_bounds = array<i64: 128, 32>}, {pipeline_mode = #tpu.pipeline_mode<synchronous>, transform_indices = @transform_1, window_bounds = array<i64: 32, 32>}, {pipeline_mode = #tpu.pipeline_mode<synchronous>, transform_indices = @transform_2, window_bounds = array<i64: 1, 32>}, {pipeline_mode = #tpu.pipeline_mode<synchronous>, transform_indices = @transform_3, window_bounds = array<i64: 32, 18>}, {pipeline_mode = #tpu.pipeline_mode<synchronous>, transform_indices = @transform_4, window_bounds = array<i64: 1, 18>}, {transform_indices = @transform_5, window_bounds = array<i64: 128, 18>}]} {
    %c0 = arith.constant 0 : index
    %c0_0 = arith.constant 0 : index
    %0 = vector.load %arg1[%c0, %c0_0] : memref<128x32xbf16, #tpu.memory_space<vmem>>, vector<128x32xbf16>
    %c0_1 = arith.constant 0 : index
    %c0_2 = arith.constant 0 : index
    %1 = vector.load %arg2[%c0_1, %c0_2] : memref<32x32xbf16, #tpu.memory_space<vmem>>, vector<32x32xbf16>
    %cst = arith.constant dense<0.000000e+00> : vector<128x32xf32>
    %2 = tpu.matmul %0, %1, %cst {dimension_numbers = #tpu.dot_dimension_numbers<[1], [0], [0], [1], [0, 0, 1, 1], [], []>} : vector<128x32xbf16>, vector<32x32xbf16>, vector<128x32xf32> -> vector<128x32xf32>
    %c0_3 = arith.constant 0 : index
    %c0_4 = arith.constant 0 : index
    %3 = vector.load %arg3[%c0_3, %c0_4] : memref<1x32xf32, #tpu.memory_space<vmem>>, vector<1x32xf32>
    %4 = vector.broadcast %3 : vector<1x32xf32> to vector<128x32xf32>
    %5 = arith.addf %2, %4 : vector<128x32xf32>
    %cst_5 = arith.constant 0.000000e+00 : f32
    %6 = vector.broadcast %cst_5 : f32 to vector<128x32xf32>
    %7 = arith.maximumf %5, %6 : vector<128x32xf32>
    %8 = arith.truncf %7 : vector<128x32xf32> to vector<128x32xbf16>
    %c0_6 = arith.constant 0 : index
    %c0_7 = arith.constant 0 : index
    %9 = vector.load %arg4[%c0_6, %c0_7] : memref<32x18xbf16, #tpu.memory_space<vmem>>, vector<32x18xbf16>
    %cst_8 = arith.constant dense<0.000000e+00> : vector<128x18xf32>
    %10 = tpu.matmul %8, %9, %cst_8 {dimension_numbers = #tpu.dot_dimension_numbers<[1], [0], [0], [1], [0, 0, 1, 1], [], []>} : vector<128x32xbf16>, vector<32x18xbf16>, vector<128x18xf32> -> vector<128x18xf32>
    %c0_9 = arith.constant 0 : index
    %c0_10 = arith.constant 0 : index
    %11 = vector.load %arg5[%c0_9, %c0_10] : memref<1x18xf32, #tpu.memory_space<vmem>>, vector<1x18xf32>
    %12 = vector.broadcast %11 : vector<1x18xf32> to vector<128x18xf32>
    %13 = arith.addf %10, %12 : vector<128x18xf32>
    %c0_11 = arith.constant 0 : index
    %c0_12 = arith.constant 0 : index
    %14 = vector.load %arg6[%c0_11, %c0_12] : memref<128x18xf32, #tpu.memory_space<vmem>>, vector<128x18xf32>
    tpu.vector_store %arg6[%c0_11, %c0_12], %13 {strides = array<i32>} : memref<128x18xf32, #tpu.memory_space<vmem>>, vector<128x18xf32>,
    return
  }
  func.func @transform_0(%arg0: i32) -> (i32, i32) {
    %c0_i32 = arith.constant 0 : i32
    %c0_i32_0 = arith.constant 0 : i32
    return %arg0, %c0_i32 : i32, i32
  }
  func.func @transform_1(%arg0: i32) -> (i32, i32) {
    %c0_i32 = arith.constant 0 : i32
    %c0_i32_0 = arith.constant 0 : i32
    %c0_i32_1 = arith.constant 0 : i32
    return %c0_i32, %c0_i32_0 : i32, i32
  }
  func.func @transform_2(%arg0: i32) -> (i32, i32) {
    %c0_i32 = arith.constant 0 : i32
    %c0_i32_0 = arith.constant 0 : i32
    %c0_i32_1 = arith.constant 0 : i32
    return %c0_i32, %c0_i32_0 : i32, i32
  }
  func.func @transform_3(%arg0: i32) -> (i32, i32) {
    %c0_i32 = arith.constant 0 : i32
    %c0_i32_0 = arith.constant 0 : i32
    %c0_i32_1 = arith.constant 0 : i32
    return %c0_i32, %c0_i32_0 : i32, i32
  }
  func.func @transform_4(%arg0: i32) -> (i32, i32) {
    %c0_i32 = arith.constant 0 : i32
    %c0_i32_0 = arith.constant 0 : i32
    %c0_i32_1 = arith.constant 0 : i32
    return %c0_i32, %c0_i32_0 : i32, i32
  }
  func.func @transform_5(%arg0: i32) -> (i32, i32) {
    %c0_i32 = arith.constant 0 : i32
    %c0_i32_0 = arith.constant 0 : i32
    return %arg0, %c0_i32 : i32, i32
  }
}

module attributes {stable_mosaic.version = 11 : i64} {
  func.func @_fused_head_kernel(%arg0: i32, %arg1: memref<128x288xbf16, #tpu.memory_space<vmem>>, %arg2: memref<288x32xbf16, #tpu.memory_space<vmem>>, %arg3: memref<32x4xbf16, #tpu.memory_space<vmem>>, %arg4: memref<1x4xf32, #tpu.memory_space<vmem>>, %arg5: memref<128x4xf32, #tpu.memory_space<vmem>>) attributes {dimension_semantics = [#tpu.dimension_semantics<parallel>], iteration_bounds = array<i64: 1>, scalar_prefetch = 0 : i64, scratch_operands = 0 : i64, tpu.core_type = #tpu.core_type<tc>, window_params = [{transform_indices = @transform_0, window_bounds = array<i64: 128, 288>}, {pipeline_mode = #tpu.pipeline_mode<synchronous>, transform_indices = @transform_1, window_bounds = array<i64: 288, 32>}, {pipeline_mode = #tpu.pipeline_mode<synchronous>, transform_indices = @transform_2, window_bounds = array<i64: 32, 4>}, {pipeline_mode = #tpu.pipeline_mode<synchronous>, transform_indices = @transform_3, window_bounds = array<i64: 1, 4>}, {transform_indices = @transform_4, window_bounds = array<i64: 128, 4>}]} {
    %c0 = arith.constant 0 : index
    %c0_0 = arith.constant 0 : index
    %0 = vector.load %arg1[%c0, %c0_0] : memref<128x288xbf16, #tpu.memory_space<vmem>>, vector<128x288xbf16>
    %c0_1 = arith.constant 0 : index
    %c0_2 = arith.constant 0 : index
    %1 = vector.load %arg2[%c0_1, %c0_2] : memref<288x32xbf16, #tpu.memory_space<vmem>>, vector<288x32xbf16>
    %cst = arith.constant dense<0.000000e+00> : vector<128x32xf32>
    %2 = tpu.matmul %0, %1, %cst {dimension_numbers = #tpu.dot_dimension_numbers<[1], [0], [0], [1], [0, 0, 1, 1], [], []>} : vector<128x288xbf16>, vector<288x32xbf16>, vector<128x32xf32> -> vector<128x32xf32>
    %cst_3 = arith.constant 0.000000e+00 : f32
    %3 = vector.broadcast %cst_3 : f32 to vector<128x32xf32>
    %4 = arith.maximumf %2, %3 : vector<128x32xf32>
    %5 = arith.truncf %4 : vector<128x32xf32> to vector<128x32xbf16>
    %c0_4 = arith.constant 0 : index
    %c0_5 = arith.constant 0 : index
    %6 = vector.load %arg3[%c0_4, %c0_5] : memref<32x4xbf16, #tpu.memory_space<vmem>>, vector<32x4xbf16>
    %cst_6 = arith.constant dense<0.000000e+00> : vector<128x4xf32>
    %7 = tpu.matmul %5, %6, %cst_6 {dimension_numbers = #tpu.dot_dimension_numbers<[1], [0], [0], [1], [0, 0, 1, 1], [], []>} : vector<128x32xbf16>, vector<32x4xbf16>, vector<128x4xf32> -> vector<128x4xf32>
    %c0_7 = arith.constant 0 : index
    %c0_8 = arith.constant 0 : index
    %8 = vector.load %arg4[%c0_7, %c0_8] : memref<1x4xf32, #tpu.memory_space<vmem>>, vector<1x4xf32>
    %9 = vector.broadcast %8 : vector<1x4xf32> to vector<128x4xf32>
    %10 = arith.addf %7, %9 : vector<128x4xf32>
    %c0_9 = arith.constant 0 : index
    %c0_10 = arith.constant 0 : index
    %11 = vector.load %arg5[%c0_9, %c0_10] : memref<128x4xf32, #tpu.memory_space<vmem>>, vector<128x4xf32>
    tpu.vector_store %arg5[%c0_9, %c0_10], %10 {strides = array<i32>} : memref<128x4xf32, #tpu.memory_space<vmem>>, vector<128x4xf32>,
    return
  }
  func.func @transform_0(%arg0: i32) -> (i32, i32) {
    %c0_i32 = arith.constant 0 : i32
    %c0_i32_0 = arith.constant 0 : i32
    return %arg0, %c0_i32 : i32, i32
  }
  func.func @transform_1(%arg0: i32) -> (i32, i32) {
    %c0_i32 = arith.constant 0 : i32
    %c0_i32_0 = arith.constant 0 : i32
    %c0_i32_1 = arith.constant 0 : i32
    return %c0_i32, %c0_i32_0 : i32, i32
  }
  func.func @transform_2(%arg0: i32) -> (i32, i32) {
    %c0_i32 = arith.constant 0 : i32
    %c0_i32_0 = arith.constant 0 : i32
    %c0_i32_1 = arith.constant 0 : i32
    return %c0_i32, %c0_i32_0 : i32, i32
  }
  func.func @transform_3(%arg0: i32) -> (i32, i32) {
    %c0_i32 = arith.constant 0 : i32
    %c0_i32_0 = arith.constant 0 : i32
    %c0_i32_1 = arith.constant 0 : i32
    return %c0_i32, %c0_i32_0 : i32, i32
  }
  func.func @transform_4(%arg0: i32) -> (i32, i32) {
    %c0_i32 = arith.constant 0 : i32
    %c0_i32_0 = arith.constant 0 : i32
    return %arg0, %c0_i32 : i32, i32
  }
}

module attributes {stable_mosaic.version = 11 : i64} {
  func.func @_fused_head_kernel(%arg0: i32, %arg1: memref<128x288xbf16, #tpu.memory_space<vmem>>, %arg2: memref<288x32xbf16, #tpu.memory_space<vmem>>, %arg3: memref<32x18xbf16, #tpu.memory_space<vmem>>, %arg4: memref<1x18xf32, #tpu.memory_space<vmem>>, %arg5: memref<128x18xf32, #tpu.memory_space<vmem>>) attributes {dimension_semantics = [#tpu.dimension_semantics<parallel>], iteration_bounds = array<i64: 1>, scalar_prefetch = 0 : i64, scratch_operands = 0 : i64, tpu.core_type = #tpu.core_type<tc>, window_params = [{transform_indices = @transform_0, window_bounds = array<i64: 128, 288>}, {pipeline_mode = #tpu.pipeline_mode<synchronous>, transform_indices = @transform_1, window_bounds = array<i64: 288, 32>}, {pipeline_mode = #tpu.pipeline_mode<synchronous>, transform_indices = @transform_2, window_bounds = array<i64: 32, 18>}, {pipeline_mode = #tpu.pipeline_mode<synchronous>, transform_indices = @transform_3, window_bounds = array<i64: 1, 18>}, {transform_indices = @transform_4, window_bounds = array<i64: 128, 18>}]} {
    %c0 = arith.constant 0 : index
    %c0_0 = arith.constant 0 : index
    %0 = vector.load %arg1[%c0, %c0_0] : memref<128x288xbf16, #tpu.memory_space<vmem>>, vector<128x288xbf16>
    %c0_1 = arith.constant 0 : index
    %c0_2 = arith.constant 0 : index
    %1 = vector.load %arg2[%c0_1, %c0_2] : memref<288x32xbf16, #tpu.memory_space<vmem>>, vector<288x32xbf16>
    %cst = arith.constant dense<0.000000e+00> : vector<128x32xf32>
    %2 = tpu.matmul %0, %1, %cst {dimension_numbers = #tpu.dot_dimension_numbers<[1], [0], [0], [1], [0, 0, 1, 1], [], []>} : vector<128x288xbf16>, vector<288x32xbf16>, vector<128x32xf32> -> vector<128x32xf32>
    %cst_3 = arith.constant 0.000000e+00 : f32
    %3 = vector.broadcast %cst_3 : f32 to vector<128x32xf32>
    %4 = arith.maximumf %2, %3 : vector<128x32xf32>
    %5 = arith.truncf %4 : vector<128x32xf32> to vector<128x32xbf16>
    %c0_4 = arith.constant 0 : index
    %c0_5 = arith.constant 0 : index
    %6 = vector.load %arg3[%c0_4, %c0_5] : memref<32x18xbf16, #tpu.memory_space<vmem>>, vector<32x18xbf16>
    %cst_6 = arith.constant dense<0.000000e+00> : vector<128x18xf32>
    %7 = tpu.matmul %5, %6, %cst_6 {dimension_numbers = #tpu.dot_dimension_numbers<[1], [0], [0], [1], [0, 0, 1, 1], [], []>} : vector<128x32xbf16>, vector<32x18xbf16>, vector<128x18xf32> -> vector<128x18xf32>
    %c0_7 = arith.constant 0 : index
    %c0_8 = arith.constant 0 : index
    %8 = vector.load %arg4[%c0_7, %c0_8] : memref<1x18xf32, #tpu.memory_space<vmem>>, vector<1x18xf32>
    %9 = vector.broadcast %8 : vector<1x18xf32> to vector<128x18xf32>
    %10 = arith.addf %7, %9 : vector<128x18xf32>
    %c0_9 = arith.constant 0 : index
    %c0_10 = arith.constant 0 : index
    %11 = vector.load %arg5[%c0_9, %c0_10] : memref<128x18xf32, #tpu.memory_space<vmem>>, vector<128x18xf32>
    tpu.vector_store %arg5[%c0_9, %c0_10], %10 {strides = array<i32>} : memref<128x18xf32, #tpu.memory_space<vmem>>, vector<128x18xf32>,
    return
  }
  func.func @transform_0(%arg0: i32) -> (i32, i32) {
    %c0_i32 = arith.constant 0 : i32
    %c0_i32_0 = arith.constant 0 : i32
    return %arg0, %c0_i32 : i32, i32
  }
  func.func @transform_1(%arg0: i32) -> (i32, i32) {
    %c0_i32 = arith.constant 0 : i32
    %c0_i32_0 = arith.constant 0 : i32
    %c0_i32_1 = arith.constant 0 : i32
    return %c0_i32, %c0_i32_0 : i32, i32
  }
  func.func @transform_2(%arg0: i32) -> (i32, i32) {
    %c0_i32 = arith.constant 0 : i32
    %c0_i32_0 = arith.constant 0 : i32
    %c0_i32_1 = arith.constant 0 : i32
    return %c0_i32, %c0_i32_0 : i32, i32
  }
  func.func @transform_3(%arg0: i32) -> (i32, i32) {
    %c0_i32 = arith.constant 0 : i32
    %c0_i32_0 = arith.constant 0 : i32
    %c0_i32_1 = arith.constant 0 : i32
    return %c0_i32, %c0_i32_0 : i32, i32
  }
  func.func @transform_4(%arg0: i32) -> (i32, i32) {
    %c0_i32 = arith.constant 0 : i32
    %c0_i32_0 = arith.constant 0 : i32
    return %arg0, %c0_i32 : i32, i32
  }
}

</mosaic_0001>

<llo_original>
// kernel: single_forward.9
$region0: #{single_forward.9}
  #allocation0 [shape = 'u32[]', space=smem, size = 0x4, offset = 0x4, fixed_abs, tag = 'smem constant byte address 0x4 - core index']
  #allocation1 [shape = 'u32[144,128]{1,0:T(1,128)}', space=vmem, size = 0x12000, scoped, tag = 'internal scratch']
  %s0 = inlined_call_operand.vmem [shape: bf16[2,64,144], index: 0, kind: input, shape index: {}]
  %s1 = inlined_call_operand.vmem [shape: bf16[144,32], index: 1, kind: input, shape index: {}]
  %s2 = inlined_call_operand.vmem [shape: f32[1,32], index: 2, kind: input, shape index: {}]
  %s3 = inlined_call_operand.vmem [shape: f32[1,32], index: 3, kind: input, shape index: {}]
  %s4 = inlined_call_operand.vmem [shape: f32[32,4], index: 4, kind: input, shape index: {}]
  %s5 = inlined_call_operand.vmem [shape: f32[4,32], index: 5, kind: input, shape index: {}]
  %s6 = inlined_call_operand.vmem [shape: bf16[2,64,32], index: 6, kind: output, shape index: {}]
  %s7 = sld [smem:[#allocation0]]
  $region57: #{single_forward.9} parent=0
    _
  %s9 = ssub.s32 1, %s7
  %s10 = scalar_select 0, %s9, %s7
  loop: start=0, step=1, limit=4
  $region2: #{single_forward.9} parent=0 // loop_pre_header
    _
  $region3: #{single_forward.9} parent=0 // loop_header
    %s12 = sphi 0, %s16
    %p13 = scmp.ge.s32.totalorder %s12, 4
    %s22 = sphi 0, %s24
    %s25 = sphi 0, %s22
    %s26 = sphi 0, %s25
    %s42 = sphi 0, %s26
    %s46 = sphi 0, %s46
    %s48 = sphi 0, %s46
    %s49 = sphi 0, %s48
    %s63 = sphi 0, %s49
    %s67 = sphi 0, %s67
    %s69 = sphi 0, %s67
    %s70 = sphi 0, %s69
    %s84 = sphi 0, %s70
    %s88 = sphi 0, %s88
    %s90 = sphi 0, %s88
    %s91 = sphi 0, %s90
    %s105 = sphi 0, %s91
    %s109 = sphi 0, %s109
    %s111 = sphi 0, %s109
    %s112 = sphi 0, %s111
    %s126 = sphi 0, %s112
    %s130 = sphi 0, %s130
    %s132 = sphi 0, %s130
    %s133 = sphi 0, %s132
    %s147 = sphi 0, %s133
    %s153 = sphi 0, %s155
    %s156 = sphi 0, %s153
    %s157 = sphi 0, %s156
    %s173 = sphi 0, %s157
  $region4: #{single_forward.9} parent=0 // loop_header_branch
    %15 = sbr.rel (%p13) target = $region8
  $region5: #{single_forward.9} parent=0 // loop_body
    %s17 = ssub.s32 %s12, 1
    %s18 = ssub.s32 %s12, 2
    %s19 = sadd.s32 %s12, 1
    %s20 = ssub.s32 %s12, %s19
    %p21 = scmp.eq.s32.totalorder %s20, 0
    %s23 = sadd.s32 %s22, 1
    %s24 = scalar_select %p21, %s22, %s23
    %p27 = pneg %p21
    %p28 = scmp.eq.s32.totalorder %s12, 1
    %p29 = por %p27, %p28
    %p30 = scmp.ne.s32.totalorder %s22, %s25
    %p31 = scmp.eq.s32.totalorder %s12, 0
    %p32 = por %p30, %p31
    %p33 = scmp.ne.s32.totalorder %s22, %s25
    %p34 = scmp.eq.s32.totalorder %s17, 1
    %p35 = por %p33, %p34
    %p36 = scmp.ne.s32.totalorder %s25, %s26
    %p37 = scmp.eq.s32.totalorder %s17, 0
    %p38 = por %p36, %p37
    %p39 = scmp.ne.s32.totalorder %s25, %s26
    %p40 = scmp.eq.s32.totalorder %s18, 1
    %p41 = por %p39, %p40
    %p43 = scmp.ne.s32.totalorder %s26, %s42
    %p44 = scmp.eq.s32.totalorder %s18, 0
    %p45 = por %p43, %p44
    %s47 = sadd.s32 %s46, 1
    %p50 = scmp.eq.s32.totalorder %s12, 1
    %p51 = scmp.ne.s32.totalorder %s46, %s48
    %p52 = scmp.eq.s32.totalorder %s12, 0
    %p53 = por %p51, %p52
    %p54 = scmp.ne.s32.totalorder %s46, %s48
    %p55 = scmp.eq.s32.totalorder %s17, 1
    %p56 = por %p54, %p55
    %p57 = scmp.ne.s32.totalorder %s48, %s49
    %p58 = scmp.eq.s32.totalorder %s17, 0
    %p59 = por %p57, %p58
    %p60 = scmp.ne.s32.totalorder %s48, %s49
    %p61 = scmp.eq.s32.totalorder %s18, 1
    %p62 = por %p60, %p61
    %p64 = scmp.ne.s32.totalorder %s49, %s63
    %p65 = scmp.eq.s32.totalorder %s18, 0
    %p66 = por %p64, %p65
    %s68 = sadd.s32 %s67, 1
    %p71 = scmp.eq.s32.totalorder %s12, 1
    %p72 = scmp.ne.s32.totalorder %s67, %s69
    %p73 = scmp.eq.s32.totalorder %s12, 0
    %p74 = por %p72, %p73
    %p75 = scmp.ne.s32.totalorder %s67, %s69
    %p76 = scmp.eq.s32.totalorder %s17, 1
    %p77 = por %p75, %p76
    %p78 = scmp.ne.s32.totalorder %s69, %s70
    %p79 = scmp.eq.s32.totalorder %s17, 0
    %p80 = por %p78, %p79
    %p81 = scmp.ne.s32.totalorder %s69, %s70
    %p82 = scmp.eq.s32.totalorder %s18, 1
    %p83 = por %p81, %p82
    %p85 = scmp.ne.s32.totalorder %s70, %s84
    %p86 = scmp.eq.s32.totalorder %s18, 0
    %p87 = por %p85, %p86
    %s89 = sadd.s32 %s88, 1
    %p92 = scmp.eq.s32.totalorder %s12, 1
    %p93 = scmp.ne.s32.totalorder %s88, %s90
    %p94 = scmp.eq.s32.totalorder %s12, 0
    %p95 = por %p93, %p94
    %p96 = scmp.ne.s32.totalorder %s88, %s90
    %p97 = scmp.eq.s32.totalorder %s17, 1
    %p98 = por %p96, %p97
    %p99 = scmp.ne.s32.totalorder %s90, %s91
    %p100 = scmp.eq.s32.totalorder %s17, 0
    %p101 = por %p99, %p100
    %p102 = scmp.ne.s32.totalorder %s90, %s91
    %p103 = scmp.eq.s32.totalorder %s18, 1
    %p104 = por %p102, %p103
    %p106 = scmp.ne.s32.totalorder %s91, %s105
    %p107 = scmp.eq.s32.totalorder %s18, 0
    %p108 = por %p106, %p107
    %s110 = sadd.s32 %s109, 1
    %p113 = scmp.eq.s32.totalorder %s12, 1
    %p114 = scmp.ne.s32.totalorder %s109, %s111
    %p115 = scmp.eq.s32.totalorder %s12, 0
    %p116 = por %p114, %p115
    %p117 = scmp.ne.s32.totalorder %s109, %s111
    %p118 = scmp.eq.s32.totalorder %s17, 1
    %p119 = por %p117, %p118
    %p120 = scmp.ne.s32.totalorder %s111, %s112
    %p121 = scmp.eq.s32.totalorder %s17, 0
    %p122 = por %p120, %p121
    %p123 = scmp.ne.s32.totalorder %s111, %s112
    %p124 = scmp.eq.s32.totalorder %s18, 1
    %p125 = por %p123, %p124
    %p127 = scmp.ne.s32.totalorder %s112, %s126
    %p128 = scmp.eq.s32.totalorder %s18, 0
    %p129 = por %p127, %p128
    %s131 = sadd.s32 %s130, 1
    %p134 = scmp.eq.s32.totalorder %s12, 1
    %p135 = scmp.ne.s32.totalorder %s130, %s132
    %p136 = scmp.eq.s32.totalorder %s12, 0
    %p137 = por %p135, %p136
    %p138 = scmp.ne.s32.totalorder %s130, %s132
    %p139 = scmp.eq.s32.totalorder %s17, 1
    %p140 = por %p138, %p139
    %p141 = scmp.ne.s32.totalorder %s132, %s133
    %p142 = scmp.eq.s32.totalorder %s17, 0
    %p143 = por %p141, %p142
    %p144 = scmp.ne.s32.totalorder %s132, %s133
    %p145 = scmp.eq.s32.totalorder %s18, 1
    %p146 = por %p144, %p145
    %p148 = scmp.ne.s32.totalorder %s133, %s147
    %p149 = scmp.eq.s32.totalorder %s18, 0
    %p150 = por %p148, %p149
    %s151 = ssub.s32 %s12, %s19
    %p152 = scmp.eq.s32.totalorder %s151, 0
    %s154 = sadd.s32 %s153, 1
    %s155 = scalar_select %p152, %s153, %s154
    %p158 = pneg %p152
    %p159 = scmp.eq.s32.totalorder %s12, 1
    %p160 = por %p158, %p159
    %p161 = scmp.ne.s32.totalorder %s153, %s156
    %p162 = scmp.eq.s32.totalorder %s12, 0
    %p163 = por %p161, %p162
    %p164 = scmp.ne.s32.totalorder %s153, %s156
    %p165 = scmp.eq.s32.totalorder %s17, 1
    %p166 = por %p164, %p165
    %p167 = scmp.ne.s32.totalorder %s156, %s157
    %p168 = scmp.eq.s32.totalorder %s17, 0
    %p169 = por %p167, %p168
    %p170 = scmp.ne.s32.totalorder %s156, %s157
    %p171 = scmp.eq.s32.totalorder %s18, 1
    %p172 = por %p170, %p171
    %p174 = scmp.ne.s32.totalorder %s157, %s173
    %p175 = scmp.eq.s32.totalorder %s18, 0
    %p176 = por %p174, %p175
    %p177 = scmp.le.s32.totalorder 1, %s12
    %p178 = scmp.lt.s32.totalorder %s12, 3
    %p179 = pnand %p177, %p178
    %p180 = pneg %p179
    // Predicated region
    $region9: #{single_forward.9} parent=5 // pred_check
      _
    $region10: #{single_forward.9} parent=5 // pred_check_branch
      %182 = sbr.rel (%p179) target = $region12
    $region11: #{single_forward.9} parent=5 // pred_region
      %s183 = ssub.s32 %s12, 1
      // Predicated region
      $region13: #{single_forward.9} parent=11 // pred_check
        %p184 = pneg %p59
      $region14: #{single_forward.9} parent=11 // pred_check_branch
        %186 = sbr.rel (%p184) target = $region16
      $region15: #{single_forward.9} parent=11 // pred_region
        _
      $region16: #{single_forward.9} parent=11 // pred_fallthru
        _
      // Predicated region
      $region17: #{single_forward.9} parent=11 // pred_check
        %p187 = pneg %p80
      $region18: #{single_forward.9} parent=11 // pred_check_branch
        %189 = sbr.rel (%p187) target = $region20
      $region19: #{single_forward.9} parent=11 // pred_region
        _
      $region20: #{single_forward.9} parent=11 // pred_fallthru
        _
      // Predicated region
      $region21: #{single_forward.9} parent=11 // pred_check
        %p190 = pneg %p101
      $region22: #{single_forward.9} parent=11 // pred_check_branch
        %192 = sbr.rel (%p190) target = $region24
      $region23: #{single_forward.9} parent=11 // pred_region
        _
      $region24: #{single_forward.9} parent=11 // pred_fallthru
        _
      // Predicated region
      $region25: #{single_forward.9} parent=11 // pred_check
        %p193 = pneg %p122
      $region26: #{single_forward.9} parent=11 // pred_check_branch
        %195 = sbr.rel (%p193) target = $region28
      $region27: #{single_forward.9} parent=11 // pred_region
        _
      $region28: #{single_forward.9} parent=11 // pred_fallthru
        _
      // Predicated region
      $region29: #{single_forward.9} parent=11 // pred_check
        %p196 = pneg %p143
      $region30: #{single_forward.9} parent=11 // pred_check_branch
        %198 = sbr.rel (%p196) target = $region32
      $region31: #{single_forward.9} parent=11 // pred_region
        _
      $region32: #{single_forward.9} parent=11 // pred_fallthru
        _
    $region12: #{single_forward.9} parent=5 // pred_fallthru
      _
    %p199 = scmp.lt.s32.totalorder %s12, 2
    // Predicated region
    $region33: #{single_forward.9} parent=5 // pred_check
      %p200 = pneg %p199
    $region34: #{single_forward.9} parent=5 // pred_check_branch
      %202 = sbr.rel (%p200) target = $region36
    $region35: #{single_forward.9} parent=5 // pred_region
      // Predicated region
      $region37: #{single_forward.9} parent=35 // pred_check
        %p203 = pneg %p32
      $region38: #{single_forward.9} parent=35 // pred_check_branch
        %205 = sbr.rel (%p203) target = $region40
      $region39: #{single_forward.9} parent=35 // pred_region
        %p206 = scmp.lt.s32.totalorder %s12, 1
        %s207 = scalar_select %p206, %s12, 1
        %s208 = smul.addr %s207, 16
        %s209 = smul.addr %s208, 4
        %s210 = scalar_lea.vmem %s0, %s209
      $region40: #{single_forward.9} parent=35 // pred_fallthru
        _
    $region36: #{single_forward.9} parent=5 // pred_fallthru
      _
    %p211 = scmp.le.s32.totalorder 1, %s12
    %p212 = scmp.lt.s32.totalorder %s12, 3
    %p213 = pnand %p211, %p212
    %p214 = pneg %p213
    // Predicated region
    $region41: #{single_forward.9} parent=5 // pred_check
      _
    $region42: #{single_forward.9} parent=5 // pred_check_branch
      %216 = sbr.rel (%p213) target = $region44
    $region43: #{single_forward.9} parent=5 // pred_region
      %s217 = ssub.s32 %s12, 1
      %p218 = scmp.lt.s32.totalorder %s17, 1
      %s219 = scalar_select %p218, %s17, 1
      %s220 = smul.addr %s219, 16
      %s221 = smul.addr %s220, 4
      %s222 = scalar_lea.vmem %s0, %s221
      %p223 = pneg %p38
      %p224 = pneg %p35
      %p225 = pneg %p59
      %p226 = pneg %p56
      %p227 = pneg %p80
      %p228 = pneg %p77
      %p229 = pneg %p101
      %p230 = pneg %p98
      %p231 = pneg %p122
      %p232 = pneg %p119
      %p233 = pneg %p143
      %p234 = pneg %p140
      %p235 = pneg %p169
      %p236 = pneg %p166
      %p237 = scmp.lt.s32.totalorder %s17, 1
      %s238 = scalar_select %p237, %s17, 1
      %s239 = smul.addr %s238, 8
      %s240 = smul.addr %s239, 4
      %s241 = scalar_lea.vmem %s6, %s240
      %p242 = scmp.lt.s32.totalorder %s17, 1
      %s243 = scalar_select %p242, %s17, 1
      %s244 = smul.addr %s243, 16
      %s245 = smul.addr %s244, 4
      %s246 = scalar_lea.vmem %s0, %s245
      %p247 = scmp.lt.s32.totalorder %s17, 1
      %s248 = scalar_select %p247, %s17, 1
      %s249 = smul.addr %s248, 8
      %s250 = smul.addr %s249, 4
      %s251 = scalar_lea.vmem %s6, %s250
      %v253 = vld [vmem:[%s246] sm:$0xff]
      %v254 = vld [vmem:[%s246 + $0x8] sm:$0xff]
      %v255 = vld [vmem:[%s246 + $0x10] sm:$0xff]
      %v256 = vld [vmem:[%s246 + $0x18] sm:$0xff]
      %v257 = vld [vmem:[%s246 + $0x20] sm:$0xff]
      %v258 = vld [vmem:[%s246 + $0x28] sm:$0xff]
      %v259 = vld [vmem:[%s246 + $0x30] sm:$0xff]
      %v260 = vld [vmem:[%s246 + $0x38] sm:$0xff]
      %v261 = vld [vmem:[%s1] sm:$0xf]
      %v262 = vld [vmem:[%s1 + $0x4] sm:$0xf]
      %v263 = vld [vmem:[%s1 + $0x8] sm:$0xf]
      %v264 = vld [vmem:[%s1 + $0xc] sm:$0xf]
      %v265 = vld [vmem:[%s1 + $0x10] sm:$0xf]
      %v266 = vld [vmem:[%s1 + $0x14] sm:$0xf]
      %v267 = vld [vmem:[%s1 + $0x18] sm:$0xf]
      %v268 = vld [vmem:[%s1 + $0x1c] sm:$0xf]
      %v269 = vld [vmem:[%s1 + $0x20] sm:$0xf]
      %v270 = vld [vmem:[%s1 + $0x24] sm:$0xf]
      %v271 = vld [vmem:[%s1 + $0x28] sm:$0xf]
      %v272 = vld [vmem:[%s1 + $0x2c] sm:$0xf]
      %v273 = vld [vmem:[%s1 + $0x30] sm:$0xf]
      %v274 = vld [vmem:[%s1 + $0x34] sm:$0xf]
      %v275 = vld [vmem:[%s1 + $0x38] sm:$0xf]
      %v276 = vld [vmem:[%s1 + $0x3c] sm:$0xf]
      %v277 = vld [vmem:[%s1 + $0x40] sm:$0xf]
      %v278 = vld [vmem:[%s1 + $0x44] sm:$0xf]
      %v287 = vunpack.c.l.b16 %v253
      %v288 = vunpack.c.h.b16 %v253
      %v289 = vunpack.c.l.b16 %v254
      %v290 = vunpack.c.h.b16 %v254
      %v291 = vunpack.c.l.b16 %v255
      %v292 = vunpack.c.h.b16 %v255
      %v293 = vunpack.c.l.b16 %v256
      %v294 = vunpack.c.h.b16 %v256
      %v295 = vunpack.c.l.b16 %v257
      %v296 = vunpack.c.h.b16 %v257
      %v297 = vunpack.c.l.b16 %v258
      %v298 = vunpack.c.h.b16 %v258
      %v299 = vunpack.c.l.b16 %v259
      %v300 = vunpack.c.h.b16 %v259
      %v301 = vunpack.c.l.b16 %v260
      %v302 = vunpack.c.h.b16 %v260
      %v303 = vpack.c.b16 %v289, %v287
      %v304 = vpack.c.b16 %v290, %v288
      %v305 = vpack.c.b16 %v293, %v291
      %v306 = vpack.c.b16 %v294, %v292
      %v307 = vpack.c.b16 %v297, %v295
      %v308 = vpack.c.b16 %v298, %v296
      %v309 = vpack.c.b16 %v301, %v299
      %v310 = vpack.c.b16 %v302, %v300
      %v333 = vunpack.c.l.b16 %v261
      %v334 = vunpack.c.l.b16 %v262
      %v335 = vunpack.c.l.b16 %v263
      %v336 = vunpack.c.l.b16 %v264
      %v337 = vunpack.c.l.b16 %v265
      %v338 = vunpack.c.l.b16 %v266
      %v339 = vunpack.c.l.b16 %v267
      %v340 = vunpack.c.l.b16 %v268
      %v341 = vunpack.c.l.b16 %v269
      %v342 = vunpack.c.l.b16 %v270
      %v343 = vunpack.c.l.b16 %v271
      %v344 = vunpack.c.l.b16 %v272
      %v345 = vunpack.c.l.b16 %v273
      %v346 = vunpack.c.l.b16 %v274
      %v347 = vunpack.c.l.b16 %v275
      %v348 = vunpack.c.l.b16 %v276
      %v349 = vunpack.c.l.b16 %v277
      %v350 = vunpack.c.l.b16 %v278
      %v351 = vpack.c.b16 %v334, %v333
      %v352 = vpack.c.b16 %v336, %v335
      %v353 = vpack.c.b16 %v338, %v337
      %v354 = vpack.c.b16 %v340, %v339
      %v355 = vpack.c.b16 %v342, %v341
      %v356 = vpack.c.b16 %v344, %v343
      %v357 = vpack.c.b16 %v346, %v345
      %v358 = vpack.c.b16 %v348, %v347
      %v359 = vpack.c.b16 %v350, %v349
      %vm369 = vcmask 130048
      %v371 = vsel %vm369, %v304, 0
      %v374 = vsel %vm369, %v306, 0
      %v377 = vsel %vm369, %v308, 0
      %v380 = vsel %vm369, %v310, 0
      %382 = vmatprep.subr.bf16.mxu0 0
      %383 = vmatpush1.bf16.msra.mxu0 %v358
      %384 = vmatprep.subr.bf16.mxu0 0
      %385 = vmatpush1.bf16.msra.mxu0 %v357
      %386 = vmatprep.subr.bf16.mxu0 0
      %387 = vmatpush1.bf16.msra.mxu0 %v356
      %388 = vmatprep.subr.bf16.mxu0 0
      %389 = vmatpush1.bf16.msra.mxu0 %v355
      %390 = vmatprep.subr.bf16.mxu0 0
      %391 = vmatpush1.bf16.msra.mxu0 %v354
      %392 = vmatprep.subr.bf16.mxu0 0
      %393 = vmatpush1.bf16.msra.mxu0 %v353
      %394 = vmatprep.subr.bf16.mxu0 0
      %395 = vmatpush1.bf16.msra.mxu0 %v352
      %396 = vmatprep.subr.bf16.mxu0 0
      %397 = vmatpush1.bf16.msra.mxu0 %v351
      %398 = vmatprep.subr.bf16.mxu0 0
      %399 = vmatpush2.bf16.msra.mxu0 0
      %400 = vmatprep.subr.bf16.mxu0 0
      %401 = vmatpush2.bf16.msra.mxu0 0
      %402 = vmatprep.subr.bf16.mxu0 0
      %403 = vmatpush2.bf16.msra.mxu0 0
      %404 = vmatprep.subr.bf16.mxu0 0
      %405 = vmatpush2.bf16.msra.mxu0 0
      %406 = vmatprep.subr.bf16.mxu0 0
      %407 = vmatpush2.bf16.msra.mxu0 0
      %408 = vmatprep.subr.bf16.mxu0 0
      %409 = vmatpush2.bf16.msra.mxu0 0
      %410 = vmatprep.subr.bf16.mxu0 0
      %411 = vmatpush2.bf16.msra.mxu0 0
      %412 = vmatprep.subr.bf16.mxu0 0
      %413 = vmatpush2.bf16.msra.mxu0 %v359
      %414 = vmatprep.mubr.bf16.mxu0 %v371
      %415 = vmatmul.mubr.bf16.gmra.mxu0 %v303
      %v416 = vpop.f32.mrf.mxu0
      %v417 = vadd.f32 0.0, %v416
      %v418 = vpop.f32.mrf.mxu0
      %v419 = vpop.f32.mrf.mxu0
      %v420 = vadd.f32 0.0, %v419
      %v421 = vpop.f32.mrf.mxu0
      %422 = vmatprep.mubr.bf16.mxu0 %v374
      %423 = vmatmul.mubr.bf16.gmra.mxu0 %v305
      %v424 = vpop.f32.mrf.mxu0
      %v425 = vadd.f32 0.0, %v424
      %v426 = vpop.f32.mrf.mxu0
      %v427 = vpop.f32.mrf.mxu0
      %v428 = vadd.f32 0.0, %v427
      %v429 = vpop.f32.mrf.mxu0
      %430 = vmatprep.mubr.bf16.mxu0 %v377
      %431 = vmatmul.mubr.bf16.gmra.mxu0 %v307
      %v432 = vpop.f32.mrf.mxu0
      %v433 = vadd.f32 0.0, %v432
      %v434 = vpop.f32.mrf.mxu0
      %v435 = vpop.f32.mrf.mxu0
      %v436 = vadd.f32 0.0, %v435
      %v437 = vpop.f32.mrf.mxu0
      %438 = vmatprep.mubr.bf16.mxu0 %v380
      %439 = vmatmul.mubr.bf16.gmra.mxu0 %v309
      %v440 = vpop.f32.mrf.mxu0
      %v441 = vadd.f32 0.0, %v440
      %v442 = vpop.f32.mrf.mxu0
      %v443 = vpop.f32.mrf.mxu0
      %v444 = vadd.f32 0.0, %v443
      %v445 = vpop.f32.mrf.mxu0
      %446 = vdwg.mxu0
      %v447 = vld [vmem:[%s4] sm:$0xff]
      %v448 = vld [vmem:[%s4 + $0x8] sm:$0xff]
      %v449 = vld [vmem:[%s4 + $0x10] sm:$0xff]
      %v450 = vld [vmem:[%s4 + $0x18] sm:$0xff]
      %v451 = vld [vmem:[%s5] sm:$0xf]
      %vm452 = vcmask 261120
      %v453 = vsel %vm452, %v417, 0.0
      %v454 = vsel %vm452, %v420, 0.0
      %v455 = vadd.f32 %v453, %v454
      %v456 = vsel %vm452, %v425, 0.0
      %v457 = vadd.f32 %v455, %v456
      %v458 = vsel %vm452, %v428, 0.0
      %v459 = vadd.f32 %v457, %v458
      %v460 = vsel %vm452, %v433, 0.0
      %v461 = vadd.f32 %v459, %v460
      %v462 = vsel %vm452, %v436, 0.0
      %v463 = vadd.f32 %v461, %v462
      %v464 = vsel %vm452, %v441, 0.0
      %v465 = vadd.f32 %v463, %v464
      %v466 = vsel %vm452, %v444, 0.0
      %v467 = vadd.f32 %v465, %v466
      %v468 = vrot.slane %v467, 4
      %v469 = vadd.f32 %v467, %v468
      %v470 = vrot.slane %v469, 2
      %v471 = vadd.f32 %v469, %v470
      %v472 = vrot.slane %v471, 1
      %v473 = vadd.f32 %v471, %v472
      %v475 = vsel %vm452, %v473, 0
      %477 = vmatprep.subr.mxu0 0.0
      %478 = vmatpush1.msra.mxu0 0.0
      %479 = vmatprep.subr.mxu0 0.0
      %480 = vmatpush1.msra.mxu0 0.0
      %481 = vmatprep.subr.mxu0 0.0
      %482 = vmatpush1.msra.mxu0 0.0
      %483 = vmatprep.subr.mxu0 0.0
      %484 = vmatpush1.msra.mxu0 0.0
      %485 = vmatprep.subr.mxu0 0.0
      %486 = vmatpush1.msra.mxu0 0.0
      %487 = vmatprep.subr.mxu0 0.0
      %488 = vmatpush1.msra.mxu0 0.0
      %489 = vmatprep.subr.mxu0 0.0
      %490 = vmatpush1.msra.mxu0 0.0
      %491 = vmatprep.subr.mxu0 0.0
      %492 = vmatpush1.msra.mxu0 0.0
      %493 = vmatprep.subr.mxu0 0.0
      %494 = vmatpush1.msra.mxu0 0.0
      %495 = vmatprep.subr.mxu0 0.0
      %496 = vmatpush1.msra.mxu0 0.0
      %497 = vmatprep.subr.mxu0 0.0
      %498 = vmatpush1.msra.mxu0 0.0
      %499 = vmatprep.subr.mxu0 0.0
      %500 = vmatpush1.msra.mxu0 0.0
      %501 = vmatprep.subr.mxu0 0.0
      %502 = vmatpush1.msra.mxu0 %v450
      %503 = vmatprep.subr.mxu0 0.0
      %504 = vmatpush1.msra.mxu0 %v449
      %505 = vmatprep.subr.mxu0 0.0
      %506 = vmatpush1.msra.mxu0 %v448
      %507 = vmatprep.subr.mxu0 0.0
      %508 = vmatpush1.msra.mxu0 %v447
      %509 = vmatprep.subr.mxu0 0.0
      %510 = vmatpush2.msra.mxu0 0.0
      %511 = vmatprep.subr.mxu0 0.0
      %512 = vmatpush2.msra.mxu0 0.0
      %513 = vmatprep.subr.mxu0 0.0
      %514 = vmatpush2.msra.mxu0 0.0
      %515 = vmatprep.subr.mxu0 0.0
      %516 = vmatpush2.msra.mxu0 0.0
      %517 = vmatprep.subr.mxu0 0.0
      %518 = vmatpush2.msra.mxu0 0.0
      %519 = vmatprep.subr.mxu0 0.0
      %520 = vmatpush2.msra.mxu0 0.0
      %521 = vmatprep.subr.mxu0 0.0
      %522 = vmatpush2.msra.mxu0 0.0
      %523 = vmatprep.subr.mxu0 0.0
      %524 = vmatpush2.msra.mxu0 0.0
      %525 = vmatprep.subr.mxu0 0.0
      %526 = vmatpush2.msra.mxu0 0.0
      %527 = vmatprep.subr.mxu0 0.0
      %528 = vmatpush2.msra.mxu0 0.0
      %529 = vmatprep.subr.mxu0 0.0
      %530 = vmatpush2.msra.mxu0 0.0
      %531 = vmatprep.subr.mxu0 0.0
      %532 = vmatpush2.msra.mxu0 0.0
      %533 = vmatprep.subr.mxu0 0.0
      %534 = vmatpush2.msra.mxu0 0.0
      %535 = vmatprep.subr.mxu0 0.0
      %536 = vmatpush2.msra.mxu0 0.0
      %537 = vmatprep.subr.mxu0 0.0
      %538 = vmatpush2.msra.mxu0 0.0
      %539 = vmatprep.subr.mxu0 0.0
      %540 = vmatpush2.msra.mxu0 0.0
      %541 = vmatprep.mubr.f32.mxu0 0.0
      %542 = vmatmul.mubr.f32.gmra.mxu0 %v475
      %v543 = vpop.f32.mrf.mxu0
      %v544 = vadd.f32 0.0, %v543
      %v545 = vpop.f32.mrf.mxu0
      %546 = vdwg.mxu0
      %v547 = vmul.f32 %v544, 0.001953125
      %vm548 = vcmask 31744
      %v550 = vsel %vm548, %v547, 0
      %vm552 = vcmask 1043456
      %v554 = vsel %vm552, %v451, 0
      %556 = vmatprep.subr.mxu0 0.0
      %557 = vmatpush1.msra.mxu0 0.0
      %558 = vmatprep.subr.mxu0 0.0
      %559 = vmatpush1.msra.mxu0 0.0
      %560 = vmatprep.subr.mxu0 0.0
      %561 = vmatpush1.msra.mxu0 0.0
      %562 = vmatprep.subr.mxu0 0.0
      %563 = vmatpush1.msra.mxu0 0.0
      %564 = vmatprep.subr.mxu0 0.0
      %565 = vmatpush1.msra.mxu0 0.0
      %566 = vmatprep.subr.mxu0 0.0
      %567 = vmatpush1.msra.mxu0 0.0
      %568 = vmatprep.subr.mxu0 0.0
      %569 = vmatpush1.msra.mxu0 0.0
      %570 = vmatprep.subr.mxu0 0.0
      %571 = vmatpush1.msra.mxu0 0.0
      %572 = vmatprep.subr.mxu0 0.0
      %573 = vmatpush1.msra.mxu0 0.0
      %574 = vmatprep.subr.mxu0 0.0
      %575 = vmatpush1.msra.mxu0 0.0
      %576 = vmatprep.subr.mxu0 0.0
      %577 = vmatpush1.msra.mxu0 0.0
      %578 = vmatprep.subr.mxu0 0.0
      %579 = vmatpush1.msra.mxu0 0.0
      %580 = vmatprep.subr.mxu0 0.0
      %581 = vmatpush1.msra.mxu0 0.0
      %582 = vmatprep.subr.mxu0 0.0
      %583 = vmatpush1.msra.mxu0 0.0
      %584 = vmatprep.subr.mxu0 0.0
      %585 = vmatpush1.msra.mxu0 0.0
      %586 = vmatprep.subr.mxu0 0.0
      %587 = vmatpush1.msra.mxu0 %v554
      %588 = vmatprep.subr.mxu0 0.0
      %589 = vmatpush2.msra.mxu0 0.0
      %590 = vmatprep.subr.mxu0 0.0
      %591 = vmatpush2.msra.mxu0 0.0
      %592 = vmatprep.subr.mxu0 0.0
      %593 = vmatpush2.msra.mxu0 0.0
      %594 = vmatprep.subr.mxu0 0.0
      %595 = vmatpush2.msra.mxu0 0.0
      %596 = vmatprep.subr.mxu0 0.0
      %597 = vmatpush2.msra.mxu0 0.0
      %598 = vmatprep.subr.mxu0 0.0
      %599 = vmatpush2.msra.mxu0 0.0
      %600 = vmatprep.subr.mxu0 0.0
      %601 = vmatpush2.msra.mxu0 0.0
      %602 = vmatprep.subr.mxu0 0.0
      %603 = vmatpush2.msra.mxu0 0.0
      %604 = vmatprep.subr.mxu0 0.0
      %605 = vmatpush2.msra.mxu0 0.0
      %606 = vmatprep.subr.mxu0 0.0
      %607 = vmatpush2.msra.mxu0 0.0
      %608 = vmatprep.subr.mxu0 0.0
      %609 = vmatpush2.msra.mxu0 0.0
      %610 = vmatprep.subr.mxu0 0.0
      %611 = vmatpush2.msra.mxu0 0.0
      %612 = vmatprep.subr.mxu0 0.0
      %613 = vmatpush2.msra.mxu0 0.0
      %614 = vmatprep.subr.mxu0 0.0
      %615 = vmatpush2.msra.mxu0 0.0
      %616 = vmatprep.subr.mxu0 0.0
      %617 = vmatpush2.msra.mxu0 0.0
      %618 = vmatprep.subr.mxu0 0.0
      %619 = vmatpush2.msra.mxu0 0.0
      %620 = vmatprep.mubr.f32.mxu0 0.0
      %621 = vmatmul.mubr.f32.gmra.mxu0 %v550
      %v622 = vpop.f32.mrf.mxu0
      %v623 = vadd.f32 0.0, %v622
      %v624 = vpop.f32.mrf.mxu0
      %625 = vdwg.mxu0
      %v626 = vlaneseq
      %v627 = vshrl.u32 %v626, 7
      %v628 = vsub.s32 0, %v627
      %v629 = vrot.slane %v623, %v628
      %v630 = vsub.f32 %v417, %v629
      %v631 = vsub.f32 %v420, %v629
      %v632 = vsub.f32 %v425, %v629
      %v633 = vsub.f32 %v428, %v629
      %v634 = vsub.f32 %v433, %v629
      %v635 = vsub.f32 %v436, %v629
      %v636 = vsub.f32 %v441, %v629
      %v637 = vsub.f32 %v444, %v629
      %v638 = vmul.f32 %v630, %v630
      %v639 = vmul.f32 %v631, %v631
      %v640 = vmul.f32 %v632, %v632
      %v641 = vmul.f32 %v633, %v633
      %v642 = vmul.f32 %v634, %v634
      %v643 = vmul.f32 %v635, %v635
      %v644 = vmul.f32 %v636, %v636
      %v645 = vmul.f32 %v637, %v637
      %v646 = vsel %vm452, %v638, 0.0
      %v647 = vsel %vm452, %v639, 0.0
      %v648 = vadd.f32 %v646, %v647
      %v649 = vsel %vm452, %v640, 0.0
      %v650 = vadd.f32 %v648, %v649
      %v651 = vsel %vm452, %v641, 0.0
      %v652 = vadd.f32 %v650, %v651
      %v653 = vsel %vm452, %v642, 0.0
      %v654 = vadd.f32 %v652, %v653
      %v655 = vsel %vm452, %v643, 0.0
      %v656 = vadd.f32 %v654, %v655
      %v657 = vsel %vm452, %v644, 0.0
      %v658 = vadd.f32 %v656, %v657
      %v659 = vsel %vm452, %v645, 0.0
      %v660 = vadd.f32 %v658, %v659
      %v661 = vrot.slane %v660, 4
      %v662 = vadd.f32 %v660, %v661
      %v663 = vrot.slane %v662, 2
      %v664 = vadd.f32 %v662, %v663
      %v665 = vrot.slane %v664, 1
      %v666 = vadd.f32 %v664, %v665
      %v668 = vsel %vm452, %v666, 0
      %670 = vmatprep.subr.mxu0 0.0
      %671 = vmatpush1.msra.mxu0 0.0
      %672 = vmatprep.subr.mxu0 0.0
      %673 = vmatpush1.msra.mxu0 0.0
      %674 = vmatprep.subr.mxu0 0.0
      %675 = vmatpush1.msra.mxu0 0.0
      %676 = vmatprep.subr.mxu0 0.0
      %677 = vmatpush1.msra.mxu0 0.0
      %678 = vmatprep.subr.mxu0 0.0
      %679 = vmatpush1.msra.mxu0 0.0
      %680 = vmatprep.subr.mxu0 0.0
      %681 = vmatpush1.msra.mxu0 0.0
      %682 = vmatprep.subr.mxu0 0.0
      %683 = vmatpush1.msra.mxu0 0.0
      %684 = vmatprep.subr.mxu0 0.0
      %685 = vmatpush1.msra.mxu0 0.0
      %686 = vmatprep.subr.mxu0 0.0
      %687 = vmatpush1.msra.mxu0 0.0
      %688 = vmatprep.subr.mxu0 0.0
      %689 = vmatpush1.msra.mxu0 0.0
      %690 = vmatprep.subr.mxu0 0.0
      %691 = vmatpush1.msra.mxu0 0.0
      %692 = vmatprep.subr.mxu0 0.0
      %693 = vmatpush1.msra.mxu0 0.0
      %694 = vmatprep.subr.mxu0 0.0
      %695 = vmatpush1.msra.mxu0 %v450
      %696 = vmatprep.subr.mxu0 0.0
      %697 = vmatpush1.msra.mxu0 %v449
      %698 = vmatprep.subr.mxu0 0.0
      %699 = vmatpush1.msra.mxu0 %v448
      %700 = vmatprep.subr.mxu0 0.0
      %701 = vmatpush1.msra.mxu0 %v447
      %702 = vmatprep.subr.mxu0 0.0
      %703 = vmatpush2.msra.mxu0 0.0
      %704 = vmatprep.subr.mxu0 0.0
      %705 = vmatpush2.msra.mxu0 0.0
      %706 = vmatprep.subr.mxu0 0.0
      %707 = vmatpush2.msra.mxu0 0.0
      %708 = vmatprep.subr.mxu0 0.0
      %709 = vmatpush2.msra.mxu0 0.0
      %710 = vmatprep.subr.mxu0 0.0
      %711 = vmatpush2.msra.mxu0 0.0
      %712 = vmatprep.subr.mxu0 0.0
      %713 = vmatpush2.msra.mxu0 0.0
      %714 = vmatprep.subr.mxu0 0.0
      %715 = vmatpush2.msra.mxu0 0.0
      %716 = vmatprep.subr.mxu0 0.0
      %717 = vmatpush2.msra.mxu0 0.0
      %718 = vmatprep.subr.mxu0 0.0
      %719 = vmatpush2.msra.mxu0 0.0
      %720 = vmatprep.subr.mxu0 0.0
      %721 = vmatpush2.msra.mxu0 0.0
      %722 = vmatprep.subr.mxu0 0.0
      %723 = vmatpush2.msra.mxu0 0.0
      %724 = vmatprep.subr.mxu0 0.0
      %725 = vmatpush2.msra.mxu0 0.0
      %726 = vmatprep.subr.mxu0 0.0
      %727 = vmatpush2.msra.mxu0 0.0
      %728 = vmatprep.subr.mxu0 0.0
      %729 = vmatpush2.msra.mxu0 0.0
      %730 = vmatprep.subr.mxu0 0.0
      %731 = vmatpush2.msra.mxu0 0.0
      %732 = vmatprep.subr.mxu0 0.0
      %733 = vmatpush2.msra.mxu0 0.0
      %734 = vmatprep.mubr.f32.mxu0 0.0
      %735 = vmatmul.mubr.f32.gmra.mxu0 %v668
      %v736 = vpop.f32.mrf.mxu0
      %v737 = vadd.f32 0.0, %v736
      %v738 = vpop.f32.mrf.mxu0
      %739 = vdwg.mxu0
      %v740 = vmul.f32 %v737, 0.001953125
      %v742 = vsel %vm548, %v740, 0
      %744 = vmatprep.subr.mxu0 0.0
      %745 = vmatpush1.msra.mxu0 0.0
      %746 = vmatprep.subr.mxu0 0.0
      %747 = vmatpush1.msra.mxu0 0.0
      %748 = vmatprep.subr.mxu0 0.0
      %749 = vmatpush1.msra.mxu0 0.0
      %750 = vmatprep.subr.mxu0 0.0
      %751 = vmatpush1.msra.mxu0 0.0
      %752 = vmatprep.subr.mxu0 0.0
      %753 = vmatpush1.msra.mxu0 0.0
      %754 = vmatprep.subr.mxu0 0.0
      %755 = vmatpush1.msra.mxu0 0.0
      %756 = vmatprep.subr.mxu0 0.0
      %757 = vmatpush1.msra.mxu0 0.0
      %758 = vmatprep.subr.mxu0 0.0
      %759 = vmatpush1.msra.mxu0 0.0
      %760 = vmatprep.subr.mxu0 0.0
      %761 = vmatpush1.msra.mxu0 0.0
      %762 = vmatprep.subr.mxu0 0.0
      %763 = vmatpush1.msra.mxu0 0.0
      %764 = vmatprep.subr.mxu0 0.0
      %765 = vmatpush1.msra.mxu0 0.0
      %766 = vmatprep.subr.mxu0 0.0
      %767 = vmatpush1.msra.mxu0 0.0
      %768 = vmatprep.subr.mxu0 0.0
      %769 = vmatpush1.msra.mxu0 0.0
      %770 = vmatprep.subr.mxu0 0.0
      %771 = vmatpush1.msra.mxu0 0.0
      %772 = vmatprep.subr.mxu0 0.0
      %773 = vmatpush1.msra.mxu0 0.0
      %774 = vmatprep.subr.mxu0 0.0
      %775 = vmatpush1.msra.mxu0 %v554
      %776 = vmatprep.subr.mxu0 0.0
      %777 = vmatpush2.msra.mxu0 0.0
      %778 = vmatprep.subr.mxu0 0.0
      %779 = vmatpush2.msra.mxu0 0.0
      %780 = vmatprep.subr.mxu0 0.0
      %781 = vmatpush2.msra.mxu0 0.0
      %782 = vmatprep.subr.mxu0 0.0
      %783 = vmatpush2.msra.mxu0 0.0
      %784 = vmatprep.subr.mxu0 0.0
      %785 = vmatpush2.msra.mxu0 0.0
      %786 = vmatprep.subr.mxu0 0.0
      %787 = vmatpush2.msra.mxu0 0.0
      %788 = vmatprep.subr.mxu0 0.0
      %789 = vmatpush2.msra.mxu0 0.0
      %790 = vmatprep.subr.mxu0 0.0
      %791 = vmatpush2.msra.mxu0 0.0
      %792 = vmatprep.subr.mxu0 0.0
      %793 = vmatpush2.msra.mxu0 0.0
      %794 = vmatprep.subr.mxu0 0.0
      %795 = vmatpush2.msra.mxu0 0.0
      %796 = vmatprep.subr.mxu0 0.0
      %797 = vmatpush2.msra.mxu0 0.0
      %798 = vmatprep.subr.mxu0 0.0
      %799 = vmatpush2.msra.mxu0 0.0
      %800 = vmatprep.subr.mxu0 0.0
      %801 = vmatpush2.msra.mxu0 0.0
      %802 = vmatprep.subr.mxu0 0.0
      %803 = vmatpush2.msra.mxu0 0.0
      %804 = vmatprep.subr.mxu0 0.0
      %805 = vmatpush2.msra.mxu0 0.0
      %806 = vmatprep.subr.mxu0 0.0
      %807 = vmatpush2.msra.mxu0 0.0
      %808 = vmatprep.mubr.f32.mxu0 0.0
      %809 = vmatmul.mubr.f32.gmra.mxu0 %v742
      %v810 = vpop.f32.mrf.mxu0
      %v811 = vadd.f32 1e-05, %v810
      %v812 = vpop.f32.mrf.mxu0
      %813 = vdwg.mxu0
      %v814 = vrsqrt.pop %v811
      %v815 = vlaneseq
      %v816 = vshrl.u32 %v815, 7
      %v817 = vsub.s32 0, %v816
      %v818 = vrot.slane %v814, %v817
      %v819 = vmul.f32 %v630, %v818
      %v820 = vmul.f32 %v631, %v818
      %v821 = vmul.f32 %v632, %v818
      %v822 = vmul.f32 %v633, %v818
      %v823 = vmul.f32 %v634, %v818
      %v824 = vmul.f32 %v635, %v818
      %v825 = vmul.f32 %v636, %v818
      %v826 = vmul.f32 %v637, %v818
      %v827 = vld [vmem:[%s2] sm:$0x1]
      %v829 = vlaneseq
      %v830 = vshrl.u32 %v829, 7
      %v831 = vsub.s32 0, %v830
      %v832 = vrot.slane %v827, %v831
      %v834 = vmul.f32 %v819, %v832
      %v835 = vmul.f32 %v820, %v832
      %v836 = vmul.f32 %v821, %v832
      %v837 = vmul.f32 %v822, %v832
      %v838 = vmul.f32 %v823, %v832
      %v839 = vmul.f32 %v824, %v832
      %v840 = vmul.f32 %v825, %v832
      %v841 = vmul.f32 %v826, %v832
      %v842 = vld [vmem:[%s3] sm:$0x1]
      %v844 = vlaneseq
      %v845 = vshrl.u32 %v844, 7
      %v846 = vsub.s32 0, %v845
      %v847 = vrot.slane %v842, %v846
      %v849 = vadd.f32 %v834, %v847
      %v850 = vadd.f32 %v835, %v847
      %v851 = vadd.f32 %v836, %v847
      %v852 = vadd.f32 %v837, %v847
      %v853 = vadd.f32 %v838, %v847
      %v854 = vadd.f32 %v839, %v847
      %v855 = vadd.f32 %v840, %v847
      %v856 = vadd.f32 %v841, %v847
      %v857 = vmax.f32 %v849, 0.0
      %v858 = vmax.f32 %v850, 0.0
      %v859 = vmax.f32 %v851, 0.0
      %v860 = vmax.f32 %v852, 0.0
      %v861 = vmax.f32 %v853, 0.0
      %v862 = vmax.f32 %v854, 0.0
      %v863 = vmax.f32 %v855, 0.0
      %v864 = vmax.f32 %v856, 0.0
      %v865 = vpack.c.bf16 %v858, %v857
      %v866 = vpack.c.bf16 %v860, %v859
      %v867 = vpack.c.bf16 %v862, %v861
      %v868 = vpack.c.bf16 %v864, %v863
      %v873 = vunpack.c.l.b16 %v865
      %v874 = vunpack.c.h.b16 %v865
      %v875 = vunpack.c.l.b16 %v866
      %v876 = vunpack.c.h.b16 %v866
      %v877 = vunpack.c.l.b16 %v867
      %v878 = vunpack.c.h.b16 %v867
      %v879 = vunpack.c.l.b16 %v868
      %v880 = vunpack.c.h.b16 %v868
      %v881 = vpack.c.b16 %v873, %v873
      %v882 = vpack.c.b16 %v874, %v874
      %v883 = vpack.c.b16 %v875, %v875
      %v884 = vpack.c.b16 %v876, %v876
      %v885 = vpack.c.b16 %v877, %v877
      %v886 = vpack.c.b16 %v878, %v878
      %v887 = vpack.c.b16 %v879, %v879
      %v888 = vpack.c.b16 %v880, %v880
      %vm897 = vcmask 257024
      %898 = vst.msk [vmem:[%s251] sm:$0xf] %vm897, %v881
      %899 = vst.msk [vmem:[%s251 + $0x4] sm:$0xf] %vm897, %v882
      %900 = vst.msk [vmem:[%s251 + $0x8] sm:$0xf] %vm897, %v883
      %901 = vst.msk [vmem:[%s251 + $0xc] sm:$0xf] %vm897, %v884
      %902 = vst.msk [vmem:[%s251 + $0x10] sm:$0xf] %vm897, %v885
      %903 = vst.msk [vmem:[%s251 + $0x14] sm:$0xf] %vm897, %v886
      %904 = vst.msk [vmem:[%s251 + $0x18] sm:$0xf] %vm897, %v887
      %905 = vst.msk [vmem:[%s251 + $0x1c] sm:$0xf] %vm897, %v888
      %p906 = scmp.lt.s32.totalorder %s17, 1
      %s907 = scalar_select %p906, %s17, 1
      %s908 = smul.addr %s907, 8
      %s909 = smul.addr %s908, 4
      %s910 = scalar_lea.vmem %s6, %s909
      // Predicated region
      $region45: #{single_forward.9} parent=43 // pred_check
        %p911 = pneg %p166
      $region46: #{single_forward.9} parent=43 // pred_check_branch
        %913 = sbr.rel (%p911) target = $region48
      $region47: #{single_forward.9} parent=43 // pred_region
        _
      $region48: #{single_forward.9} parent=43 // pred_fallthru
        _
    $region44: #{single_forward.9} parent=5 // pred_fallthru
      _
    %p914 = scmp.le.s32.totalorder 2, %s12
    // Predicated region
    $region49: #{single_forward.9} parent=5 // pred_check
      %p915 = pneg %p914
    $region50: #{single_forward.9} parent=5 // pred_check_branch
      %917 = sbr.rel (%p915) target = $region52
    $region51: #{single_forward.9} parent=5 // pred_region
      %s918 = ssub.s32 %s12, 2
      // Predicated region
      $region53: #{single_forward.9} parent=51 // pred_check
        %p919 = pneg %p172
      $region54: #{single_forward.9} parent=51 // pred_check_branch
        %921 = sbr.rel (%p919) target = $region56
      $region55: #{single_forward.9} parent=51 // pred_region
        %p922 = scmp.lt.s32.totalorder %s18, 1
        %s923 = scalar_select %p922, %s18, 1
        %s924 = smul.addr %s923, 8
        %s925 = smul.addr %s924, 4
        %s926 = scalar_lea.vmem %s6, %s925
      $region56: #{single_forward.9} parent=51 // pred_fallthru
        _
    $region52: #{single_forward.9} parent=5 // pred_fallthru
      _
  $region6: #{single_forward.9} parent=0 // loop_footer
    %s16 = sadd.s32 1, %s12
  $region7: #{single_forward.9} parent=0 // loop_footer_branch
    %11 = sbr.rel target = $region3
  $region8: #{single_forward.9} parent=0 // loop_exit
    _

// kernel: single_forward.10
$region0: #{single_forward.10}
  #allocation0 [shape = 'u32[]', space=smem, size = 0x4, offset = 0x4, fixed_abs, tag = 'smem constant byte address 0x4 - core index']
  #allocation1 [shape = 'u32[144,128]{1,0:T(1,128)}', space=vmem, size = 0x12000, scoped, tag = 'internal scratch']
  %s0 = inlined_call_operand.vmem [shape: bf16[2,64,288], index: 0, kind: input, shape index: {}]
  %s1 = inlined_call_operand.vmem [shape: bf16[288,32], index: 1, kind: input, shape index: {}]
  %s2 = inlined_call_operand.vmem [shape: f32[1,32], index: 2, kind: input, shape index: {}]
  %s3 = inlined_call_operand.vmem [shape: f32[1,32], index: 3, kind: input, shape index: {}]
  %s4 = inlined_call_operand.vmem [shape: f32[32,4], index: 4, kind: input, shape index: {}]
  %s5 = inlined_call_operand.vmem [shape: f32[4,32], index: 5, kind: input, shape index: {}]
  %s6 = inlined_call_operand.vmem [shape: bf16[2,64,32], index: 6, kind: output, shape index: {}]
  %s7 = sld [smem:[#allocation0]]
  $region57: #{single_forward.10} parent=0
    _
  %s9 = ssub.s32 1, %s7
  %s10 = scalar_select 0, %s9, %s7
  loop: start=0, step=1, limit=4
  $region2: #{single_forward.10} parent=0 // loop_pre_header
    _
  $region3: #{single_forward.10} parent=0 // loop_header
    %s12 = sphi 0, %s16
    %p13 = scmp.ge.s32.totalorder %s12, 4
    %s22 = sphi 0, %s24
    %s25 = sphi 0, %s22
    %s26 = sphi 0, %s25
    %s42 = sphi 0, %s26
    %s46 = sphi 0, %s46
    %s48 = sphi 0, %s46
    %s49 = sphi 0, %s48
    %s63 = sphi 0, %s49
    %s67 = sphi 0, %s67
    %s69 = sphi 0, %s67
    %s70 = sphi 0, %s69
    %s84 = sphi 0, %s70
    %s88 = sphi 0, %s88
    %s90 = sphi 0, %s88
    %s91 = sphi 0, %s90
    %s105 = sphi 0, %s91
    %s109 = sphi 0, %s109
    %s111 = sphi 0, %s109
    %s112 = sphi 0, %s111
    %s126 = sphi 0, %s112
    %s130 = sphi 0, %s130
    %s132 = sphi 0, %s130
    %s133 = sphi 0, %s132
    %s147 = sphi 0, %s133
    %s153 = sphi 0, %s155
    %s156 = sphi 0, %s153
    %s157 = sphi 0, %s156
    %s173 = sphi 0, %s157
  $region4: #{single_forward.10} parent=0 // loop_header_branch
    %15 = sbr.rel (%p13) target = $region8
  $region5: #{single_forward.10} parent=0 // loop_body
    %s17 = ssub.s32 %s12, 1
    %s18 = ssub.s32 %s12, 2
    %s19 = sadd.s32 %s12, 1
    %s20 = ssub.s32 %s12, %s19
    %p21 = scmp.eq.s32.totalorder %s20, 0
    %s23 = sadd.s32 %s22, 1
    %s24 = scalar_select %p21, %s22, %s23
    %p27 = pneg %p21
    %p28 = scmp.eq.s32.totalorder %s12, 1
    %p29 = por %p27, %p28
    %p30 = scmp.ne.s32.totalorder %s22, %s25
    %p31 = scmp.eq.s32.totalorder %s12, 0
    %p32 = por %p30, %p31
    %p33 = scmp.ne.s32.totalorder %s22, %s25
    %p34 = scmp.eq.s32.totalorder %s17, 1
    %p35 = por %p33, %p34
    %p36 = scmp.ne.s32.totalorder %s25, %s26
    %p37 = scmp.eq.s32.totalorder %s17, 0
    %p38 = por %p36, %p37
    %p39 = scmp.ne.s32.totalorder %s25, %s26
    %p40 = scmp.eq.s32.totalorder %s18, 1
    %p41 = por %p39, %p40
    %p43 = scmp.ne.s32.totalorder %s26, %s42
    %p44 = scmp.eq.s32.totalorder %s18, 0
    %p45 = por %p43, %p44
    %s47 = sadd.s32 %s46, 1
    %p50 = scmp.eq.s32.totalorder %s12, 1
    %p51 = scmp.ne.s32.totalorder %s46, %s48
    %p52 = scmp.eq.s32.totalorder %s12, 0
    %p53 = por %p51, %p52
    %p54 = scmp.ne.s32.totalorder %s46, %s48
    %p55 = scmp.eq.s32.totalorder %s17, 1
    %p56 = por %p54, %p55
    %p57 = scmp.ne.s32.totalorder %s48, %s49
    %p58 = scmp.eq.s32.totalorder %s17, 0
    %p59 = por %p57, %p58
    %p60 = scmp.ne.s32.totalorder %s48, %s49
    %p61 = scmp.eq.s32.totalorder %s18, 1
    %p62 = por %p60, %p61
    %p64 = scmp.ne.s32.totalorder %s49, %s63
    %p65 = scmp.eq.s32.totalorder %s18, 0
    %p66 = por %p64, %p65
    %s68 = sadd.s32 %s67, 1
    %p71 = scmp.eq.s32.totalorder %s12, 1
    %p72 = scmp.ne.s32.totalorder %s67, %s69
    %p73 = scmp.eq.s32.totalorder %s12, 0
    %p74 = por %p72, %p73
    %p75 = scmp.ne.s32.totalorder %s67, %s69
    %p76 = scmp.eq.s32.totalorder %s17, 1
    %p77 = por %p75, %p76
    %p78 = scmp.ne.s32.totalorder %s69, %s70
    %p79 = scmp.eq.s32.totalorder %s17, 0
    %p80 = por %p78, %p79
    %p81 = scmp.ne.s32.totalorder %s69, %s70
    %p82 = scmp.eq.s32.totalorder %s18, 1
    %p83 = por %p81, %p82
    %p85 = scmp.ne.s32.totalorder %s70, %s84
    %p86 = scmp.eq.s32.totalorder %s18, 0
    %p87 = por %p85, %p86
    %s89 = sadd.s32 %s88, 1
    %p92 = scmp.eq.s32.totalorder %s12, 1
    %p93 = scmp.ne.s32.totalorder %s88, %s90
    %p94 = scmp.eq.s32.totalorder %s12, 0
    %p95 = por %p93, %p94
    %p96 = scmp.ne.s32.totalorder %s88, %s90
    %p97 = scmp.eq.s32.totalorder %s17, 1
    %p98 = por %p96, %p97
    %p99 = scmp.ne.s32.totalorder %s90, %s91
    %p100 = scmp.eq.s32.totalorder %s17, 0
    %p101 = por %p99, %p100
    %p102 = scmp.ne.s32.totalorder %s90, %s91
    %p103 = scmp.eq.s32.totalorder %s18, 1
    %p104 = por %p102, %p103
    %p106 = scmp.ne.s32.totalorder %s91, %s105
    %p107 = scmp.eq.s32.totalorder %s18, 0
    %p108 = por %p106, %p107
    %s110 = sadd.s32 %s109, 1
    %p113 = scmp.eq.s32.totalorder %s12, 1
    %p114 = scmp.ne.s32.totalorder %s109, %s111
    %p115 = scmp.eq.s32.totalorder %s12, 0
    %p116 = por %p114, %p115
    %p117 = scmp.ne.s32.totalorder %s109, %s111
    %p118 = scmp.eq.s32.totalorder %s17, 1
    %p119 = por %p117, %p118
    %p120 = scmp.ne.s32.totalorder %s111, %s112
    %p121 = scmp.eq.s32.totalorder %s17, 0
    %p122 = por %p120, %p121
    %p123 = scmp.ne.s32.totalorder %s111, %s112
    %p124 = scmp.eq.s32.totalorder %s18, 1
    %p125 = por %p123, %p124
    %p127 = scmp.ne.s32.totalorder %s112, %s126
    %p128 = scmp.eq.s32.totalorder %s18, 0
    %p129 = por %p127, %p128
    %s131 = sadd.s32 %s130, 1
    %p134 = scmp.eq.s32.totalorder %s12, 1
    %p135 = scmp.ne.s32.totalorder %s130, %s132
    %p136 = scmp.eq.s32.totalorder %s12, 0
    %p137 = por %p135, %p136
    %p138 = scmp.ne.s32.totalorder %s130, %s132
    %p139 = scmp.eq.s32.totalorder %s17, 1
    %p140 = por %p138, %p139
    %p141 = scmp.ne.s32.totalorder %s132, %s133
    %p142 = scmp.eq.s32.totalorder %s17, 0
    %p143 = por %p141, %p142
    %p144 = scmp.ne.s32.totalorder %s132, %s133
    %p145 = scmp.eq.s32.totalorder %s18, 1
    %p146 = por %p144, %p145
    %p148 = scmp.ne.s32.totalorder %s133, %s147
    %p149 = scmp.eq.s32.totalorder %s18, 0
    %p150 = por %p148, %p149
    %s151 = ssub.s32 %s12, %s19
    %p152 = scmp.eq.s32.totalorder %s151, 0
    %s154 = sadd.s32 %s153, 1
    %s155 = scalar_select %p152, %s153, %s154
    %p158 = pneg %p152
    %p159 = scmp.eq.s32.totalorder %s12, 1
    %p160 = por %p158, %p159
    %p161 = scmp.ne.s32.totalorder %s153, %s156
    %p162 = scmp.eq.s32.totalorder %s12, 0
    %p163 = por %p161, %p162
    %p164 = scmp.ne.s32.totalorder %s153, %s156
    %p165 = scmp.eq.s32.totalorder %s17, 1
    %p166 = por %p164, %p165
    %p167 = scmp.ne.s32.totalorder %s156, %s157
    %p168 = scmp.eq.s32.totalorder %s17, 0
    %p169 = por %p167, %p168
    %p170 = scmp.ne.s32.totalorder %s156, %s157
    %p171 = scmp.eq.s32.totalorder %s18, 1
    %p172 = por %p170, %p171
    %p174 = scmp.ne.s32.totalorder %s157, %s173
    %p175 = scmp.eq.s32.totalorder %s18, 0
    %p176 = por %p174, %p175
    %p177 = scmp.le.s32.totalorder 1, %s12
    %p178 = scmp.lt.s32.totalorder %s12, 3
    %p179 = pnand %p177, %p178
    %p180 = pneg %p179
    // Predicated region
    $region9: #{single_forward.10} parent=5 // pred_check
      _
    $region10: #{single_forward.10} parent=5 // pred_check_branch
      %182 = sbr.rel (%p179) target = $region12
    $region11: #{single_forward.10} parent=5 // pred_region
      %s183 = ssub.s32 %s12, 1
      // Predicated region
      $region13: #{single_forward.10} parent=11 // pred_check
        %p184 = pneg %p59
      $region14: #{single_forward.10} parent=11 // pred_check_branch
        %186 = sbr.rel (%p184) target = $region16
      $region15: #{single_forward.10} parent=11 // pred_region
        _
      $region16: #{single_forward.10} parent=11 // pred_fallthru
        _
      // Predicated region
      $region17: #{single_forward.10} parent=11 // pred_check
        %p187 = pneg %p80
      $region18: #{single_forward.10} parent=11 // pred_check_branch
        %189 = sbr.rel (%p187) target = $region20
      $region19: #{single_forward.10} parent=11 // pred_region
        _
      $region20: #{single_forward.10} parent=11 // pred_fallthru
        _
      // Predicated region
      $region21: #{single_forward.10} parent=11 // pred_check
        %p190 = pneg %p101
      $region22: #{single_forward.10} parent=11 // pred_check_branch
        %192 = sbr.rel (%p190) target = $region24
      $region23: #{single_forward.10} parent=11 // pred_region
        _
      $region24: #{single_forward.10} parent=11 // pred_fallthru
        _
      // Predicated region
      $region25: #{single_forward.10} parent=11 // pred_check
        %p193 = pneg %p122
      $region26: #{single_forward.10} parent=11 // pred_check_branch
        %195 = sbr.rel (%p193) target = $region28
      $region27: #{single_forward.10} parent=11 // pred_region
        _
      $region28: #{single_forward.10} parent=11 // pred_fallthru
        _
      // Predicated region
      $region29: #{single_forward.10} parent=11 // pred_check
        %p196 = pneg %p143
      $region30: #{single_forward.10} parent=11 // pred_check_branch
        %198 = sbr.rel (%p196) target = $region32
      $region31: #{single_forward.10} parent=11 // pred_region
        _
      $region32: #{single_forward.10} parent=11 // pred_fallthru
        _
    $region12: #{single_forward.10} parent=5 // pred_fallthru
      _
    %p199 = scmp.lt.s32.totalorder %s12, 2
    // Predicated region
    $region33: #{single_forward.10} parent=5 // pred_check
      %p200 = pneg %p199
    $region34: #{single_forward.10} parent=5 // pred_check_branch
      %202 = sbr.rel (%p200) target = $region36
    $region35: #{single_forward.10} parent=5 // pred_region
      // Predicated region
      $region37: #{single_forward.10} parent=35 // pred_check
        %p203 = pneg %p32
      $region38: #{single_forward.10} parent=35 // pred_check_branch
        %205 = sbr.rel (%p203) target = $region40
      $region39: #{single_forward.10} parent=35 // pred_region
        %p206 = scmp.lt.s32.totalorder %s12, 1
        %s207 = scalar_select %p206, %s12, 1
        %s208 = smul.addr %s207, 24
        %s209 = smul.addr %s208, 4
        %s210 = scalar_lea.vmem %s0, %s209
      $region40: #{single_forward.10} parent=35 // pred_fallthru
        _
    $region36: #{single_forward.10} parent=5 // pred_fallthru
      _
    %p211 = scmp.le.s32.totalorder 1, %s12
    %p212 = scmp.lt.s32.totalorder %s12, 3
    %p213 = pnand %p211, %p212
    %p214 = pneg %p213
    // Predicated region
    $region41: #{single_forward.10} parent=5 // pred_check
      _
    $region42: #{single_forward.10} parent=5 // pred_check_branch
      %216 = sbr.rel (%p213) target = $region44
    $region43: #{single_forward.10} parent=5 // pred_region
      %s217 = ssub.s32 %s12, 1
      %p218 = scmp.lt.s32.totalorder %s17, 1
      %s219 = scalar_select %p218, %s17, 1
      %s220 = smul.addr %s219, 24
      %s221 = smul.addr %s220, 4
      %s222 = scalar_lea.vmem %s0, %s221
      %p223 = pneg %p38
      %p224 = pneg %p35
      %p225 = pneg %p59
      %p226 = pneg %p56
      %p227 = pneg %p80
      %p228 = pneg %p77
      %p229 = pneg %p101
      %p230 = pneg %p98
      %p231 = pneg %p122
      %p232 = pneg %p119
      %p233 = pneg %p143
      %p234 = pneg %p140
      %p235 = pneg %p169
      %p236 = pneg %p166
      %p237 = scmp.lt.s32.totalorder %s17, 1
      %s238 = scalar_select %p237, %s17, 1
      %s239 = smul.addr %s238, 8
      %s240 = smul.addr %s239, 4
      %s241 = scalar_lea.vmem %s6, %s240
      %p242 = scmp.lt.s32.totalorder %s17, 1
      %s243 = scalar_select %p242, %s17, 1
      %s244 = smul.addr %s243, 24
      %s245 = smul.addr %s244, 4
      %s246 = scalar_lea.vmem %s0, %s245
      %p247 = scmp.lt.s32.totalorder %s17, 1
      %s248 = scalar_select %p247, %s17, 1
      %s249 = smul.addr %s248, 8
      %s250 = smul.addr %s249, 4
      %s251 = scalar_lea.vmem %s6, %s250
      %v253 = vld [vmem:[%s246] sm:$0xff]
      %v254 = vld [vmem:[%s246 + $0x8] sm:$0xf]
      %v255 = vld [vmem:[%s246 + $0xc] sm:$0xff]
      %v256 = vld [vmem:[%s246 + $0x14] sm:$0xf]
      %v257 = vld [vmem:[%s246 + $0x18] sm:$0xff]
      %v258 = vld [vmem:[%s246 + $0x20] sm:$0xf]
      %v259 = vld [vmem:[%s246 + $0x24] sm:$0xff]
      %v260 = vld [vmem:[%s246 + $0x2c] sm:$0xf]
      %v261 = vld [vmem:[%s246 + $0x30] sm:$0xff]
      %v262 = vld [vmem:[%s246 + $0x38] sm:$0xf]
      %v263 = vld [vmem:[%s246 + $0x3c] sm:$0xff]
      %v264 = vld [vmem:[%s246 + $0x44] sm:$0xf]
      %v265 = vld [vmem:[%s246 + $0x48] sm:$0xff]
      %v266 = vld [vmem:[%s246 + $0x50] sm:$0xf]
      %v267 = vld [vmem:[%s246 + $0x54] sm:$0xff]
      %v268 = vld [vmem:[%s246 + $0x5c] sm:$0xf]
      %v269 = vld [vmem:[%s1] sm:$0xf]
      %v270 = vld [vmem:[%s1 + $0x4] sm:$0xf]
      %v271 = vld [vmem:[%s1 + $0x8] sm:$0xf]
      %v272 = vld [vmem:[%s1 + $0xc] sm:$0xf]
      %v273 = vld [vmem:[%s1 + $0x10] sm:$0xf]
      %v274 = vld [vmem:[%s1 + $0x14] sm:$0xf]
      %v275 = vld [vmem:[%s1 + $0x18] sm:$0xf]
      %v276 = vld [vmem:[%s1 + $0x1c] sm:$0xf]
      %v277 = vld [vmem:[%s1 + $0x20] sm:$0xf]
      %v278 = vld [vmem:[%s1 + $0x24] sm:$0xf]
      %v279 = vld [vmem:[%s1 + $0x28] sm:$0xf]
      %v280 = vld [vmem:[%s1 + $0x2c] sm:$0xf]
      %v281 = vld [vmem:[%s1 + $0x30] sm:$0xf]
      %v282 = vld [vmem:[%s1 + $0x34] sm:$0xf]
      %v283 = vld [vmem:[%s1 + $0x38] sm:$0xf]
      %v284 = vld [vmem:[%s1 + $0x3c] sm:$0xf]
      %v285 = vld [vmem:[%s1 + $0x40] sm:$0xf]
      %v286 = vld [vmem:[%s1 + $0x44] sm:$0xf]
      %v287 = vld [vmem:[%s1 + $0x48] sm:$0xf]
      %v288 = vld [vmem:[%s1 + $0x4c] sm:$0xf]
      %v289 = vld [vmem:[%s1 + $0x50] sm:$0xf]
      %v290 = vld [vmem:[%s1 + $0x54] sm:$0xf]
      %v291 = vld [vmem:[%s1 + $0x58] sm:$0xf]
      %v292 = vld [vmem:[%s1 + $0x5c] sm:$0xf]
      %v293 = vld [vmem:[%s1 + $0x60] sm:$0xf]
      %v294 = vld [vmem:[%s1 + $0x64] sm:$0xf]
      %v295 = vld [vmem:[%s1 + $0x68] sm:$0xf]
      %v296 = vld [vmem:[%s1 + $0x6c] sm:$0xf]
      %v297 = vld [vmem:[%s1 + $0x70] sm:$0xf]
      %v298 = vld [vmem:[%s1 + $0x74] sm:$0xf]
      %v299 = vld [vmem:[%s1 + $0x78] sm:$0xf]
      %v300 = vld [vmem:[%s1 + $0x7c] sm:$0xf]
      %v301 = vld [vmem:[%s1 + $0x80] sm:$0xf]
      %v302 = vld [vmem:[%s1 + $0x84] sm:$0xf]
      %v303 = vld [vmem:[%s1 + $0x88] sm:$0xf]
      %v304 = vld [vmem:[%s1 + $0x8c] sm:$0xf]
      %v321 = vunpack.c.l.b16 %v253
      %v322 = vunpack.c.h.b16 %v253
      %v323 = vunpack.c.l.b16 %v254
      %v324 = vunpack.c.l.b16 %v255
      %v325 = vunpack.c.h.b16 %v255
      %v326 = vunpack.c.l.b16 %v256
      %v327 = vunpack.c.l.b16 %v257
      %v328 = vunpack.c.h.b16 %v257
      %v329 = vunpack.c.l.b16 %v258
      %v330 = vunpack.c.l.b16 %v259
      %v331 = vunpack.c.h.b16 %v259
      %v332 = vunpack.c.l.b16 %v260
      %v333 = vunpack.c.l.b16 %v261
      %v334 = vunpack.c.h.b16 %v261
      %v335 = vunpack.c.l.b16 %v262
      %v336 = vunpack.c.l.b16 %v263
      %v337 = vunpack.c.h.b16 %v263
      %v338 = vunpack.c.l.b16 %v264
      %v339 = vunpack.c.l.b16 %v265
      %v340 = vunpack.c.h.b16 %v265
      %v341 = vunpack.c.l.b16 %v266
      %v342 = vunpack.c.l.b16 %v267
      %v343 = vunpack.c.h.b16 %v267
      %v344 = vunpack.c.l.b16 %v268
      %v345 = vpack.c.b16 %v324, %v321
      %v346 = vpack.c.b16 %v325, %v322
      %v347 = vpack.c.b16 %v326, %v323
      %v348 = vpack.c.b16 %v330, %v327
      %v349 = vpack.c.b16 %v331, %v328
      %v350 = vpack.c.b16 %v332, %v329
      %v351 = vpack.c.b16 %v336, %v333
      %v352 = vpack.c.b16 %v337, %v334
      %v353 = vpack.c.b16 %v338, %v335
      %v354 = vpack.c.b16 %v342, %v339
      %v355 = vpack.c.b16 %v343, %v340
      %v356 = vpack.c.b16 %v344, %v341
      %v401 = vunpack.c.l.b16 %v269
      %v402 = vunpack.c.l.b16 %v270
      %v403 = vunpack.c.l.b16 %v271
      %v404 = vunpack.c.l.b16 %v272
      %v405 = vunpack.c.l.b16 %v273
      %v406 = vunpack.c.l.b16 %v274
      %v407 = vunpack.c.l.b16 %v275
      %v408 = vunpack.c.l.b16 %v276
      %v409 = vunpack.c.l.b16 %v277
      %v410 = vunpack.c.l.b16 %v278
      %v411 = vunpack.c.l.b16 %v279
      %v412 = vunpack.c.l.b16 %v280
      %v413 = vunpack.c.l.b16 %v281
      %v414 = vunpack.c.l.b16 %v282
      %v415 = vunpack.c.l.b16 %v283
      %v416 = vunpack.c.l.b16 %v284
      %v417 = vunpack.c.l.b16 %v285
      %v418 = vunpack.c.l.b16 %v286
      %v419 = vunpack.c.l.b16 %v287
      %v420 = vunpack.c.l.b16 %v288
      %v421 = vunpack.c.l.b16 %v289
      %v422 = vunpack.c.l.b16 %v290
      %v423 = vunpack.c.l.b16 %v291
      %v424 = vunpack.c.l.b16 %v292
      %v425 = vunpack.c.l.b16 %v293
      %v426 = vunpack.c.l.b16 %v294
      %v427 = vunpack.c.l.b16 %v295
      %v428 = vunpack.c.l.b16 %v296
      %v429 = vunpack.c.l.b16 %v297
      %v430 = vunpack.c.l.b16 %v298
      %v431 = vunpack.c.l.b16 %v299
      %v432 = vunpack.c.l.b16 %v300
      %v433 = vunpack.c.l.b16 %v301
      %v434 = vunpack.c.l.b16 %v302
      %v435 = vunpack.c.l.b16 %v303
      %v436 = vunpack.c.l.b16 %v304
      %v437 = vpack.c.b16 %v402, %v401
      %v438 = vpack.c.b16 %v404, %v403
      %v439 = vpack.c.b16 %v406, %v405
      %v440 = vpack.c.b16 %v408, %v407
      %v441 = vpack.c.b16 %v410, %v409
      %v442 = vpack.c.b16 %v412, %v411
      %v443 = vpack.c.b16 %v414, %v413
      %v444 = vpack.c.b16 %v416, %v415
      %v445 = vpack.c.b16 %v418, %v417
      %v446 = vpack.c.b16 %v420, %v419
      %v447 = vpack.c.b16 %v422, %v421
      %v448 = vpack.c.b16 %v424, %v423
      %v449 = vpack.c.b16 %v426, %v425
      %v450 = vpack.c.b16 %v428, %v427
      %v451 = vpack.c.b16 %v430, %v429
      %v452 = vpack.c.b16 %v432, %v431
      %v453 = vpack.c.b16 %v434, %v433
      %v454 = vpack.c.b16 %v436, %v435
      %vm473 = vcmask 261120
      %v475 = vsel %vm473, %v347, 0
      %v478 = vsel %vm473, %v350, 0
      %v481 = vsel %vm473, %v353, 0
      %v484 = vsel %vm473, %v356, 0
      %486 = vmatprep.subr.bf16.mxu0 0
      %487 = vmatpush1.bf16.msra.mxu0 %v444
      %488 = vmatprep.subr.bf16.mxu0 0
      %489 = vmatpush1.bf16.msra.mxu0 %v443
      %490 = vmatprep.subr.bf16.mxu0 0
      %491 = vmatpush1.bf16.msra.mxu0 %v442
      %492 = vmatprep.subr.bf16.mxu0 0
      %493 = vmatpush1.bf16.msra.mxu0 %v441
      %494 = vmatprep.subr.bf16.mxu0 0
      %495 = vmatpush1.bf16.msra.mxu0 %v440
      %496 = vmatprep.subr.bf16.mxu0 0
      %497 = vmatpush1.bf16.msra.mxu0 %v439
      %498 = vmatprep.subr.bf16.mxu0 0
      %499 = vmatpush1.bf16.msra.mxu0 %v438
      %500 = vmatprep.subr.bf16.mxu0 0
      %501 = vmatpush1.bf16.msra.mxu0 %v437
      %502 = vmatprep.subr.bf16.mxu0 0
      %503 = vmatpush2.bf16.msra.mxu0 %v452
      %504 = vmatprep.subr.bf16.mxu0 0
      %505 = vmatpush2.bf16.msra.mxu0 %v451
      %506 = vmatprep.subr.bf16.mxu0 0
      %507 = vmatpush2.bf16.msra.mxu0 %v450
      %508 = vmatprep.subr.bf16.mxu0 0
      %509 = vmatpush2.bf16.msra.mxu0 %v449
      %510 = vmatprep.subr.bf16.mxu0 0
      %511 = vmatpush2.bf16.msra.mxu0 %v448
      %512 = vmatprep.subr.bf16.mxu0 0
      %513 = vmatpush2.bf16.msra.mxu0 %v447
      %514 = vmatprep.subr.bf16.mxu0 0
      %515 = vmatpush2.bf16.msra.mxu0 %v446
      %516 = vmatprep.subr.bf16.mxu0 0
      %517 = vmatpush2.bf16.msra.mxu0 %v445
      %518 = vmatprep.mubr.bf16.mxu0 %v346
      %519 = vmatmul.mubr.bf16.gmra.mxu0 %v345
      %v520 = vpop.f32.mrf.mxu0
      %v521 = vadd.f32 0.0, %v520
      %v522 = vpop.f32.mrf.mxu0
      %v523 = vpop.f32.mrf.mxu0
      %v524 = vadd.f32 0.0, %v523
      %v525 = vpop.f32.mrf.mxu0
      %526 = vmatprep.mubr.bf16.mxu0 %v349
      %527 = vmatmul.mubr.bf16.gmra.mxu0 %v348
      %v528 = vpop.f32.mrf.mxu0
      %v529 = vadd.f32 0.0, %v528
      %v530 = vpop.f32.mrf.mxu0
      %v531 = vpop.f32.mrf.mxu0
      %v532 = vadd.f32 0.0, %v531
      %v533 = vpop.f32.mrf.mxu0
      %534 = vmatprep.mubr.bf16.mxu0 %v352
      %535 = vmatmul.mubr.bf16.gmra.mxu0 %v351
      %v536 = vpop.f32.mrf.mxu0
      %v537 = vadd.f32 0.0, %v536
      %v538 = vpop.f32.mrf.mxu0
      %v539 = vpop.f32.mrf.mxu0
      %v540 = vadd.f32 0.0, %v539
      %v541 = vpop.f32.mrf.mxu0
      %542 = vmatprep.mubr.bf16.mxu0 %v355
      %543 = vmatmul.mubr.bf16.gmra.mxu0 %v354
      %v544 = vpop.f32.mrf.mxu0
      %v545 = vadd.f32 0.0, %v544
      %v546 = vpop.f32.mrf.mxu0
      %v547 = vpop.f32.mrf.mxu0
      %v548 = vadd.f32 0.0, %v547
      %v549 = vpop.f32.mrf.mxu0
      %550 = vdwg.mxu0
      %551 = vmatprep.subr.bf16.mxu0 0
      %552 = vmatpush1.bf16.msra.mxu0 0
      %553 = vmatprep.subr.bf16.mxu0 0
      %554 = vmatpush1.bf16.msra.mxu0 0
      %555 = vmatprep.subr.bf16.mxu0 0
      %556 = vmatpush1.bf16.msra.mxu0 0
      %557 = vmatprep.subr.bf16.mxu0 0
      %558 = vmatpush1.bf16.msra.mxu0 0
      %559 = vmatprep.subr.bf16.mxu0 0
      %560 = vmatpush1.bf16.msra.mxu0 0
      %561 = vmatprep.subr.bf16.mxu0 0
      %562 = vmatpush1.bf16.msra.mxu0 0
      %563 = vmatprep.subr.bf16.mxu0 0
      %564 = vmatpush1.bf16.msra.mxu0 %v454
      %565 = vmatprep.subr.bf16.mxu0 0
      %566 = vmatpush1.bf16.msra.mxu0 %v453
      %567 = vmatprep.subr.bf16.mxu0 0
      %568 = vmatpush2.bf16.msra.mxu0 0
      %569 = vmatprep.subr.bf16.mxu0 0
      %570 = vmatpush2.bf16.msra.mxu0 0
      %571 = vmatprep.subr.bf16.mxu0 0
      %572 = vmatpush2.bf16.msra.mxu0 0
      %573 = vmatprep.subr.bf16.mxu0 0
      %574 = vmatpush2.bf16.msra.mxu0 0
      %575 = vmatprep.subr.bf16.mxu0 0
      %576 = vmatpush2.bf16.msra.mxu0 0
      %577 = vmatprep.subr.bf16.mxu0 0
      %578 = vmatpush2.bf16.msra.mxu0 0
      %579 = vmatprep.subr.bf16.mxu0 0
      %580 = vmatpush2.bf16.msra.mxu0 0
      %581 = vmatprep.subr.bf16.mxu0 0
      %582 = vmatpush2.bf16.msra.mxu0 0
      %583 = vmatprep.mubr.bf16.mxu0 0
      %584 = vmatmul.mubr.bf16.gmra.mxu0 %v475
      %v585 = vpop.f32.mrf.mxu0
      %v586 = vadd.f32 %v521, %v585
      %v587 = vpop.f32.mrf.mxu0
      %v588 = vpop.f32.mrf.mxu0
      %v589 = vadd.f32 %v524, %v588
      %v590 = vpop.f32.mrf.mxu0
      %591 = vmatprep.mubr.bf16.mxu0 0
      %592 = vmatmul.mubr.bf16.gmra.mxu0 %v478
      %v593 = vpop.f32.mrf.mxu0
      %v594 = vadd.f32 %v529, %v593
      %v595 = vpop.f32.mrf.mxu0
      %v596 = vpop.f32.mrf.mxu0
      %v597 = vadd.f32 %v532, %v596
      %v598 = vpop.f32.mrf.mxu0
      %599 = vmatprep.mubr.bf16.mxu0 0
      %600 = vmatmul.mubr.bf16.gmra.mxu0 %v481
      %v601 = vpop.f32.mrf.mxu0
      %v602 = vadd.f32 %v537, %v601
      %v603 = vpop.f32.mrf.mxu0
      %v604 = vpop.f32.mrf.mxu0
      %v605 = vadd.f32 %v540, %v604
      %v606 = vpop.f32.mrf.mxu0
      %607 = vmatprep.mubr.bf16.mxu0 0
      %608 = vmatmul.mubr.bf16.gmra.mxu0 %v484
      %v609 = vpop.f32.mrf.mxu0
      %v610 = vadd.f32 %v545, %v609
      %v611 = vpop.f32.mrf.mxu0
      %v612 = vpop.f32.mrf.mxu0
      %v613 = vadd.f32 %v548, %v612
      %v614 = vpop.f32.mrf.mxu0
      %615 = vdwg.mxu0
      %v616 = vld [vmem:[%s4] sm:$0xff]
      %v617 = vld [vmem:[%s4 + $0x8] sm:$0xff]
      %v618 = vld [vmem:[%s4 + $0x10] sm:$0xff]
      %v619 = vld [vmem:[%s4 + $0x18] sm:$0xff]
      %v620 = vld [vmem:[%s5] sm:$0xf]
      %v621 = vsel %vm473, %v586, 0.0
      %v622 = vsel %vm473, %v589, 0.0
      %v623 = vadd.f32 %v621, %v622
      %v624 = vsel %vm473, %v594, 0.0
      %v625 = vadd.f32 %v623, %v624
      %v626 = vsel %vm473, %v597, 0.0
      %v627 = vadd.f32 %v625, %v626
      %v628 = vsel %vm473, %v602, 0.0
      %v629 = vadd.f32 %v627, %v628
      %v630 = vsel %vm473, %v605, 0.0
      %v631 = vadd.f32 %v629, %v630
      %v632 = vsel %vm473, %v610, 0.0
      %v633 = vadd.f32 %v631, %v632
      %v634 = vsel %vm473, %v613, 0.0
      %v635 = vadd.f32 %v633, %v634
      %v636 = vrot.slane %v635, 4
      %v637 = vadd.f32 %v635, %v636
      %v638 = vrot.slane %v637, 2
      %v639 = vadd.f32 %v637, %v638
      %v640 = vrot.slane %v639, 1
      %v641 = vadd.f32 %v639, %v640
      %v643 = vsel %vm473, %v641, 0
      %645 = vmatprep.subr.mxu0 0.0
      %646 = vmatpush1.msra.mxu0 0.0
      %647 = vmatprep.subr.mxu0 0.0
      %648 = vmatpush1.msra.mxu0 0.0
      %649 = vmatprep.subr.mxu0 0.0
      %650 = vmatpush1.msra.mxu0 0.0
      %651 = vmatprep.subr.mxu0 0.0
      %652 = vmatpush1.msra.mxu0 0.0
      %653 = vmatprep.subr.mxu0 0.0
      %654 = vmatpush1.msra.mxu0 0.0
      %655 = vmatprep.subr.mxu0 0.0
      %656 = vmatpush1.msra.mxu0 0.0
      %657 = vmatprep.subr.mxu0 0.0
      %658 = vmatpush1.msra.mxu0 0.0
      %659 = vmatprep.subr.mxu0 0.0
      %660 = vmatpush1.msra.mxu0 0.0
      %661 = vmatprep.subr.mxu0 0.0
      %662 = vmatpush1.msra.mxu0 0.0
      %663 = vmatprep.subr.mxu0 0.0
      %664 = vmatpush1.msra.mxu0 0.0
      %665 = vmatprep.subr.mxu0 0.0
      %666 = vmatpush1.msra.mxu0 0.0
      %667 = vmatprep.subr.mxu0 0.0
      %668 = vmatpush1.msra.mxu0 0.0
      %669 = vmatprep.subr.mxu0 0.0
      %670 = vmatpush1.msra.mxu0 %v619
      %671 = vmatprep.subr.mxu0 0.0
      %672 = vmatpush1.msra.mxu0 %v618
      %673 = vmatprep.subr.mxu0 0.0
      %674 = vmatpush1.msra.mxu0 %v617
      %675 = vmatprep.subr.mxu0 0.0
      %676 = vmatpush1.msra.mxu0 %v616
      %677 = vmatprep.subr.mxu0 0.0
      %678 = vmatpush2.msra.mxu0 0.0
      %679 = vmatprep.subr.mxu0 0.0
      %680 = vmatpush2.msra.mxu0 0.0
      %681 = vmatprep.subr.mxu0 0.0
      %682 = vmatpush2.msra.mxu0 0.0
      %683 = vmatprep.subr.mxu0 0.0
      %684 = vmatpush2.msra.mxu0 0.0
      %685 = vmatprep.subr.mxu0 0.0
      %686 = vmatpush2.msra.mxu0 0.0
      %687 = vmatprep.subr.mxu0 0.0
      %688 = vmatpush2.msra.mxu0 0.0
      %689 = vmatprep.subr.mxu0 0.0
      %690 = vmatpush2.msra.mxu0 0.0
      %691 = vmatprep.subr.mxu0 0.0
      %692 = vmatpush2.msra.mxu0 0.0
      %693 = vmatprep.subr.mxu0 0.0
      %694 = vmatpush2.msra.mxu0 0.0
      %695 = vmatprep.subr.mxu0 0.0
      %696 = vmatpush2.msra.mxu0 0.0
      %697 = vmatprep.subr.mxu0 0.0
      %698 = vmatpush2.msra.mxu0 0.0
      %699 = vmatprep.subr.mxu0 0.0
      %700 = vmatpush2.msra.mxu0 0.0
      %701 = vmatprep.subr.mxu0 0.0
      %702 = vmatpush2.msra.mxu0 0.0
      %703 = vmatprep.subr.mxu0 0.0
      %704 = vmatpush2.msra.mxu0 0.0
      %705 = vmatprep.subr.mxu0 0.0
      %706 = vmatpush2.msra.mxu0 0.0
      %707 = vmatprep.subr.mxu0 0.0
      %708 = vmatpush2.msra.mxu0 0.0
      %709 = vmatprep.mubr.f32.mxu0 0.0
      %710 = vmatmul.mubr.f32.gmra.mxu0 %v643
      %v711 = vpop.f32.mrf.mxu0
      %v712 = vadd.f32 0.0, %v711
      %v713 = vpop.f32.mrf.mxu0
      %714 = vdwg.mxu0
      %v715 = vmul.f32 %v712, 0.001953125
      %vm716 = vcmask 31744
      %v718 = vsel %vm716, %v715, 0
      %vm720 = vcmask 1043456
      %v722 = vsel %vm720, %v620, 0
      %724 = vmatprep.subr.mxu0 0.0
      %725 = vmatpush1.msra.mxu0 0.0
      %726 = vmatprep.subr.mxu0 0.0
      %727 = vmatpush1.msra.mxu0 0.0
      %728 = vmatprep.subr.mxu0 0.0
      %729 = vmatpush1.msra.mxu0 0.0
      %730 = vmatprep.subr.mxu0 0.0
      %731 = vmatpush1.msra.mxu0 0.0
      %732 = vmatprep.subr.mxu0 0.0
      %733 = vmatpush1.msra.mxu0 0.0
      %734 = vmatprep.subr.mxu0 0.0
      %735 = vmatpush1.msra.mxu0 0.0
      %736 = vmatprep.subr.mxu0 0.0
      %737 = vmatpush1.msra.mxu0 0.0
      %738 = vmatprep.subr.mxu0 0.0
      %739 = vmatpush1.msra.mxu0 0.0
      %740 = vmatprep.subr.mxu0 0.0
      %741 = vmatpush1.msra.mxu0 0.0
      %742 = vmatprep.subr.mxu0 0.0
      %743 = vmatpush1.msra.mxu0 0.0
      %744 = vmatprep.subr.mxu0 0.0
      %745 = vmatpush1.msra.mxu0 0.0
      %746 = vmatprep.subr.mxu0 0.0
      %747 = vmatpush1.msra.mxu0 0.0
      %748 = vmatprep.subr.mxu0 0.0
      %749 = vmatpush1.msra.mxu0 0.0
      %750 = vmatprep.subr.mxu0 0.0
      %751 = vmatpush1.msra.mxu0 0.0
      %752 = vmatprep.subr.mxu0 0.0
      %753 = vmatpush1.msra.mxu0 0.0
      %754 = vmatprep.subr.mxu0 0.0
      %755 = vmatpush1.msra.mxu0 %v722
      %756 = vmatprep.subr.mxu0 0.0
      %757 = vmatpush2.msra.mxu0 0.0
      %758 = vmatprep.subr.mxu0 0.0
      %759 = vmatpush2.msra.mxu0 0.0
      %760 = vmatprep.subr.mxu0 0.0
      %761 = vmatpush2.msra.mxu0 0.0
      %762 = vmatprep.subr.mxu0 0.0
      %763 = vmatpush2.msra.mxu0 0.0
      %764 = vmatprep.subr.mxu0 0.0
      %765 = vmatpush2.msra.mxu0 0.0
      %766 = vmatprep.subr.mxu0 0.0
      %767 = vmatpush2.msra.mxu0 0.0
      %768 = vmatprep.subr.mxu0 0.0
      %769 = vmatpush2.msra.mxu0 0.0
      %770 = vmatprep.subr.mxu0 0.0
      %771 = vmatpush2.msra.mxu0 0.0
      %772 = vmatprep.subr.mxu0 0.0
      %773 = vmatpush2.msra.mxu0 0.0
      %774 = vmatprep.subr.mxu0 0.0
      %775 = vmatpush2.msra.mxu0 0.0
      %776 = vmatprep.subr.mxu0 0.0
      %777 = vmatpush2.msra.mxu0 0.0
      %778 = vmatprep.subr.mxu0 0.0
      %779 = vmatpush2.msra.mxu0 0.0
      %780 = vmatprep.subr.mxu0 0.0
      %781 = vmatpush2.msra.mxu0 0.0
      %782 = vmatprep.subr.mxu0 0.0
      %783 = vmatpush2.msra.mxu0 0.0
      %784 = vmatprep.subr.mxu0 0.0
      %785 = vmatpush2.msra.mxu0 0.0
      %786 = vmatprep.subr.mxu0 0.0
      %787 = vmatpush2.msra.mxu0 0.0
      %788 = vmatprep.mubr.f32.mxu0 0.0
      %789 = vmatmul.mubr.f32.gmra.mxu0 %v718
      %v790 = vpop.f32.mrf.mxu0
      %v791 = vadd.f32 0.0, %v790
      %v792 = vpop.f32.mrf.mxu0
      %793 = vdwg.mxu0
      %v794 = vlaneseq
      %v795 = vshrl.u32 %v794, 7
      %v796 = vsub.s32 0, %v795
      %v797 = vrot.slane %v791, %v796
      %v798 = vsub.f32 %v586, %v797
      %v799 = vsub.f32 %v589, %v797
      %v800 = vsub.f32 %v594, %v797
      %v801 = vsub.f32 %v597, %v797
      %v802 = vsub.f32 %v602, %v797
      %v803 = vsub.f32 %v605, %v797
      %v804 = vsub.f32 %v610, %v797
      %v805 = vsub.f32 %v613, %v797
      %v806 = vmul.f32 %v798, %v798
      %v807 = vmul.f32 %v799, %v799
      %v808 = vmul.f32 %v800, %v800
      %v809 = vmul.f32 %v801, %v801
      %v810 = vmul.f32 %v802, %v802
      %v811 = vmul.f32 %v803, %v803
      %v812 = vmul.f32 %v804, %v804
      %v813 = vmul.f32 %v805, %v805
      %v814 = vsel %vm473, %v806, 0.0
      %v815 = vsel %vm473, %v807, 0.0
      %v816 = vadd.f32 %v814, %v815
      %v817 = vsel %vm473, %v808, 0.0
      %v818 = vadd.f32 %v816, %v817
      %v819 = vsel %vm473, %v809, 0.0
      %v820 = vadd.f32 %v818, %v819
      %v821 = vsel %vm473, %v810, 0.0
      %v822 = vadd.f32 %v820, %v821
      %v823 = vsel %vm473, %v811, 0.0
      %v824 = vadd.f32 %v822, %v823
      %v825 = vsel %vm473, %v812, 0.0
      %v826 = vadd.f32 %v824, %v825
      %v827 = vsel %vm473, %v813, 0.0
      %v828 = vadd.f32 %v826, %v827
      %v829 = vrot.slane %v828, 4
      %v830 = vadd.f32 %v828, %v829
      %v831 = vrot.slane %v830, 2
      %v832 = vadd.f32 %v830, %v831
      %v833 = vrot.slane %v832, 1
      %v834 = vadd.f32 %v832, %v833
      %v836 = vsel %vm473, %v834, 0
      %838 = vmatprep.subr.mxu0 0.0
      %839 = vmatpush1.msra.mxu0 0.0
      %840 = vmatprep.subr.mxu0 0.0
      %841 = vmatpush1.msra.mxu0 0.0
      %842 = vmatprep.subr.mxu0 0.0
      %843 = vmatpush1.msra.mxu0 0.0
      %844 = vmatprep.subr.mxu0 0.0
      %845 = vmatpush1.msra.mxu0 0.0
      %846 = vmatprep.subr.mxu0 0.0
      %847 = vmatpush1.msra.mxu0 0.0
      %848 = vmatprep.subr.mxu0 0.0
      %849 = vmatpush1.msra.mxu0 0.0
      %850 = vmatprep.subr.mxu0 0.0
      %851 = vmatpush1.msra.mxu0 0.0
      %852 = vmatprep.subr.mxu0 0.0
      %853 = vmatpush1.msra.mxu0 0.0
      %854 = vmatprep.subr.mxu0 0.0
      %855 = vmatpush1.msra.mxu0 0.0
      %856 = vmatprep.subr.mxu0 0.0
      %857 = vmatpush1.msra.mxu0 0.0
      %858 = vmatprep.subr.mxu0 0.0
      %859 = vmatpush1.msra.mxu0 0.0
      %860 = vmatprep.subr.mxu0 0.0
      %861 = vmatpush1.msra.mxu0 0.0
      %862 = vmatprep.subr.mxu0 0.0
      %863 = vmatpush1.msra.mxu0 %v619
      %864 = vmatprep.subr.mxu0 0.0
      %865 = vmatpush1.msra.mxu0 %v618
      %866 = vmatprep.subr.mxu0 0.0
      %867 = vmatpush1.msra.mxu0 %v617
      %868 = vmatprep.subr.mxu0 0.0
      %869 = vmatpush1.msra.mxu0 %v616
      %870 = vmatprep.subr.mxu0 0.0
      %871 = vmatpush2.msra.mxu0 0.0
      %872 = vmatprep.subr.mxu0 0.0
      %873 = vmatpush2.msra.mxu0 0.0
      %874 = vmatprep.subr.mxu0 0.0
      %875 = vmatpush2.msra.mxu0 0.0
      %876 = vmatprep.subr.mxu0 0.0
      %877 = vmatpush2.msra.mxu0 0.0
      %878 = vmatprep.subr.mxu0 0.0
      %879 = vmatpush2.msra.mxu0 0.0
      %880 = vmatprep.subr.mxu0 0.0
      %881 = vmatpush2.msra.mxu0 0.0
      %882 = vmatprep.subr.mxu0 0.0
      %883 = vmatpush2.msra.mxu0 0.0
      %884 = vmatprep.subr.mxu0 0.0
      %885 = vmatpush2.msra.mxu0 0.0
      %886 = vmatprep.subr.mxu0 0.0
      %887 = vmatpush2.msra.mxu0 0.0
      %888 = vmatprep.subr.mxu0 0.0
      %889 = vmatpush2.msra.mxu0 0.0
      %890 = vmatprep.subr.mxu0 0.0
      %891 = vmatpush2.msra.mxu0 0.0
      %892 = vmatprep.subr.mxu0 0.0
      %893 = vmatpush2.msra.mxu0 0.0
      %894 = vmatprep.subr.mxu0 0.0
      %895 = vmatpush2.msra.mxu0 0.0
      %896 = vmatprep.subr.mxu0 0.0
      %897 = vmatpush2.msra.mxu0 0.0
      %898 = vmatprep.subr.mxu0 0.0
      %899 = vmatpush2.msra.mxu0 0.0
      %900 = vmatprep.subr.mxu0 0.0
      %901 = vmatpush2.msra.mxu0 0.0
      %902 = vmatprep.mubr.f32.mxu0 0.0
      %903 = vmatmul.mubr.f32.gmra.mxu0 %v836
      %v904 = vpop.f32.mrf.mxu0
      %v905 = vadd.f32 0.0, %v904
      %v906 = vpop.f32.mrf.mxu0
      %907 = vdwg.mxu0
      %v908 = vmul.f32 %v905, 0.001953125
      %v910 = vsel %vm716, %v908, 0
      %912 = vmatprep.subr.mxu0 0.0
      %913 = vmatpush1.msra.mxu0 0.0
      %914 = vmatprep.subr.mxu0 0.0
      %915 = vmatpush1.msra.mxu0 0.0
      %916 = vmatprep.subr.mxu0 0.0
      %917 = vmatpush1.msra.mxu0 0.0
      %918 = vmatprep.subr.mxu0 0.0
      %919 = vmatpush1.msra.mxu0 0.0
      %920 = vmatprep.subr.mxu0 0.0
      %921 = vmatpush1.msra.mxu0 0.0
      %922 = vmatprep.subr.mxu0 0.0
      %923 = vmatpush1.msra.mxu0 0.0
      %924 = vmatprep.subr.mxu0 0.0
      %925 = vmatpush1.msra.mxu0 0.0
      %926 = vmatprep.subr.mxu0 0.0
      %927 = vmatpush1.msra.mxu0 0.0
      %928 = vmatprep.subr.mxu0 0.0
      %929 = vmatpush1.msra.mxu0 0.0
      %930 = vmatprep.subr.mxu0 0.0
      %931 = vmatpush1.msra.mxu0 0.0
      %932 = vmatprep.subr.mxu0 0.0
      %933 = vmatpush1.msra.mxu0 0.0
      %934 = vmatprep.subr.mxu0 0.0
      %935 = vmatpush1.msra.mxu0 0.0
      %936 = vmatprep.subr.mxu0 0.0
      %937 = vmatpush1.msra.mxu0 0.0
      %938 = vmatprep.subr.mxu0 0.0
      %939 = vmatpush1.msra.mxu0 0.0
      %940 = vmatprep.subr.mxu0 0.0
      %941 = vmatpush1.msra.mxu0 0.0
      %942 = vmatprep.subr.mxu0 0.0
      %943 = vmatpush1.msra.mxu0 %v722
      %944 = vmatprep.subr.mxu0 0.0
      %945 = vmatpush2.msra.mxu0 0.0
      %946 = vmatprep.subr.mxu0 0.0
      %947 = vmatpush2.msra.mxu0 0.0
      %948 = vmatprep.subr.mxu0 0.0
      %949 = vmatpush2.msra.mxu0 0.0
      %950 = vmatprep.subr.mxu0 0.0
      %951 = vmatpush2.msra.mxu0 0.0
      %952 = vmatprep.subr.mxu0 0.0
      %953 = vmatpush2.msra.mxu0 0.0
      %954 = vmatprep.subr.mxu0 0.0
      %955 = vmatpush2.msra.mxu0 0.0
      %956 = vmatprep.subr.mxu0 0.0
      %957 = vmatpush2.msra.mxu0 0.0
      %958 = vmatprep.subr.mxu0 0.0
      %959 = vmatpush2.msra.mxu0 0.0
      %960 = vmatprep.subr.mxu0 0.0
      %961 = vmatpush2.msra.mxu0 0.0
      %962 = vmatprep.subr.mxu0 0.0
      %963 = vmatpush2.msra.mxu0 0.0
      %964 = vmatprep.subr.mxu0 0.0
      %965 = vmatpush2.msra.mxu0 0.0
      %966 = vmatprep.subr.mxu0 0.0
      %967 = vmatpush2.msra.mxu0 0.0
      %968 = vmatprep.subr.mxu0 0.0
      %969 = vmatpush2.msra.mxu0 0.0
      %970 = vmatprep.subr.mxu0 0.0
      %971 = vmatpush2.msra.mxu0 0.0
      %972 = vmatprep.subr.mxu0 0.0
      %973 = vmatpush2.msra.mxu0 0.0
      %974 = vmatprep.subr.mxu0 0.0
      %975 = vmatpush2.msra.mxu0 0.0
      %976 = vmatprep.mubr.f32.mxu0 0.0
      %977 = vmatmul.mubr.f32.gmra.mxu0 %v910
      %v978 = vpop.f32.mrf.mxu0
      %v979 = vadd.f32 1e-05, %v978
      %v980 = vpop.f32.mrf.mxu0
      %981 = vdwg.mxu0
      %v982 = vrsqrt.pop %v979
      %v983 = vlaneseq
      %v984 = vshrl.u32 %v983, 7
      %v985 = vsub.s32 0, %v984
      %v986 = vrot.slane %v982, %v985
      %v987 = vmul.f32 %v798, %v986
      %v988 = vmul.f32 %v799, %v986
      %v989 = vmul.f32 %v800, %v986
      %v990 = vmul.f32 %v801, %v986
      %v991 = vmul.f32 %v802, %v986
      %v992 = vmul.f32 %v803, %v986
      %v993 = vmul.f32 %v804, %v986
      %v994 = vmul.f32 %v805, %v986
      %v995 = vld [vmem:[%s2] sm:$0x1]
      %v997 = vlaneseq
      %v998 = vshrl.u32 %v997, 7
      %v999 = vsub.s32 0, %v998
      %v1000 = vrot.slane %v995, %v999
      %v1002 = vmul.f32 %v987, %v1000
      %v1003 = vmul.f32 %v988, %v1000
      %v1004 = vmul.f32 %v989, %v1000
      %v1005 = vmul.f32 %v990, %v1000
      %v1006 = vmul.f32 %v991, %v1000
      %v1007 = vmul.f32 %v992, %v1000
      %v1008 = vmul.f32 %v993, %v1000
      %v1009 = vmul.f32 %v994, %v1000
      %v1010 = vld [vmem:[%s3] sm:$0x1]
      %v1012 = vlaneseq
      %v1013 = vshrl.u32 %v1012, 7
      %v1014 = vsub.s32 0, %v1013
      %v1015 = vrot.slane %v1010, %v1014
      %v1017 = vadd.f32 %v1002, %v1015
      %v1018 = vadd.f32 %v1003, %v1015
      %v1019 = vadd.f32 %v1004, %v1015
      %v1020 = vadd.f32 %v1005, %v1015
      %v1021 = vadd.f32 %v1006, %v1015
      %v1022 = vadd.f32 %v1007, %v1015
      %v1023 = vadd.f32 %v1008, %v1015
      %v1024 = vadd.f32 %v1009, %v1015
      %v1025 = vmax.f32 %v1017, 0.0
      %v1026 = vmax.f32 %v1018, 0.0
      %v1027 = vmax.f32 %v1019, 0.0
      %v1028 = vmax.f32 %v1020, 0.0
      %v1029 = vmax.f32 %v1021, 0.0
      %v1030 = vmax.f32 %v1022, 0.0
      %v1031 = vmax.f32 %v1023, 0.0
      %v1032 = vmax.f32 %v1024, 0.0
      %v1033 = vpack.c.bf16 %v1026, %v1025
      %v1034 = vpack.c.bf16 %v1028, %v1027
      %v1035 = vpack.c.bf16 %v1030, %v1029
      %v1036 = vpack.c.bf16 %v1032, %v1031
      %v1041 = vunpack.c.l.b16 %v1033
      %v1042 = vunpack.c.h.b16 %v1033
      %v1043 = vunpack.c.l.b16 %v1034
      %v1044 = vunpack.c.h.b16 %v1034
      %v1045 = vunpack.c.l.b16 %v1035
      %v1046 = vunpack.c.h.b16 %v1035
      %v1047 = vunpack.c.l.b16 %v1036
      %v1048 = vunpack.c.h.b16 %v1036
      %v1049 = vpack.c.b16 %v1041, %v1041
      %v1050 = vpack.c.b16 %v1042, %v1042
      %v1051 = vpack.c.b16 %v1043, %v1043
      %v1052 = vpack.c.b16 %v1044, %v1044
      %v1053 = vpack.c.b16 %v1045, %v1045
      %v1054 = vpack.c.b16 %v1046, %v1046
      %v1055 = vpack.c.b16 %v1047, %v1047
      %v1056 = vpack.c.b16 %v1048, %v1048
      %vm1065 = vcmask 257024
      %1066 = vst.msk [vmem:[%s251] sm:$0xf] %vm1065, %v1049
      %1067 = vst.msk [vmem:[%s251 + $0x4] sm:$0xf] %vm1065, %v1050
      %1068 = vst.msk [vmem:[%s251 + $0x8] sm:$0xf] %vm1065, %v1051
      %1069 = vst.msk [vmem:[%s251 + $0xc] sm:$0xf] %vm1065, %v1052
      %1070 = vst.msk [vmem:[%s251 + $0x10] sm:$0xf] %vm1065, %v1053
      %1071 = vst.msk [vmem:[%s251 + $0x14] sm:$0xf] %vm1065, %v1054
      %1072 = vst.msk [vmem:[%s251 + $0x18] sm:$0xf] %vm1065, %v1055
      %1073 = vst.msk [vmem:[%s251 + $0x1c] sm:$0xf] %vm1065, %v1056
      %p1074 = scmp.lt.s32.totalorder %s17, 1
      %s1075 = scalar_select %p1074, %s17, 1
      %s1076 = smul.addr %s1075, 8
      %s1077 = smul.addr %s1076, 4
      %s1078 = scalar_lea.vmem %s6, %s1077
      // Predicated region
      $region45: #{single_forward.10} parent=43 // pred_check
        %p1079 = pneg %p166
      $region46: #{single_forward.10} parent=43 // pred_check_branch
        %1081 = sbr.rel (%p1079) target = $region48
      $region47: #{single_forward.10} parent=43 // pred_region
        _
      $region48: #{single_forward.10} parent=43 // pred_fallthru
        _
    $region44: #{single_forward.10} parent=5 // pred_fallthru
      _
    %p1082 = scmp.le.s32.totalorder 2, %s12
    // Predicated region
    $region49: #{single_forward.10} parent=5 // pred_check
      %p1083 = pneg %p1082
    $region50: #{single_forward.10} parent=5 // pred_check_branch
      %1085 = sbr.rel (%p1083) target = $region52
    $region51: #{single_forward.10} parent=5 // pred_region
      %s1086 = ssub.s32 %s12, 2
      // Predicated region
      $region53: #{single_forward.10} parent=51 // pred_check
        %p1087 = pneg %p172
      $region54: #{single_forward.10} parent=51 // pred_check_branch
        %1089 = sbr.rel (%p1087) target = $region56
      $region55: #{single_forward.10} parent=51 // pred_region
        %p1090 = scmp.lt.s32.totalorder %s18, 1
        %s1091 = scalar_select %p1090, %s18, 1
        %s1092 = smul.addr %s1091, 8
        %s1093 = smul.addr %s1092, 4
        %s1094 = scalar_lea.vmem %s6, %s1093
      $region56: #{single_forward.10} parent=51 // pred_fallthru
        _
    $region52: #{single_forward.10} parent=5 // pred_fallthru
      _
  $region6: #{single_forward.10} parent=0 // loop_footer
    %s16 = sadd.s32 1, %s12
  $region7: #{single_forward.10} parent=0 // loop_footer_branch
    %11 = sbr.rel target = $region3
  $region8: #{single_forward.10} parent=0 // loop_exit
    _

// kernel: single_forward.11
$region0: #{single_forward.11}
  #allocation0 [shape = 'u32[]', space=smem, size = 0x4, offset = 0x4, fixed_abs, tag = 'smem constant byte address 0x4 - core index']
  #allocation1 [shape = 'u32[144,128]{1,0:T(1,128)}', space=vmem, size = 0x12000, scoped, tag = 'internal scratch']
  %s0 = inlined_call_operand.vmem [shape: bf16[128,32], index: 0, kind: input, shape index: {}]
  %s1 = inlined_call_operand.vmem [shape: bf16[32,32], index: 1, kind: input, shape index: {}]
  %s2 = inlined_call_operand.vmem [shape: f32[1,32], index: 2, kind: input, shape index: {}]
  %s3 = inlined_call_operand.vmem [shape: bf16[32,18], index: 3, kind: input, shape index: {}]
  %s4 = inlined_call_operand.vmem [shape: f32[1,18], index: 4, kind: input, shape index: {}]
  %s5 = inlined_call_operand.vmem [shape: f32[128,18], index: 5, kind: output, shape index: {}]
  %s6 = sld [smem:[#allocation0]]
  $region30: #{single_forward.11} parent=0
    _
  %s8 = ssub.s32 1, %s6
  %s9 = scalar_select 0, %s8, %s6
  // Predicated region
  $region2: #{single_forward.11} parent=0 // pred_check
    _
  $region3: #{single_forward.11} parent=0 // pred_check_branch
    %11 = sbr.rel (0) target = $region5
  $region4: #{single_forward.11} parent=0 // pred_region
    _
  $region5: #{single_forward.11} parent=0 // pred_fallthru
    _
  // Predicated region
  $region6: #{single_forward.11} parent=0 // pred_check
    _
  $region7: #{single_forward.11} parent=0 // pred_check_branch
    %13 = sbr.rel (0) target = $region9
  $region8: #{single_forward.11} parent=0 // pred_region
    _
  $region9: #{single_forward.11} parent=0 // pred_fallthru
    _
  // Predicated region
  $region10: #{single_forward.11} parent=0 // pred_check
    _
  $region11: #{single_forward.11} parent=0 // pred_check_branch
    %15 = sbr.rel (0) target = $region13
  $region12: #{single_forward.11} parent=0 // pred_region
    _
  $region13: #{single_forward.11} parent=0 // pred_fallthru
    _
  // Predicated region
  $region14: #{single_forward.11} parent=0 // pred_check
    _
  $region15: #{single_forward.11} parent=0 // pred_check_branch
    %17 = sbr.rel (0) target = $region17
  $region16: #{single_forward.11} parent=0 // pred_region
    _
  $region17: #{single_forward.11} parent=0 // pred_fallthru
    _
  // Predicated region
  $region18: #{single_forward.11} parent=0 // pred_check
    _
  $region19: #{single_forward.11} parent=0 // pred_check_branch
    %19 = sbr.rel (0) target = $region21
  $region20: #{single_forward.11} parent=0 // pred_region
    _
  $region21: #{single_forward.11} parent=0 // pred_fallthru
    _
  %v21 = vld [vmem:[%s0] sm:$0xf]
  %v22 = vld [vmem:[%s0 + $0x4] sm:$0xf]
  %v23 = vld [vmem:[%s0 + $0x8] sm:$0xf]
  %v24 = vld [vmem:[%s0 + $0xc] sm:$0xf]
  %v25 = vld [vmem:[%s0 + $0x10] sm:$0xf]
  %v26 = vld [vmem:[%s0 + $0x14] sm:$0xf]
  %v27 = vld [vmem:[%s0 + $0x18] sm:$0xf]
  %v28 = vld [vmem:[%s0 + $0x1c] sm:$0xf]
  %v29 = vld [vmem:[%s0 + $0x20] sm:$0xf]
  %v30 = vld [vmem:[%s0 + $0x24] sm:$0xf]
  %v31 = vld [vmem:[%s0 + $0x28] sm:$0xf]
  %v32 = vld [vmem:[%s0 + $0x2c] sm:$0xf]
  %v33 = vld [vmem:[%s0 + $0x30] sm:$0xf]
  %v34 = vld [vmem:[%s0 + $0x34] sm:$0xf]
  %v35 = vld [vmem:[%s0 + $0x38] sm:$0xf]
  %v36 = vld [vmem:[%s0 + $0x3c] sm:$0xf]
  %v37 = vld [vmem:[%s1] sm:$0xf]
  %v38 = vld [vmem:[%s1 + $0x4] sm:$0xf]
  %v39 = vld [vmem:[%s1 + $0x8] sm:$0xf]
  %v40 = vld [vmem:[%s1 + $0xc] sm:$0xf]
  %v41 = vld [vmem:[%s2] sm:$0x1]
  %v43 = vlaneseq
  %v44 = vshrl.u32 %v43, 7
  %v45 = vsub.s32 0, %v44
  %v46 = vrot.slane %v41, %v45
  %v64 = vunpack.c.l.b16 %v21
  %v65 = vunpack.c.l.b16 %v22
  %v66 = vunpack.c.l.b16 %v23
  %v67 = vunpack.c.l.b16 %v24
  %v68 = vunpack.c.l.b16 %v25
  %v69 = vunpack.c.l.b16 %v26
  %v70 = vunpack.c.l.b16 %v27
  %v71 = vunpack.c.l.b16 %v28
  %v72 = vunpack.c.l.b16 %v29
  %v73 = vunpack.c.l.b16 %v30
  %v74 = vunpack.c.l.b16 %v31
  %v75 = vunpack.c.l.b16 %v32
  %v76 = vunpack.c.l.b16 %v33
  %v77 = vunpack.c.l.b16 %v34
  %v78 = vunpack.c.l.b16 %v35
  %v79 = vunpack.c.l.b16 %v36
  %v80 = vpack.c.b16 %v65, %v64
  %v81 = vpack.c.b16 %v67, %v66
  %v82 = vpack.c.b16 %v69, %v68
  %v83 = vpack.c.b16 %v71, %v70
  %v84 = vpack.c.b16 %v73, %v72
  %v85 = vpack.c.b16 %v75, %v74
  %v86 = vpack.c.b16 %v77, %v76
  %v87 = vpack.c.b16 %v79, %v78
  %v92 = vunpack.c.l.b16 %v37
  %v93 = vunpack.c.l.b16 %v38
  %v94 = vunpack.c.l.b16 %v39
  %v95 = vunpack.c.l.b16 %v40
  %v96 = vpack.c.b16 %v93, %v92
  %v97 = vpack.c.b16 %v95, %v94
  %vm100 = vcmask 261120
  %v102 = vsel %vm100, %v80, 0
  %v105 = vsel %vm100, %v81, 0
  %v108 = vsel %vm100, %v82, 0
  %v111 = vsel %vm100, %v83, 0
  %v114 = vsel %vm100, %v84, 0
  %v117 = vsel %vm100, %v85, 0
  %v120 = vsel %vm100, %v86, 0
  %v123 = vsel %vm100, %v87, 0
  %125 = vmatprep.subr.bf16.mxu0 0
  %126 = vmatpush1.bf16.msra.mxu0 0
  %127 = vmatprep.subr.bf16.mxu0 0
  %128 = vmatpush1.bf16.msra.mxu0 0
  %129 = vmatprep.subr.bf16.mxu0 0
  %130 = vmatpush1.bf16.msra.mxu0 0
  %131 = vmatprep.subr.bf16.mxu0 0
  %132 = vmatpush1.bf16.msra.mxu0 0
  %133 = vmatprep.subr.bf16.mxu0 0
  %134 = vmatpush1.bf16.msra.mxu0 0
  %135 = vmatprep.subr.bf16.mxu0 0
  %136 = vmatpush1.bf16.msra.mxu0 0
  %137 = vmatprep.subr.bf16.mxu0 0
  %138 = vmatpush1.bf16.msra.mxu0 %v97
  %139 = vmatprep.subr.bf16.mxu0 0
  %140 = vmatpush1.bf16.msra.mxu0 %v96
  %141 = vmatprep.subr.bf16.mxu0 0
  %142 = vmatpush2.bf16.msra.mxu0 0
  %143 = vmatprep.subr.bf16.mxu0 0
  %144 = vmatpush2.bf16.msra.mxu0 0
  %145 = vmatprep.subr.bf16.mxu0 0
  %146 = vmatpush2.bf16.msra.mxu0 0
  %147 = vmatprep.subr.bf16.mxu0 0
  %148 = vmatpush2.bf16.msra.mxu0 0
  %149 = vmatprep.subr.bf16.mxu0 0
  %150 = vmatpush2.bf16.msra.mxu0 0
  %151 = vmatprep.subr.bf16.mxu0 0
  %152 = vmatpush2.bf16.msra.mxu0 0
  %153 = vmatprep.subr.bf16.mxu0 0
  %154 = vmatpush2.bf16.msra.mxu0 0
  %155 = vmatprep.subr.bf16.mxu0 0
  %156 = vmatpush2.bf16.msra.mxu0 0
  %157 = vmatprep.mubr.bf16.mxu0 0
  %158 = vmatmul.mubr.bf16.gmra.mxu0 %v102
  %v159 = vpop.f32.mrf.mxu0
  %v160 = vadd.f32 %v46, %v159
  %v161 = vpop.f32.mrf.mxu0
  %v162 = vpop.f32.mrf.mxu0
  %v163 = vadd.f32 %v46, %v162
  %v164 = vpop.f32.mrf.mxu0
  %165 = vmatprep.mubr.bf16.mxu0 0
  %166 = vmatmul.mubr.bf16.gmra.mxu0 %v105
  %v167 = vpop.f32.mrf.mxu0
  %v168 = vadd.f32 %v46, %v167
  %v169 = vpop.f32.mrf.mxu0
  %v170 = vpop.f32.mrf.mxu0
  %v171 = vadd.f32 %v46, %v170
  %v172 = vpop.f32.mrf.mxu0
  %173 = vmatprep.mubr.bf16.mxu0 0
  %174 = vmatmul.mubr.bf16.gmra.mxu0 %v108
  %v175 = vpop.f32.mrf.mxu0
  %v176 = vadd.f32 %v46, %v175
  %v177 = vpop.f32.mrf.mxu0
  %v178 = vpop.f32.mrf.mxu0
  %v179 = vadd.f32 %v46, %v178
  %v180 = vpop.f32.mrf.mxu0
  %181 = vmatprep.mubr.bf16.mxu0 0
  %182 = vmatmul.mubr.bf16.gmra.mxu0 %v111
  %v183 = vpop.f32.mrf.mxu0
  %v184 = vadd.f32 %v46, %v183
  %v185 = vpop.f32.mrf.mxu0
  %v186 = vpop.f32.mrf.mxu0
  %v187 = vadd.f32 %v46, %v186
  %v188 = vpop.f32.mrf.mxu0
  %189 = vmatprep.mubr.bf16.mxu0 0
  %190 = vmatmul.mubr.bf16.gmra.mxu0 %v114
  %v191 = vpop.f32.mrf.mxu0
  %v192 = vadd.f32 %v46, %v191
  %v193 = vpop.f32.mrf.mxu0
  %v194 = vpop.f32.mrf.mxu0
  %v195 = vadd.f32 %v46, %v194
  %v196 = vpop.f32.mrf.mxu0
  %197 = vmatprep.mubr.bf16.mxu0 0
  %198 = vmatmul.mubr.bf16.gmra.mxu0 %v117
  %v199 = vpop.f32.mrf.mxu0
  %v200 = vadd.f32 %v46, %v199
  %v201 = vpop.f32.mrf.mxu0
  %v202 = vpop.f32.mrf.mxu0
  %v203 = vadd.f32 %v46, %v202
  %v204 = vpop.f32.mrf.mxu0
  %205 = vmatprep.mubr.bf16.mxu0 0
  %206 = vmatmul.mubr.bf16.gmra.mxu0 %v120
  %v207 = vpop.f32.mrf.mxu0
  %v208 = vadd.f32 %v46, %v207
  %v209 = vpop.f32.mrf.mxu0
  %v210 = vpop.f32.mrf.mxu0
  %v211 = vadd.f32 %v46, %v210
  %v212 = vpop.f32.mrf.mxu0
  %213 = vmatprep.mubr.bf16.mxu0 0
  %214 = vmatmul.mubr.bf16.gmra.mxu0 %v123
  %v215 = vpop.f32.mrf.mxu0
  %v216 = vadd.f32 %v46, %v215
  %v217 = vpop.f32.mrf.mxu0
  %v218 = vpop.f32.mrf.mxu0
  %v219 = vadd.f32 %v46, %v218
  %v220 = vpop.f32.mrf.mxu0
  %221 = vdwg.mxu0
  %v222 = vmax.f32 %v160, 0.0
  %v223 = vmax.f32 %v163, 0.0
  %v224 = vmax.f32 %v168, 0.0
  %v225 = vmax.f32 %v171, 0.0
  %v226 = vmax.f32 %v176, 0.0
  %v227 = vmax.f32 %v179, 0.0
  %v228 = vmax.f32 %v184, 0.0
  %v229 = vmax.f32 %v187, 0.0
  %v230 = vmax.f32 %v192, 0.0
  %v231 = vmax.f32 %v195, 0.0
  %v232 = vmax.f32 %v200, 0.0
  %v233 = vmax.f32 %v203, 0.0
  %v234 = vmax.f32 %v208, 0.0
  %v235 = vmax.f32 %v211, 0.0
  %v236 = vmax.f32 %v216, 0.0
  %v237 = vmax.f32 %v219, 0.0
  %v238 = vpack.c.bf16 %v223, %v222
  %v239 = vpack.c.bf16 %v225, %v224
  %v240 = vpack.c.bf16 %v227, %v226
  %v241 = vpack.c.bf16 %v229, %v228
  %v242 = vpack.c.bf16 %v231, %v230
  %v243 = vpack.c.bf16 %v233, %v232
  %v244 = vpack.c.bf16 %v235, %v234
  %v245 = vpack.c.bf16 %v237, %v236
  %v246 = vld [vmem:[%s3] sm:$0xf]
  %v247 = vld [vmem:[%s3 + $0x4] sm:$0xf]
  %v248 = vld [vmem:[%s3 + $0x8] sm:$0xf]
  %v249 = vld [vmem:[%s3 + $0xc] sm:$0xf]
  %v250 = vld [vmem:[%s4] sm:$0x1]
  %v252 = vlaneseq
  %v253 = vshrl.u32 %v252, 7
  %v254 = vsub.s32 0, %v253
  %v255 = vrot.slane %v250, %v254
  %v261 = vunpack.c.l.b16 %v246
  %v262 = vunpack.c.l.b16 %v247
  %v263 = vunpack.c.l.b16 %v248
  %v264 = vunpack.c.l.b16 %v249
  %v265 = vpack.c.b16 %v262, %v261
  %v266 = vpack.c.b16 %v264, %v263
  %v270 = vsel %vm100, %v238, 0
  %v273 = vsel %vm100, %v239, 0
  %v276 = vsel %vm100, %v240, 0
  %v279 = vsel %vm100, %v241, 0
  %v282 = vsel %vm100, %v242, 0
  %v285 = vsel %vm100, %v243, 0
  %v288 = vsel %vm100, %v244, 0
  %v291 = vsel %vm100, %v245, 0
  %293 = vmatprep.subr.bf16.mxu0 0
  %294 = vmatpush1.bf16.msra.mxu0 0
  %295 = vmatprep.subr.bf16.mxu0 0
  %296 = vmatpush1.bf16.msra.mxu0 0
  %297 = vmatprep.subr.bf16.mxu0 0
  %298 = vmatpush1.bf16.msra.mxu0 0
  %299 = vmatprep.subr.bf16.mxu0 0
  %300 = vmatpush1.bf16.msra.mxu0 0
  %301 = vmatprep.subr.bf16.mxu0 0
  %302 = vmatpush1.bf16.msra.mxu0 0
  %303 = vmatprep.subr.bf16.mxu0 0
  %304 = vmatpush1.bf16.msra.mxu0 0
  %305 = vmatprep.subr.bf16.mxu0 0
  %306 = vmatpush1.bf16.msra.mxu0 %v266
  %307 = vmatprep.subr.bf16.mxu0 0
  %308 = vmatpush1.bf16.msra.mxu0 %v265
  %309 = vmatprep.subr.bf16.mxu0 0
  %310 = vmatpush2.bf16.msra.mxu0 0
  %311 = vmatprep.subr.bf16.mxu0 0
  %312 = vmatpush2.bf16.msra.mxu0 0
  %313 = vmatprep.subr.bf16.mxu0 0
  %314 = vmatpush2.bf16.msra.mxu0 0
  %315 = vmatprep.subr.bf16.mxu0 0
  %316 = vmatpush2.bf16.msra.mxu0 0
  %317 = vmatprep.subr.bf16.mxu0 0
  %318 = vmatpush2.bf16.msra.mxu0 0
  %319 = vmatprep.subr.bf16.mxu0 0
  %320 = vmatpush2.bf16.msra.mxu0 0
  %321 = vmatprep.subr.bf16.mxu0 0
  %322 = vmatpush2.bf16.msra.mxu0 0
  %323 = vmatprep.subr.bf16.mxu0 0
  %324 = vmatpush2.bf16.msra.mxu0 0
  %325 = vmatprep.mubr.bf16.mxu0 0
  %326 = vmatmul.mubr.bf16.gmra.mxu0 %v270
  %v327 = vpop.f32.mrf.mxu0
  %v328 = vadd.f32 %v255, %v327
  %v329 = vpop.f32.mrf.mxu0
  %v330 = vpop.f32.mrf.mxu0
  %v331 = vadd.f32 %v255, %v330
  %v332 = vpop.f32.mrf.mxu0
  %333 = vmatprep.mubr.bf16.mxu0 0
  %334 = vmatmul.mubr.bf16.gmra.mxu0 %v273
  %v335 = vpop.f32.mrf.mxu0
  %v336 = vadd.f32 %v255, %v335
  %v337 = vpop.f32.mrf.mxu0
  %v338 = vpop.f32.mrf.mxu0
  %v339 = vadd.f32 %v255, %v338
  %v340 = vpop.f32.mrf.mxu0
  %341 = vmatprep.mubr.bf16.mxu0 0
  %342 = vmatmul.mubr.bf16.gmra.mxu0 %v276
  %v343 = vpop.f32.mrf.mxu0
  %v344 = vadd.f32 %v255, %v343
  %v345 = vpop.f32.mrf.mxu0
  %v346 = vpop.f32.mrf.mxu0
  %v347 = vadd.f32 %v255, %v346
  %v348 = vpop.f32.mrf.mxu0
  %349 = vmatprep.mubr.bf16.mxu0 0
  %350 = vmatmul.mubr.bf16.gmra.mxu0 %v279
  %v351 = vpop.f32.mrf.mxu0
  %v352 = vadd.f32 %v255, %v351
  %v353 = vpop.f32.mrf.mxu0
  %v354 = vpop.f32.mrf.mxu0
  %v355 = vadd.f32 %v255, %v354
  %v356 = vpop.f32.mrf.mxu0
  %357 = vmatprep.mubr.bf16.mxu0 0
  %358 = vmatmul.mubr.bf16.gmra.mxu0 %v282
  %v359 = vpop.f32.mrf.mxu0
  %v360 = vadd.f32 %v255, %v359
  %v361 = vpop.f32.mrf.mxu0
  %v362 = vpop.f32.mrf.mxu0
  %v363 = vadd.f32 %v255, %v362
  %v364 = vpop.f32.mrf.mxu0
  %365 = vmatprep.mubr.bf16.mxu0 0
  %366 = vmatmul.mubr.bf16.gmra.mxu0 %v285
  %v367 = vpop.f32.mrf.mxu0
  %v368 = vadd.f32 %v255, %v367
  %v369 = vpop.f32.mrf.mxu0
  %v370 = vpop.f32.mrf.mxu0
  %v371 = vadd.f32 %v255, %v370
  %v372 = vpop.f32.mrf.mxu0
  %373 = vmatprep.mubr.bf16.mxu0 0
  %374 = vmatmul.mubr.bf16.gmra.mxu0 %v288
  %v375 = vpop.f32.mrf.mxu0
  %v376 = vadd.f32 %v255, %v375
  %v377 = vpop.f32.mrf.mxu0
  %v378 = vpop.f32.mrf.mxu0
  %v379 = vadd.f32 %v255, %v378
  %v380 = vpop.f32.mrf.mxu0
  %381 = vmatprep.mubr.bf16.mxu0 0
  %382 = vmatmul.mubr.bf16.gmra.mxu0 %v291
  %v383 = vpop.f32.mrf.mxu0
  %v384 = vadd.f32 %v255, %v383
  %v385 = vpop.f32.mrf.mxu0
  %v386 = vpop.f32.mrf.mxu0
  %v387 = vadd.f32 %v255, %v386
  %v388 = vpop.f32.mrf.mxu0
  %389 = vdwg.mxu0
  %vm390 = vcmask 146432
  %391 = vst.msk [vmem:[%s5] sm:$0xff] %vm390, %v328
  %392 = vst.msk [vmem:[%s5 + $0x8] sm:$0xff] %vm390, %v331
  %393 = vst.msk [vmem:[%s5 + $0x10] sm:$0xff] %vm390, %v336
  %394 = vst.msk [vmem:[%s5 + $0x18] sm:$0xff] %vm390, %v339
  %395 = vst.msk [vmem:[%s5 + $0x20] sm:$0xff] %vm390, %v344
  %396 = vst.msk [vmem:[%s5 + $0x28] sm:$0xff] %vm390, %v347
  %397 = vst.msk [vmem:[%s5 + $0x30] sm:$0xff] %vm390, %v352
  %398 = vst.msk [vmem:[%s5 + $0x38] sm:$0xff] %vm390, %v355
  %399 = vst.msk [vmem:[%s5 + $0x40] sm:$0xff] %vm390, %v360
  %400 = vst.msk [vmem:[%s5 + $0x48] sm:$0xff] %vm390, %v363
  %401 = vst.msk [vmem:[%s5 + $0x50] sm:$0xff] %vm390, %v368
  %402 = vst.msk [vmem:[%s5 + $0x58] sm:$0xff] %vm390, %v371
  %403 = vst.msk [vmem:[%s5 + $0x60] sm:$0xff] %vm390, %v376
  %404 = vst.msk [vmem:[%s5 + $0x68] sm:$0xff] %vm390, %v379
  %405 = vst.msk [vmem:[%s5 + $0x70] sm:$0xff] %vm390, %v384
  %406 = vst.msk [vmem:[%s5 + $0x78] sm:$0xff] %vm390, %v387
  // Predicated region
  $region22: #{single_forward.11} parent=0 // pred_check
    _
  $region23: #{single_forward.11} parent=0 // pred_check_branch
    %408 = sbr.rel (0) target = $region25
  $region24: #{single_forward.11} parent=0 // pred_region
    _
  $region25: #{single_forward.11} parent=0 // pred_fallthru
    _
  // Predicated region
  $region26: #{single_forward.11} parent=0 // pred_check
    _
  $region27: #{single_forward.11} parent=0 // pred_check_branch
    %410 = sbr.rel (0) target = $region29
  $region28: #{single_forward.11} parent=0 // pred_region
    _
  $region29: #{single_forward.11} parent=0 // pred_fallthru
    _

// kernel: single_forward.12
$region0: #{single_forward.12}
  #allocation0 [shape = 'u32[]', space=smem, size = 0x4, offset = 0x4, fixed_abs, tag = 'smem constant byte address 0x4 - core index']
  #allocation1 [shape = 'u32[144,128]{1,0:T(1,128)}', space=vmem, size = 0x12000, scoped, tag = 'internal scratch']
  %s0 = inlined_call_operand.vmem [shape: bf16[128,288], index: 0, kind: input, shape index: {}]
  %s1 = inlined_call_operand.vmem [shape: bf16[288,32], index: 1, kind: input, shape index: {}]
  %s2 = inlined_call_operand.vmem [shape: bf16[32,4], index: 2, kind: input, shape index: {}]
  %s3 = inlined_call_operand.vmem [shape: f32[1,4], index: 3, kind: input, shape index: {}]
  %s4 = inlined_call_operand.vmem [shape: f32[128,4], index: 4, kind: output, shape index: {}]
  %s5 = sld [smem:[#allocation0]]
  $region26: #{single_forward.12} parent=0
    _
  %s7 = ssub.s32 1, %s5
  %s8 = scalar_select 0, %s7, %s5
  // Predicated region
  $region2: #{single_forward.12} parent=0 // pred_check
    _
  $region3: #{single_forward.12} parent=0 // pred_check_branch
    %10 = sbr.rel (0) target = $region5
  $region4: #{single_forward.12} parent=0 // pred_region
    _
  $region5: #{single_forward.12} parent=0 // pred_fallthru
    _
  // Predicated region
  $region6: #{single_forward.12} parent=0 // pred_check
    _
  $region7: #{single_forward.12} parent=0 // pred_check_branch
    %12 = sbr.rel (0) target = $region9
  $region8: #{single_forward.12} parent=0 // pred_region
    _
  $region9: #{single_forward.12} parent=0 // pred_fallthru
    _
  // Predicated region
  $region10: #{single_forward.12} parent=0 // pred_check
    _
  $region11: #{single_forward.12} parent=0 // pred_check_branch
    %14 = sbr.rel (0) target = $region13
  $region12: #{single_forward.12} parent=0 // pred_region
    _
  $region13: #{single_forward.12} parent=0 // pred_fallthru
    _
  // Predicated region
  $region14: #{single_forward.12} parent=0 // pred_check
    _
  $region15: #{single_forward.12} parent=0 // pred_check_branch
    %16 = sbr.rel (0) target = $region17
  $region16: #{single_forward.12} parent=0 // pred_region
    _
  $region17: #{single_forward.12} parent=0 // pred_fallthru
    _
  %v18 = vld [vmem:[%s0] sm:$0xff]
  %v19 = vld [vmem:[%s0 + $0x8] sm:$0xf]
  %v20 = vld [vmem:[%s0 + $0xc] sm:$0xff]
  %v21 = vld [vmem:[%s0 + $0x14] sm:$0xf]
  %v22 = vld [vmem:[%s0 + $0x18] sm:$0xff]
  %v23 = vld [vmem:[%s0 + $0x20] sm:$0xf]
  %v24 = vld [vmem:[%s0 + $0x24] sm:$0xff]
  %v25 = vld [vmem:[%s0 + $0x2c] sm:$0xf]
  %v26 = vld [vmem:[%s0 + $0x30] sm:$0xff]
  %v27 = vld [vmem:[%s0 + $0x38] sm:$0xf]
  %v28 = vld [vmem:[%s0 + $0x3c] sm:$0xff]
  %v29 = vld [vmem:[%s0 + $0x44] sm:$0xf]
  %v30 = vld [vmem:[%s0 + $0x48] sm:$0xff]
  %v31 = vld [vmem:[%s0 + $0x50] sm:$0xf]
  %v32 = vld [vmem:[%s0 + $0x54] sm:$0xff]
  %v33 = vld [vmem:[%s0 + $0x5c] sm:$0xf]
  %v34 = vld [vmem:[%s0 + $0x60] sm:$0xff]
  %v35 = vld [vmem:[%s0 + $0x68] sm:$0xf]
  %v36 = vld [vmem:[%s0 + $0x6c] sm:$0xff]
  %v37 = vld [vmem:[%s0 + $0x74] sm:$0xf]
  %v38 = vld [vmem:[%s0 + $0x78] sm:$0xff]
  %v39 = vld [vmem:[%s0 + $0x80] sm:$0xf]
  %v40 = vld [vmem:[%s0 + $0x84] sm:$0xff]
  %v41 = vld [vmem:[%s0 + $0x8c] sm:$0xf]
  %v42 = vld [vmem:[%s0 + $0x90] sm:$0xff]
  %v43 = vld [vmem:[%s0 + $0x98] sm:$0xf]
  %v44 = vld [vmem:[%s0 + $0x9c] sm:$0xff]
  %v45 = vld [vmem:[%s0 + $0xa4] sm:$0xf]
  %v46 = vld [vmem:[%s0 + $0xa8] sm:$0xff]
  %v47 = vld [vmem:[%s0 + $0xb0] sm:$0xf]
  %v48 = vld [vmem:[%s0 + $0xb4] sm:$0xff]
  %v49 = vld [vmem:[%s0 + $0xbc] sm:$0xf]
  %v50 = vld [vmem:[%s1] sm:$0xf]
  %v51 = vld [vmem:[%s1 + $0x4] sm:$0xf]
  %v52 = vld [vmem:[%s1 + $0x8] sm:$0xf]
  %v53 = vld [vmem:[%s1 + $0xc] sm:$0xf]
  %v54 = vld [vmem:[%s1 + $0x10] sm:$0xf]
  %v55 = vld [vmem:[%s1 + $0x14] sm:$0xf]
  %v56 = vld [vmem:[%s1 + $0x18] sm:$0xf]
  %v57 = vld [vmem:[%s1 + $0x1c] sm:$0xf]
  %v58 = vld [vmem:[%s1 + $0x20] sm:$0xf]
  %v59 = vld [vmem:[%s1 + $0x24] sm:$0xf]
  %v60 = vld [vmem:[%s1 + $0x28] sm:$0xf]
  %v61 = vld [vmem:[%s1 + $0x2c] sm:$0xf]
  %v62 = vld [vmem:[%s1 + $0x30] sm:$0xf]
  %v63 = vld [vmem:[%s1 + $0x34] sm:$0xf]
  %v64 = vld [vmem:[%s1 + $0x38] sm:$0xf]
  %v65 = vld [vmem:[%s1 + $0x3c] sm:$0xf]
  %v66 = vld [vmem:[%s1 + $0x40] sm:$0xf]
  %v67 = vld [vmem:[%s1 + $0x44] sm:$0xf]
  %v68 = vld [vmem:[%s1 + $0x48] sm:$0xf]
  %v69 = vld [vmem:[%s1 + $0x4c] sm:$0xf]
  %v70 = vld [vmem:[%s1 + $0x50] sm:$0xf]
  %v71 = vld [vmem:[%s1 + $0x54] sm:$0xf]
  %v72 = vld [vmem:[%s1 + $0x58] sm:$0xf]
  %v73 = vld [vmem:[%s1 + $0x5c] sm:$0xf]
  %v74 = vld [vmem:[%s1 + $0x60] sm:$0xf]
  %v75 = vld [vmem:[%s1 + $0x64] sm:$0xf]
  %v76 = vld [vmem:[%s1 + $0x68] sm:$0xf]
  %v77 = vld [vmem:[%s1 + $0x6c] sm:$0xf]
  %v78 = vld [vmem:[%s1 + $0x70] sm:$0xf]
  %v79 = vld [vmem:[%s1 + $0x74] sm:$0xf]
  %v80 = vld [vmem:[%s1 + $0x78] sm:$0xf]
  %v81 = vld [vmem:[%s1 + $0x7c] sm:$0xf]
  %v82 = vld [vmem:[%s1 + $0x80] sm:$0xf]
  %v83 = vld [vmem:[%s1 + $0x84] sm:$0xf]
  %v84 = vld [vmem:[%s1 + $0x88] sm:$0xf]
  %v85 = vld [vmem:[%s1 + $0x8c] sm:$0xf]
  %v118 = vunpack.c.l.b16 %v18
  %v119 = vunpack.c.h.b16 %v18
  %v120 = vunpack.c.l.b16 %v19
  %v121 = vunpack.c.l.b16 %v20
  %v122 = vunpack.c.h.b16 %v20
  %v123 = vunpack.c.l.b16 %v21
  %v124 = vunpack.c.l.b16 %v22
  %v125 = vunpack.c.h.b16 %v22
  %v126 = vunpack.c.l.b16 %v23
  %v127 = vunpack.c.l.b16 %v24
  %v128 = vunpack.c.h.b16 %v24
  %v129 = vunpack.c.l.b16 %v25
  %v130 = vunpack.c.l.b16 %v26
  %v131 = vunpack.c.h.b16 %v26
  %v132 = vunpack.c.l.b16 %v27
  %v133 = vunpack.c.l.b16 %v28
  %v134 = vunpack.c.h.b16 %v28
  %v135 = vunpack.c.l.b16 %v29
  %v136 = vunpack.c.l.b16 %v30
  %v137 = vunpack.c.h.b16 %v30
  %v138 = vunpack.c.l.b16 %v31
  %v139 = vunpack.c.l.b16 %v32
  %v140 = vunpack.c.h.b16 %v32
  %v141 = vunpack.c.l.b16 %v33
  %v142 = vunpack.c.l.b16 %v34
  %v143 = vunpack.c.h.b16 %v34
  %v144 = vunpack.c.l.b16 %v35
  %v145 = vunpack.c.l.b16 %v36
  %v146 = vunpack.c.h.b16 %v36
  %v147 = vunpack.c.l.b16 %v37
  %v148 = vunpack.c.l.b16 %v38
  %v149 = vunpack.c.h.b16 %v38
  %v150 = vunpack.c.l.b16 %v39
  %v151 = vunpack.c.l.b16 %v40
  %v152 = vunpack.c.h.b16 %v40
  %v153 = vunpack.c.l.b16 %v41
  %v154 = vunpack.c.l.b16 %v42
  %v155 = vunpack.c.h.b16 %v42
  %v156 = vunpack.c.l.b16 %v43
  %v157 = vunpack.c.l.b16 %v44
  %v158 = vunpack.c.h.b16 %v44
  %v159 = vunpack.c.l.b16 %v45
  %v160 = vunpack.c.l.b16 %v46
  %v161 = vunpack.c.h.b16 %v46
  %v162 = vunpack.c.l.b16 %v47
  %v163 = vunpack.c.l.b16 %v48
  %v164 = vunpack.c.h.b16 %v48
  %v165 = vunpack.c.l.b16 %v49
  %v166 = vpack.c.b16 %v121, %v118
  %v167 = vpack.c.b16 %v122, %v119
  %v168 = vpack.c.b16 %v123, %v120
  %v169 = vpack.c.b16 %v127, %v124
  %v170 = vpack.c.b16 %v128, %v125
  %v171 = vpack.c.b16 %v129, %v126
  %v172 = vpack.c.b16 %v133, %v130
  %v173 = vpack.c.b16 %v134, %v131
  %v174 = vpack.c.b16 %v135, %v132
  %v175 = vpack.c.b16 %v139, %v136
  %v176 = vpack.c.b16 %v140, %v137
  %v177 = vpack.c.b16 %v141, %v138
  %v178 = vpack.c.b16 %v145, %v142
  %v179 = vpack.c.b16 %v146, %v143
  %v180 = vpack.c.b16 %v147, %v144
  %v181 = vpack.c.b16 %v151, %v148
  %v182 = vpack.c.b16 %v152, %v149
  %v183 = vpack.c.b16 %v153, %v150
  %v184 = vpack.c.b16 %v157, %v154
  %v185 = vpack.c.b16 %v158, %v155
  %v186 = vpack.c.b16 %v159, %v156
  %v187 = vpack.c.b16 %v163, %v160
  %v188 = vpack.c.b16 %v164, %v161
  %v189 = vpack.c.b16 %v165, %v162
  %v242 = vunpack.c.l.b16 %v50
  %v243 = vunpack.c.l.b16 %v51
  %v244 = vunpack.c.l.b16 %v52
  %v245 = vunpack.c.l.b16 %v53
  %v246 = vunpack.c.l.b16 %v54
  %v247 = vunpack.c.l.b16 %v55
  %v248 = vunpack.c.l.b16 %v56
  %v249 = vunpack.c.l.b16 %v57
  %v250 = vunpack.c.l.b16 %v58
  %v251 = vunpack.c.l.b16 %v59
  %v252 = vunpack.c.l.b16 %v60
  %v253 = vunpack.c.l.b16 %v61
  %v254 = vunpack.c.l.b16 %v62
  %v255 = vunpack.c.l.b16 %v63
  %v256 = vunpack.c.l.b16 %v64
  %v257 = vunpack.c.l.b16 %v65
  %v258 = vunpack.c.l.b16 %v66
  %v259 = vunpack.c.l.b16 %v67
  %v260 = vunpack.c.l.b16 %v68
  %v261 = vunpack.c.l.b16 %v69
  %v262 = vunpack.c.l.b16 %v70
  %v263 = vunpack.c.l.b16 %v71
  %v264 = vunpack.c.l.b16 %v72
  %v265 = vunpack.c.l.b16 %v73
  %v266 = vunpack.c.l.b16 %v74
  %v267 = vunpack.c.l.b16 %v75
  %v268 = vunpack.c.l.b16 %v76
  %v269 = vunpack.c.l.b16 %v77
  %v270 = vunpack.c.l.b16 %v78
  %v271 = vunpack.c.l.b16 %v79
  %v272 = vunpack.c.l.b16 %v80
  %v273 = vunpack.c.l.b16 %v81
  %v274 = vunpack.c.l.b16 %v82
  %v275 = vunpack.c.l.b16 %v83
  %v276 = vunpack.c.l.b16 %v84
  %v277 = vunpack.c.l.b16 %v85
  %v278 = vpack.c.b16 %v243, %v242
  %v279 = vpack.c.b16 %v245, %v244
  %v280 = vpack.c.b16 %v247, %v246
  %v281 = vpack.c.b16 %v249, %v248
  %v282 = vpack.c.b16 %v251, %v250
  %v283 = vpack.c.b16 %v253, %v252
  %v284 = vpack.c.b16 %v255, %v254
  %v285 = vpack.c.b16 %v257, %v256
  %v286 = vpack.c.b16 %v259, %v258
  %v287 = vpack.c.b16 %v261, %v260
  %v288 = vpack.c.b16 %v263, %v262
  %v289 = vpack.c.b16 %v265, %v264
  %v290 = vpack.c.b16 %v267, %v266
  %v291 = vpack.c.b16 %v269, %v268
  %v292 = vpack.c.b16 %v271, %v270
  %v293 = vpack.c.b16 %v273, %v272
  %v294 = vpack.c.b16 %v275, %v274
  %v295 = vpack.c.b16 %v277, %v276
  %vm314 = vcmask 261120
  %v316 = vsel %vm314, %v168, 0
  %v319 = vsel %vm314, %v171, 0
  %v322 = vsel %vm314, %v174, 0
  %v325 = vsel %vm314, %v177, 0
  %v328 = vsel %vm314, %v180, 0
  %v331 = vsel %vm314, %v183, 0
  %v334 = vsel %vm314, %v186, 0
  %v337 = vsel %vm314, %v189, 0
  %339 = vmatprep.subr.bf16.mxu0 0
  %340 = vmatpush1.bf16.msra.mxu0 %v285
  %341 = vmatprep.subr.bf16.mxu0 0
  %342 = vmatpush1.bf16.msra.mxu0 %v284
  %343 = vmatprep.subr.bf16.mxu0 0
  %344 = vmatpush1.bf16.msra.mxu0 %v283
  %345 = vmatprep.subr.bf16.mxu0 0
  %346 = vmatpush1.bf16.msra.mxu0 %v282
  %347 = vmatprep.subr.bf16.mxu0 0
  %348 = vmatpush1.bf16.msra.mxu0 %v281
  %349 = vmatprep.subr.bf16.mxu0 0
  %350 = vmatpush1.bf16.msra.mxu0 %v280
  %351 = vmatprep.subr.bf16.mxu0 0
  %352 = vmatpush1.bf16.msra.mxu0 %v279
  %353 = vmatprep.subr.bf16.mxu0 0
  %354 = vmatpush1.bf16.msra.mxu0 %v278
  %355 = vmatprep.subr.bf16.mxu0 0
  %356 = vmatpush2.bf16.msra.mxu0 %v293
  %357 = vmatprep.subr.bf16.mxu0 0
  %358 = vmatpush2.bf16.msra.mxu0 %v292
  %359 = vmatprep.subr.bf16.mxu0 0
  %360 = vmatpush2.bf16.msra.mxu0 %v291
  %361 = vmatprep.subr.bf16.mxu0 0
  %362 = vmatpush2.bf16.msra.mxu0 %v290
  %363 = vmatprep.subr.bf16.mxu0 0
  %364 = vmatpush2.bf16.msra.mxu0 %v289
  %365 = vmatprep.subr.bf16.mxu0 0
  %366 = vmatpush2.bf16.msra.mxu0 %v288
  %367 = vmatprep.subr.bf16.mxu0 0
  %368 = vmatpush2.bf16.msra.mxu0 %v287
  %369 = vmatprep.subr.bf16.mxu0 0
  %370 = vmatpush2.bf16.msra.mxu0 %v286
  %371 = vmatprep.mubr.bf16.mxu0 %v167
  %372 = vmatmul.mubr.bf16.gmra.mxu0 %v166
  %v373 = vpop.f32.mrf.mxu0
  %v374 = vadd.f32 0.0, %v373
  %v375 = vpop.f32.mrf.mxu0
  %v376 = vpop.f32.mrf.mxu0
  %v377 = vadd.f32 0.0, %v376
  %v378 = vpop.f32.mrf.mxu0
  %379 = vmatprep.mubr.bf16.mxu0 %v170
  %380 = vmatmul.mubr.bf16.gmra.mxu0 %v169
  %v381 = vpop.f32.mrf.mxu0
  %v382 = vadd.f32 0.0, %v381
  %v383 = vpop.f32.mrf.mxu0
  %v384 = vpop.f32.mrf.mxu0
  %v385 = vadd.f32 0.0, %v384
  %v386 = vpop.f32.mrf.mxu0
  %387 = vmatprep.mubr.bf16.mxu0 %v173
  %388 = vmatmul.mubr.bf16.gmra.mxu0 %v172
  %v389 = vpop.f32.mrf.mxu0
  %v390 = vadd.f32 0.0, %v389
  %v391 = vpop.f32.mrf.mxu0
  %v392 = vpop.f32.mrf.mxu0
  %v393 = vadd.f32 0.0, %v392
  %v394 = vpop.f32.mrf.mxu0
  %395 = vmatprep.mubr.bf16.mxu0 %v176
  %396 = vmatmul.mubr.bf16.gmra.mxu0 %v175
  %v397 = vpop.f32.mrf.mxu0
  %v398 = vadd.f32 0.0, %v397
  %v399 = vpop.f32.mrf.mxu0
  %v400 = vpop.f32.mrf.mxu0
  %v401 = vadd.f32 0.0, %v400
  %v402 = vpop.f32.mrf.mxu0
  %403 = vmatprep.mubr.bf16.mxu0 %v179
  %404 = vmatmul.mubr.bf16.gmra.mxu0 %v178
  %v405 = vpop.f32.mrf.mxu0
  %v406 = vadd.f32 0.0, %v405
  %v407 = vpop.f32.mrf.mxu0
  %v408 = vpop.f32.mrf.mxu0
  %v409 = vadd.f32 0.0, %v408
  %v410 = vpop.f32.mrf.mxu0
  %411 = vmatprep.mubr.bf16.mxu0 %v182
  %412 = vmatmul.mubr.bf16.gmra.mxu0 %v181
  %v413 = vpop.f32.mrf.mxu0
  %v414 = vadd.f32 0.0, %v413
  %v415 = vpop.f32.mrf.mxu0
  %v416 = vpop.f32.mrf.mxu0
  %v417 = vadd.f32 0.0, %v416
  %v418 = vpop.f32.mrf.mxu0
  %419 = vmatprep.mubr.bf16.mxu0 %v185
  %420 = vmatmul.mubr.bf16.gmra.mxu0 %v184
  %v421 = vpop.f32.mrf.mxu0
  %v422 = vadd.f32 0.0, %v421
  %v423 = vpop.f32.mrf.mxu0
  %v424 = vpop.f32.mrf.mxu0
  %v425 = vadd.f32 0.0, %v424
  %v426 = vpop.f32.mrf.mxu0
  %427 = vmatprep.mubr.bf16.mxu0 %v188
  %428 = vmatmul.mubr.bf16.gmra.mxu0 %v187
  %v429 = vpop.f32.mrf.mxu0
  %v430 = vadd.f32 0.0, %v429
  %v431 = vpop.f32.mrf.mxu0
  %v432 = vpop.f32.mrf.mxu0
  %v433 = vadd.f32 0.0, %v432
  %v434 = vpop.f32.mrf.mxu0
  %435 = vdwg.mxu0
  %436 = vmatprep.subr.bf16.mxu0 0
  %437 = vmatpush1.bf16.msra.mxu0 0
  %438 = vmatprep.subr.bf16.mxu0 0
  %439 = vmatpush1.bf16.msra.mxu0 0
  %440 = vmatprep.subr.bf16.mxu0 0
  %441 = vmatpush1.bf16.msra.mxu0 0
  %442 = vmatprep.subr.bf16.mxu0 0
  %443 = vmatpush1.bf16.msra.mxu0 0
  %444 = vmatprep.subr.bf16.mxu0 0
  %445 = vmatpush1.bf16.msra.mxu0 0
  %446 = vmatprep.subr.bf16.mxu0 0
  %447 = vmatpush1.bf16.msra.mxu0 0
  %448 = vmatprep.subr.bf16.mxu0 0
  %449 = vmatpush1.bf16.msra.mxu0 %v295
  %450 = vmatprep.subr.bf16.mxu0 0
  %451 = vmatpush1.bf16.msra.mxu0 %v294
  %452 = vmatprep.subr.bf16.mxu0 0
  %453 = vmatpush2.bf16.msra.mxu0 0
  %454 = vmatprep.subr.bf16.mxu0 0
  %455 = vmatpush2.bf16.msra.mxu0 0
  %456 = vmatprep.subr.bf16.mxu0 0
  %457 = vmatpush2.bf16.msra.mxu0 0
  %458 = vmatprep.subr.bf16.mxu0 0
  %459 = vmatpush2.bf16.msra.mxu0 0
  %460 = vmatprep.subr.bf16.mxu0 0
  %461 = vmatpush2.bf16.msra.mxu0 0
  %462 = vmatprep.subr.bf16.mxu0 0
  %463 = vmatpush2.bf16.msra.mxu0 0
  %464 = vmatprep.subr.bf16.mxu0 0
  %465 = vmatpush2.bf16.msra.mxu0 0
  %466 = vmatprep.subr.bf16.mxu0 0
  %467 = vmatpush2.bf16.msra.mxu0 0
  %468 = vmatprep.mubr.bf16.mxu0 0
  %469 = vmatmul.mubr.bf16.gmra.mxu0 %v316
  %v470 = vpop.f32.mrf.mxu0
  %v471 = vadd.f32 %v374, %v470
  %v472 = vpop.f32.mrf.mxu0
  %v473 = vpop.f32.mrf.mxu0
  %v474 = vadd.f32 %v377, %v473
  %v475 = vpop.f32.mrf.mxu0
  %476 = vmatprep.mubr.bf16.mxu0 0
  %477 = vmatmul.mubr.bf16.gmra.mxu0 %v319
  %v478 = vpop.f32.mrf.mxu0
  %v479 = vadd.f32 %v382, %v478
  %v480 = vpop.f32.mrf.mxu0
  %v481 = vpop.f32.mrf.mxu0
  %v482 = vadd.f32 %v385, %v481
  %v483 = vpop.f32.mrf.mxu0
  %484 = vmatprep.mubr.bf16.mxu0 0
  %485 = vmatmul.mubr.bf16.gmra.mxu0 %v322
  %v486 = vpop.f32.mrf.mxu0
  %v487 = vadd.f32 %v390, %v486
  %v488 = vpop.f32.mrf.mxu0
  %v489 = vpop.f32.mrf.mxu0
  %v490 = vadd.f32 %v393, %v489
  %v491 = vpop.f32.mrf.mxu0
  %492 = vmatprep.mubr.bf16.mxu0 0
  %493 = vmatmul.mubr.bf16.gmra.mxu0 %v325
  %v494 = vpop.f32.mrf.mxu0
  %v495 = vadd.f32 %v398, %v494
  %v496 = vpop.f32.mrf.mxu0
  %v497 = vpop.f32.mrf.mxu0
  %v498 = vadd.f32 %v401, %v497
  %v499 = vpop.f32.mrf.mxu0
  %500 = vmatprep.mubr.bf16.mxu0 0
  %501 = vmatmul.mubr.bf16.gmra.mxu0 %v328
  %v502 = vpop.f32.mrf.mxu0
  %v503 = vadd.f32 %v406, %v502
  %v504 = vpop.f32.mrf.mxu0
  %v505 = vpop.f32.mrf.mxu0
  %v506 = vadd.f32 %v409, %v505
  %v507 = vpop.f32.mrf.mxu0
  %508 = vmatprep.mubr.bf16.mxu0 0
  %509 = vmatmul.mubr.bf16.gmra.mxu0 %v331
  %v510 = vpop.f32.mrf.mxu0
  %v511 = vadd.f32 %v414, %v510
  %v512 = vpop.f32.mrf.mxu0
  %v513 = vpop.f32.mrf.mxu0
  %v514 = vadd.f32 %v417, %v513
  %v515 = vpop.f32.mrf.mxu0
  %516 = vmatprep.mubr.bf16.mxu0 0
  %517 = vmatmul.mubr.bf16.gmra.mxu0 %v334
  %v518 = vpop.f32.mrf.mxu0
  %v519 = vadd.f32 %v422, %v518
  %v520 = vpop.f32.mrf.mxu0
  %v521 = vpop.f32.mrf.mxu0
  %v522 = vadd.f32 %v425, %v521
  %v523 = vpop.f32.mrf.mxu0
  %524 = vmatprep.mubr.bf16.mxu0 0
  %525 = vmatmul.mubr.bf16.gmra.mxu0 %v337
  %v526 = vpop.f32.mrf.mxu0
  %v527 = vadd.f32 %v430, %v526
  %v528 = vpop.f32.mrf.mxu0
  %v529 = vpop.f32.mrf.mxu0
  %v530 = vadd.f32 %v433, %v529
  %v531 = vpop.f32.mrf.mxu0
  %532 = vdwg.mxu0
  %v533 = vmax.f32 %v471, 0.0
  %v534 = vmax.f32 %v474, 0.0
  %v535 = vmax.f32 %v479, 0.0
  %v536 = vmax.f32 %v482, 0.0
  %v537 = vmax.f32 %v487, 0.0
  %v538 = vmax.f32 %v490, 0.0
  %v539 = vmax.f32 %v495, 0.0
  %v540 = vmax.f32 %v498, 0.0
  %v541 = vmax.f32 %v503, 0.0
  %v542 = vmax.f32 %v506, 0.0
  %v543 = vmax.f32 %v511, 0.0
  %v544 = vmax.f32 %v514, 0.0
  %v545 = vmax.f32 %v519, 0.0
  %v546 = vmax.f32 %v522, 0.0
  %v547 = vmax.f32 %v527, 0.0
  %v548 = vmax.f32 %v530, 0.0
  %v549 = vpack.c.bf16 %v534, %v533
  %v550 = vpack.c.bf16 %v536, %v535
  %v551 = vpack.c.bf16 %v538, %v537
  %v552 = vpack.c.bf16 %v540, %v539
  %v553 = vpack.c.bf16 %v542, %v541
  %v554 = vpack.c.bf16 %v544, %v543
  %v555 = vpack.c.bf16 %v546, %v545
  %v556 = vpack.c.bf16 %v548, %v547
  %v557 = vld [vmem:[%s2] sm:$0xf]
  %v558 = vld [vmem:[%s2 + $0x4] sm:$0xf]
  %v559 = vld [vmem:[%s2 + $0x8] sm:$0xf]
  %v560 = vld [vmem:[%s2 + $0xc] sm:$0xf]
  %v561 = vld [vmem:[%s3] sm:$0x1]
  %v563 = vlaneseq
  %v564 = vshrl.u32 %v563, 7
  %v565 = vsub.s32 0, %v564
  %v566 = vrot.slane %v561, %v565
  %v572 = vunpack.c.l.b16 %v557
  %v573 = vunpack.c.l.b16 %v558
  %v574 = vunpack.c.l.b16 %v559
  %v575 = vunpack.c.l.b16 %v560
  %v576 = vpack.c.b16 %v573, %v572
  %v577 = vpack.c.b16 %v575, %v574
  %v581 = vsel %vm314, %v549, 0
  %v584 = vsel %vm314, %v550, 0
  %v587 = vsel %vm314, %v551, 0
  %v590 = vsel %vm314, %v552, 0
  %v593 = vsel %vm314, %v553, 0
  %v596 = vsel %vm314, %v554, 0
  %v599 = vsel %vm314, %v555, 0
  %v602 = vsel %vm314, %v556, 0
  %604 = vmatprep.subr.bf16.mxu0 0
  %605 = vmatpush1.bf16.msra.mxu0 0
  %606 = vmatprep.subr.bf16.mxu0 0
  %607 = vmatpush1.bf16.msra.mxu0 0
  %608 = vmatprep.subr.bf16.mxu0 0
  %609 = vmatpush1.bf16.msra.mxu0 0
  %610 = vmatprep.subr.bf16.mxu0 0
  %611 = vmatpush1.bf16.msra.mxu0 0
  %612 = vmatprep.subr.bf16.mxu0 0
  %613 = vmatpush1.bf16.msra.mxu0 0
  %614 = vmatprep.subr.bf16.mxu0 0
  %615 = vmatpush1.bf16.msra.mxu0 0
  %616 = vmatprep.subr.bf16.mxu0 0
  %617 = vmatpush1.bf16.msra.mxu0 %v577
  %618 = vmatprep.subr.bf16.mxu0 0
  %619 = vmatpush1.bf16.msra.mxu0 %v576
  %620 = vmatprep.subr.bf16.mxu0 0
  %621 = vmatpush2.bf16.msra.mxu0 0
  %622 = vmatprep.subr.bf16.mxu0 0
  %623 = vmatpush2.bf16.msra.mxu0 0
  %624 = vmatprep.subr.bf16.mxu0 0
  %625 = vmatpush2.bf16.msra.mxu0 0
  %626 = vmatprep.subr.bf16.mxu0 0
  %627 = vmatpush2.bf16.msra.mxu0 0
  %628 = vmatprep.subr.bf16.mxu0 0
  %629 = vmatpush2.bf16.msra.mxu0 0
  %630 = vmatprep.subr.bf16.mxu0 0
  %631 = vmatpush2.bf16.msra.mxu0 0
  %632 = vmatprep.subr.bf16.mxu0 0
  %633 = vmatpush2.bf16.msra.mxu0 0
  %634 = vmatprep.subr.bf16.mxu0 0
  %635 = vmatpush2.bf16.msra.mxu0 0
  %636 = vmatprep.mubr.bf16.mxu0 0
  %637 = vmatmul.mubr.bf16.gmra.mxu0 %v581
  %v638 = vpop.f32.mrf.mxu0
  %v639 = vadd.f32 %v566, %v638
  %v640 = vpop.f32.mrf.mxu0
  %v641 = vpop.f32.mrf.mxu0
  %v642 = vadd.f32 %v566, %v641
  %v643 = vpop.f32.mrf.mxu0
  %644 = vmatprep.mubr.bf16.mxu0 0
  %645 = vmatmul.mubr.bf16.gmra.mxu0 %v584
  %v646 = vpop.f32.mrf.mxu0
  %v647 = vadd.f32 %v566, %v646
  %v648 = vpop.f32.mrf.mxu0
  %v649 = vpop.f32.mrf.mxu0
  %v650 = vadd.f32 %v566, %v649
  %v651 = vpop.f32.mrf.mxu0
  %652 = vmatprep.mubr.bf16.mxu0 0
  %653 = vmatmul.mubr.bf16.gmra.mxu0 %v587
  %v654 = vpop.f32.mrf.mxu0
  %v655 = vadd.f32 %v566, %v654
  %v656 = vpop.f32.mrf.mxu0
  %v657 = vpop.f32.mrf.mxu0
  %v658 = vadd.f32 %v566, %v657
  %v659 = vpop.f32.mrf.mxu0
  %660 = vmatprep.mubr.bf16.mxu0 0
  %661 = vmatmul.mubr.bf16.gmra.mxu0 %v590
  %v662 = vpop.f32.mrf.mxu0
  %v663 = vadd.f32 %v566, %v662
  %v664 = vpop.f32.mrf.mxu0
  %v665 = vpop.f32.mrf.mxu0
  %v666 = vadd.f32 %v566, %v665
  %v667 = vpop.f32.mrf.mxu0
  %668 = vmatprep.mubr.bf16.mxu0 0
  %669 = vmatmul.mubr.bf16.gmra.mxu0 %v593
  %v670 = vpop.f32.mrf.mxu0
  %v671 = vadd.f32 %v566, %v670
  %v672 = vpop.f32.mrf.mxu0
  %v673 = vpop.f32.mrf.mxu0
  %v674 = vadd.f32 %v566, %v673
  %v675 = vpop.f32.mrf.mxu0
  %676 = vmatprep.mubr.bf16.mxu0 0
  %677 = vmatmul.mubr.bf16.gmra.mxu0 %v596
  %v678 = vpop.f32.mrf.mxu0
  %v679 = vadd.f32 %v566, %v678
  %v680 = vpop.f32.mrf.mxu0
  %v681 = vpop.f32.mrf.mxu0
  %v682 = vadd.f32 %v566, %v681
  %v683 = vpop.f32.mrf.mxu0
  %684 = vmatprep.mubr.bf16.mxu0 0
  %685 = vmatmul.mubr.bf16.gmra.mxu0 %v599
  %v686 = vpop.f32.mrf.mxu0
  %v687 = vadd.f32 %v566, %v686
  %v688 = vpop.f32.mrf.mxu0
  %v689 = vpop.f32.mrf.mxu0
  %v690 = vadd.f32 %v566, %v689
  %v691 = vpop.f32.mrf.mxu0
  %692 = vmatprep.mubr.bf16.mxu0 0
  %693 = vmatmul.mubr.bf16.gmra.mxu0 %v602
  %v694 = vpop.f32.mrf.mxu0
  %v695 = vadd.f32 %v566, %v694
  %v696 = vpop.f32.mrf.mxu0
  %v697 = vpop.f32.mrf.mxu0
  %v698 = vadd.f32 %v566, %v697
  %v699 = vpop.f32.mrf.mxu0
  %700 = vdwg.mxu0
  %vm701 = vcmask 31744
  %702 = vst.msk [vmem:[%s4] sm:$0xff] %vm701, %v639
  %703 = vst.msk [vmem:[%s4 + $0x8] sm:$0xff] %vm701, %v642
  %704 = vst.msk [vmem:[%s4 + $0x10] sm:$0xff] %vm701, %v647
  %705 = vst.msk [vmem:[%s4 + $0x18] sm:$0xff] %vm701, %v650
  %706 = vst.msk [vmem:[%s4 + $0x20] sm:$0xff] %vm701, %v655
  %707 = vst.msk [vmem:[%s4 + $0x28] sm:$0xff] %vm701, %v658
  %708 = vst.msk [vmem:[%s4 + $0x30] sm:$0xff] %vm701, %v663
  %709 = vst.msk [vmem:[%s4 + $0x38] sm:$0xff] %vm701, %v666
  %710 = vst.msk [vmem:[%s4 + $0x40] sm:$0xff] %vm701, %v671
  %711 = vst.msk [vmem:[%s4 + $0x48] sm:$0xff] %vm701, %v674
  %712 = vst.msk [vmem:[%s4 + $0x50] sm:$0xff] %vm701, %v679
  %713 = vst.msk [vmem:[%s4 + $0x58] sm:$0xff] %vm701, %v682
  %714 = vst.msk [vmem:[%s4 + $0x60] sm:$0xff] %vm701, %v687
  %715 = vst.msk [vmem:[%s4 + $0x68] sm:$0xff] %vm701, %v690
  %716 = vst.msk [vmem:[%s4 + $0x70] sm:$0xff] %vm701, %v695
  %717 = vst.msk [vmem:[%s4 + $0x78] sm:$0xff] %vm701, %v698
  // Predicated region
  $region18: #{single_forward.12} parent=0 // pred_check
    _
  $region19: #{single_forward.12} parent=0 // pred_check_branch
    %719 = sbr.rel (0) target = $region21
  $region20: #{single_forward.12} parent=0 // pred_region
    _
  $region21: #{single_forward.12} parent=0 // pred_fallthru
    _
  // Predicated region
  $region22: #{single_forward.12} parent=0 // pred_check
    _
  $region23: #{single_forward.12} parent=0 // pred_check_branch
    %721 = sbr.rel (0) target = $region25
  $region24: #{single_forward.12} parent=0 // pred_region
    _
  $region25: #{single_forward.12} parent=0 // pred_fallthru
    _

// kernel: single_forward.13
$region0: #{single_forward.13}
  #allocation0 [shape = 'u32[]', space=smem, size = 0x4, offset = 0x4, fixed_abs, tag = 'smem constant byte address 0x4 - core index']
  #allocation1 [shape = 'u32[144,128]{1,0:T(1,128)}', space=vmem, size = 0x12000, scoped, tag = 'internal scratch']
  %s0 = inlined_call_operand.vmem [shape: bf16[128,288], index: 0, kind: input, shape index: {}]
  %s1 = inlined_call_operand.vmem [shape: bf16[288,32], index: 1, kind: input, shape index: {}]
  %s2 = inlined_call_operand.vmem [shape: bf16[32,18], index: 2, kind: input, shape index: {}]
  %s3 = inlined_call_operand.vmem [shape: f32[1,18], index: 3, kind: input, shape index: {}]
  %s4 = inlined_call_operand.vmem [shape: f32[128,18], index: 4, kind: output, shape index: {}]
  %s5 = sld [smem:[#allocation0]]
  $region26: #{single_forward.13} parent=0
    _
  %s7 = ssub.s32 1, %s5
  %s8 = scalar_select 0, %s7, %s5
  // Predicated region
  $region2: #{single_forward.13} parent=0 // pred_check
    _
  $region3: #{single_forward.13} parent=0 // pred_check_branch
    %10 = sbr.rel (0) target = $region5
  $region4: #{single_forward.13} parent=0 // pred_region
    _
  $region5: #{single_forward.13} parent=0 // pred_fallthru
    _
  // Predicated region
  $region6: #{single_forward.13} parent=0 // pred_check
    _
  $region7: #{single_forward.13} parent=0 // pred_check_branch
    %12 = sbr.rel (0) target = $region9
  $region8: #{single_forward.13} parent=0 // pred_region
    _
  $region9: #{single_forward.13} parent=0 // pred_fallthru
    _
  // Predicated region
  $region10: #{single_forward.13} parent=0 // pred_check
    _
  $region11: #{single_forward.13} parent=0 // pred_check_branch
    %14 = sbr.rel (0) target = $region13
  $region12: #{single_forward.13} parent=0 // pred_region
    _
  $region13: #{single_forward.13} parent=0 // pred_fallthru
    _
  // Predicated region
  $region14: #{single_forward.13} parent=0 // pred_check
    _
  $region15: #{single_forward.13} parent=0 // pred_check_branch
    %16 = sbr.rel (0) target = $region17
  $region16: #{single_forward.13} parent=0 // pred_region
    _
  $region17: #{single_forward.13} parent=0 // pred_fallthru
    _
  %v18 = vld [vmem:[%s0] sm:$0xff]
  %v19 = vld [vmem:[%s0 + $0x8] sm:$0xf]
  %v20 = vld [vmem:[%s0 + $0xc] sm:$0xff]
  %v21 = vld [vmem:[%s0 + $0x14] sm:$0xf]
  %v22 = vld [vmem:[%s0 + $0x18] sm:$0xff]
  %v23 = vld [vmem:[%s0 + $0x20] sm:$0xf]
  %v24 = vld [vmem:[%s0 + $0x24] sm:$0xff]
  %v25 = vld [vmem:[%s0 + $0x2c] sm:$0xf]
  %v26 = vld [vmem:[%s0 + $0x30] sm:$0xff]
  %v27 = vld [vmem:[%s0 + $0x38] sm:$0xf]
  %v28 = vld [vmem:[%s0 + $0x3c] sm:$0xff]
  %v29 = vld [vmem:[%s0 + $0x44] sm:$0xf]
  %v30 = vld [vmem:[%s0 + $0x48] sm:$0xff]
  %v31 = vld [vmem:[%s0 + $0x50] sm:$0xf]
  %v32 = vld [vmem:[%s0 + $0x54] sm:$0xff]
  %v33 = vld [vmem:[%s0 + $0x5c] sm:$0xf]
  %v34 = vld [vmem:[%s0 + $0x60] sm:$0xff]
  %v35 = vld [vmem:[%s0 + $0x68] sm:$0xf]
  %v36 = vld [vmem:[%s0 + $0x6c] sm:$0xff]
  %v37 = vld [vmem:[%s0 + $0x74] sm:$0xf]
  %v38 = vld [vmem:[%s0 + $0x78] sm:$0xff]
  %v39 = vld [vmem:[%s0 + $0x80] sm:$0xf]
  %v40 = vld [vmem:[%s0 + $0x84] sm:$0xff]
  %v41 = vld [vmem:[%s0 + $0x8c] sm:$0xf]
  %v42 = vld [vmem:[%s0 + $0x90] sm:$0xff]
  %v43 = vld [vmem:[%s0 + $0x98] sm:$0xf]
  %v44 = vld [vmem:[%s0 + $0x9c] sm:$0xff]
  %v45 = vld [vmem:[%s0 + $0xa4] sm:$0xf]
  %v46 = vld [vmem:[%s0 + $0xa8] sm:$0xff]
  %v47 = vld [vmem:[%s0 + $0xb0] sm:$0xf]
  %v48 = vld [vmem:[%s0 + $0xb4] sm:$0xff]
  %v49 = vld [vmem:[%s0 + $0xbc] sm:$0xf]
  %v50 = vld [vmem:[%s1] sm:$0xf]
  %v51 = vld [vmem:[%s1 + $0x4] sm:$0xf]
  %v52 = vld [vmem:[%s1 + $0x8] sm:$0xf]
  %v53 = vld [vmem:[%s1 + $0xc] sm:$0xf]
  %v54 = vld [vmem:[%s1 + $0x10] sm:$0xf]
  %v55 = vld [vmem:[%s1 + $0x14] sm:$0xf]
  %v56 = vld [vmem:[%s1 + $0x18] sm:$0xf]
  %v57 = vld [vmem:[%s1 + $0x1c] sm:$0xf]
  %v58 = vld [vmem:[%s1 + $0x20] sm:$0xf]
  %v59 = vld [vmem:[%s1 + $0x24] sm:$0xf]
  %v60 = vld [vmem:[%s1 + $0x28] sm:$0xf]
  %v61 = vld [vmem:[%s1 + $0x2c] sm:$0xf]
  %v62 = vld [vmem:[%s1 + $0x30] sm:$0xf]
  %v63 = vld [vmem:[%s1 + $0x34] sm:$0xf]
  %v64 = vld [vmem:[%s1 + $0x38] sm:$0xf]
  %v65 = vld [vmem:[%s1 + $0x3c] sm:$0xf]
  %v66 = vld [vmem:[%s1 + $0x40] sm:$0xf]
  %v67 = vld [vmem:[%s1 + $0x44] sm:$0xf]
  %v68 = vld [vmem:[%s1 + $0x48] sm:$0xf]
  %v69 = vld [vmem:[%s1 + $0x4c] sm:$0xf]
  %v70 = vld [vmem:[%s1 + $0x50] sm:$0xf]
  %v71 = vld [vmem:[%s1 + $0x54] sm:$0xf]
  %v72 = vld [vmem:[%s1 + $0x58] sm:$0xf]
  %v73 = vld [vmem:[%s1 + $0x5c] sm:$0xf]
  %v74 = vld [vmem:[%s1 + $0x60] sm:$0xf]
  %v75 = vld [vmem:[%s1 + $0x64] sm:$0xf]
  %v76 = vld [vmem:[%s1 + $0x68] sm:$0xf]
  %v77 = vld [vmem:[%s1 + $0x6c] sm:$0xf]
  %v78 = vld [vmem:[%s1 + $0x70] sm:$0xf]
  %v79 = vld [vmem:[%s1 + $0x74] sm:$0xf]
  %v80 = vld [vmem:[%s1 + $0x78] sm:$0xf]
  %v81 = vld [vmem:[%s1 + $0x7c] sm:$0xf]
  %v82 = vld [vmem:[%s1 + $0x80] sm:$0xf]
  %v83 = vld [vmem:[%s1 + $0x84] sm:$0xf]
  %v84 = vld [vmem:[%s1 + $0x88] sm:$0xf]
  %v85 = vld [vmem:[%s1 + $0x8c] sm:$0xf]
  %v118 = vunpack.c.l.b16 %v18
  %v119 = vunpack.c.h.b16 %v18
  %v120 = vunpack.c.l.b16 %v19
  %v121 = vunpack.c.l.b16 %v20
  %v122 = vunpack.c.h.b16 %v20
  %v123 = vunpack.c.l.b16 %v21
  %v124 = vunpack.c.l.b16 %v22
  %v125 = vunpack.c.h.b16 %v22
  %v126 = vunpack.c.l.b16 %v23
  %v127 = vunpack.c.l.b16 %v24
  %v128 = vunpack.c.h.b16 %v24
  %v129 = vunpack.c.l.b16 %v25
  %v130 = vunpack.c.l.b16 %v26
  %v131 = vunpack.c.h.b16 %v26
  %v132 = vunpack.c.l.b16 %v27
  %v133 = vunpack.c.l.b16 %v28
  %v134 = vunpack.c.h.b16 %v28
  %v135 = vunpack.c.l.b16 %v29
  %v136 = vunpack.c.l.b16 %v30
  %v137 = vunpack.c.h.b16 %v30
  %v138 = vunpack.c.l.b16 %v31
  %v139 = vunpack.c.l.b16 %v32
  %v140 = vunpack.c.h.b16 %v32
  %v141 = vunpack.c.l.b16 %v33
  %v142 = vunpack.c.l.b16 %v34
  %v143 = vunpack.c.h.b16 %v34
  %v144 = vunpack.c.l.b16 %v35
  %v145 = vunpack.c.l.b16 %v36
  %v146 = vunpack.c.h.b16 %v36
  %v147 = vunpack.c.l.b16 %v37
  %v148 = vunpack.c.l.b16 %v38
  %v149 = vunpack.c.h.b16 %v38
  %v150 = vunpack.c.l.b16 %v39
  %v151 = vunpack.c.l.b16 %v40
  %v152 = vunpack.c.h.b16 %v40
  %v153 = vunpack.c.l.b16 %v41
  %v154 = vunpack.c.l.b16 %v42
  %v155 = vunpack.c.h.b16 %v42
  %v156 = vunpack.c.l.b16 %v43
  %v157 = vunpack.c.l.b16 %v44
  %v158 = vunpack.c.h.b16 %v44
  %v159 = vunpack.c.l.b16 %v45
  %v160 = vunpack.c.l.b16 %v46
  %v161 = vunpack.c.h.b16 %v46
  %v162 = vunpack.c.l.b16 %v47
  %v163 = vunpack.c.l.b16 %v48
  %v164 = vunpack.c.h.b16 %v48
  %v165 = vunpack.c.l.b16 %v49
  %v166 = vpack.c.b16 %v121, %v118
  %v167 = vpack.c.b16 %v122, %v119
  %v168 = vpack.c.b16 %v123, %v120
  %v169 = vpack.c.b16 %v127, %v124
  %v170 = vpack.c.b16 %v128, %v125
  %v171 = vpack.c.b16 %v129, %v126
  %v172 = vpack.c.b16 %v133, %v130
  %v173 = vpack.c.b16 %v134, %v131
  %v174 = vpack.c.b16 %v135, %v132
  %v175 = vpack.c.b16 %v139, %v136
  %v176 = vpack.c.b16 %v140, %v137
  %v177 = vpack.c.b16 %v141, %v138
  %v178 = vpack.c.b16 %v145, %v142
  %v179 = vpack.c.b16 %v146, %v143
  %v180 = vpack.c.b16 %v147, %v144
  %v181 = vpack.c.b16 %v151, %v148
  %v182 = vpack.c.b16 %v152, %v149
  %v183 = vpack.c.b16 %v153, %v150
  %v184 = vpack.c.b16 %v157, %v154
  %v185 = vpack.c.b16 %v158, %v155
  %v186 = vpack.c.b16 %v159, %v156
  %v187 = vpack.c.b16 %v163, %v160
  %v188 = vpack.c.b16 %v164, %v161
  %v189 = vpack.c.b16 %v165, %v162
  %v242 = vunpack.c.l.b16 %v50
  %v243 = vunpack.c.l.b16 %v51
  %v244 = vunpack.c.l.b16 %v52
  %v245 = vunpack.c.l.b16 %v53
  %v246 = vunpack.c.l.b16 %v54
  %v247 = vunpack.c.l.b16 %v55
  %v248 = vunpack.c.l.b16 %v56
  %v249 = vunpack.c.l.b16 %v57
  %v250 = vunpack.c.l.b16 %v58
  %v251 = vunpack.c.l.b16 %v59
  %v252 = vunpack.c.l.b16 %v60
  %v253 = vunpack.c.l.b16 %v61
  %v254 = vunpack.c.l.b16 %v62
  %v255 = vunpack.c.l.b16 %v63
  %v256 = vunpack.c.l.b16 %v64
  %v257 = vunpack.c.l.b16 %v65
  %v258 = vunpack.c.l.b16 %v66
  %v259 = vunpack.c.l.b16 %v67
  %v260 = vunpack.c.l.b16 %v68
  %v261 = vunpack.c.l.b16 %v69
  %v262 = vunpack.c.l.b16 %v70
  %v263 = vunpack.c.l.b16 %v71
  %v264 = vunpack.c.l.b16 %v72
  %v265 = vunpack.c.l.b16 %v73
  %v266 = vunpack.c.l.b16 %v74
  %v267 = vunpack.c.l.b16 %v75
  %v268 = vunpack.c.l.b16 %v76
  %v269 = vunpack.c.l.b16 %v77
  %v270 = vunpack.c.l.b16 %v78
  %v271 = vunpack.c.l.b16 %v79
  %v272 = vunpack.c.l.b16 %v80
  %v273 = vunpack.c.l.b16 %v81
  %v274 = vunpack.c.l.b16 %v82
  %v275 = vunpack.c.l.b16 %v83
  %v276 = vunpack.c.l.b16 %v84
  %v277 = vunpack.c.l.b16 %v85
  %v278 = vpack.c.b16 %v243, %v242
  %v279 = vpack.c.b16 %v245, %v244
  %v280 = vpack.c.b16 %v247, %v246
  %v281 = vpack.c.b16 %v249, %v248
  %v282 = vpack.c.b16 %v251, %v250
  %v283 = vpack.c.b16 %v253, %v252
  %v284 = vpack.c.b16 %v255, %v254
  %v285 = vpack.c.b16 %v257, %v256
  %v286 = vpack.c.b16 %v259, %v258
  %v287 = vpack.c.b16 %v261, %v260
  %v288 = vpack.c.b16 %v263, %v262
  %v289 = vpack.c.b16 %v265, %v264
  %v290 = vpack.c.b16 %v267, %v266
  %v291 = vpack.c.b16 %v269, %v268
  %v292 = vpack.c.b16 %v271, %v270
  %v293 = vpack.c.b16 %v273, %v272
  %v294 = vpack.c.b16 %v275, %v274
  %v295 = vpack.c.b16 %v277, %v276
  %vm314 = vcmask 261120
  %v316 = vsel %vm314, %v168, 0
  %v319 = vsel %vm314, %v171, 0
  %v322 = vsel %vm314, %v174, 0
  %v325 = vsel %vm314, %v177, 0
  %v328 = vsel %vm314, %v180, 0
  %v331 = vsel %vm314, %v183, 0
  %v334 = vsel %vm314, %v186, 0
  %v337 = vsel %vm314, %v189, 0
  %339 = vmatprep.subr.bf16.mxu0 0
  %340 = vmatpush1.bf16.msra.mxu0 %v285
  %341 = vmatprep.subr.bf16.mxu0 0
  %342 = vmatpush1.bf16.msra.mxu0 %v284
  %343 = vmatprep.subr.bf16.mxu0 0
  %344 = vmatpush1.bf16.msra.mxu0 %v283
  %345 = vmatprep.subr.bf16.mxu0 0
  %346 = vmatpush1.bf16.msra.mxu0 %v282
  %347 = vmatprep.subr.bf16.mxu0 0
  %348 = vmatpush1.bf16.msra.mxu0 %v281
  %349 = vmatprep.subr.bf16.mxu0 0
  %350 = vmatpush1.bf16.msra.mxu0 %v280
  %351 = vmatprep.subr.bf16.mxu0 0
  %352 = vmatpush1.bf16.msra.mxu0 %v279
  %353 = vmatprep.subr.bf16.mxu0 0
  %354 = vmatpush1.bf16.msra.mxu0 %v278
  %355 = vmatprep.subr.bf16.mxu0 0
  %356 = vmatpush2.bf16.msra.mxu0 %v293
  %357 = vmatprep.subr.bf16.mxu0 0
  %358 = vmatpush2.bf16.msra.mxu0 %v292
  %359 = vmatprep.subr.bf16.mxu0 0
  %360 = vmatpush2.bf16.msra.mxu0 %v291
  %361 = vmatprep.subr.bf16.mxu0 0
  %362 = vmatpush2.bf16.msra.mxu0 %v290
  %363 = vmatprep.subr.bf16.mxu0 0
  %364 = vmatpush2.bf16.msra.mxu0 %v289
  %365 = vmatprep.subr.bf16.mxu0 0
  %366 = vmatpush2.bf16.msra.mxu0 %v288
  %367 = vmatprep.subr.bf16.mxu0 0
  %368 = vmatpush2.bf16.msra.mxu0 %v287
  %369 = vmatprep.subr.bf16.mxu0 0
  %370 = vmatpush2.bf16.msra.mxu0 %v286
  %371 = vmatprep.mubr.bf16.mxu0 %v167
  %372 = vmatmul.mubr.bf16.gmra.mxu0 %v166
  %v373 = vpop.f32.mrf.mxu0
  %v374 = vadd.f32 0.0, %v373
  %v375 = vpop.f32.mrf.mxu0
  %v376 = vpop.f32.mrf.mxu0
  %v377 = vadd.f32 0.0, %v376
  %v378 = vpop.f32.mrf.mxu0
  %379 = vmatprep.mubr.bf16.mxu0 %v170
  %380 = vmatmul.mubr.bf16.gmra.mxu0 %v169
  %v381 = vpop.f32.mrf.mxu0
  %v382 = vadd.f32 0.0, %v381
  %v383 = vpop.f32.mrf.mxu0
  %v384 = vpop.f32.mrf.mxu0
  %v385 = vadd.f32 0.0, %v384
  %v386 = vpop.f32.mrf.mxu0
  %387 = vmatprep.mubr.bf16.mxu0 %v173
  %388 = vmatmul.mubr.bf16.gmra.mxu0 %v172
  %v389 = vpop.f32.mrf.mxu0
  %v390 = vadd.f32 0.0, %v389
  %v391 = vpop.f32.mrf.mxu0
  %v392 = vpop.f32.mrf.mxu0
  %v393 = vadd.f32 0.0, %v392
  %v394 = vpop.f32.mrf.mxu0
  %395 = vmatprep.mubr.bf16.mxu0 %v176
  %396 = vmatmul.mubr.bf16.gmra.mxu0 %v175
  %v397 = vpop.f32.mrf.mxu0
  %v398 = vadd.f32 0.0, %v397
  %v399 = vpop.f32.mrf.mxu0
  %v400 = vpop.f32.mrf.mxu0
  %v401 = vadd.f32 0.0, %v400
  %v402 = vpop.f32.mrf.mxu0
  %403 = vmatprep.mubr.bf16.mxu0 %v179
  %404 = vmatmul.mubr.bf16.gmra.mxu0 %v178
  %v405 = vpop.f32.mrf.mxu0
  %v406 = vadd.f32 0.0, %v405
  %v407 = vpop.f32.mrf.mxu0
  %v408 = vpop.f32.mrf.mxu0
  %v409 = vadd.f32 0.0, %v408
  %v410 = vpop.f32.mrf.mxu0
  %411 = vmatprep.mubr.bf16.mxu0 %v182
  %412 = vmatmul.mubr.bf16.gmra.mxu0 %v181
  %v413 = vpop.f32.mrf.mxu0
  %v414 = vadd.f32 0.0, %v413
  %v415 = vpop.f32.mrf.mxu0
  %v416 = vpop.f32.mrf.mxu0
  %v417 = vadd.f32 0.0, %v416
  %v418 = vpop.f32.mrf.mxu0
  %419 = vmatprep.mubr.bf16.mxu0 %v185
  %420 = vmatmul.mubr.bf16.gmra.mxu0 %v184
  %v421 = vpop.f32.mrf.mxu0
  %v422 = vadd.f32 0.0, %v421
  %v423 = vpop.f32.mrf.mxu0
  %v424 = vpop.f32.mrf.mxu0
  %v425 = vadd.f32 0.0, %v424
  %v426 = vpop.f32.mrf.mxu0
  %427 = vmatprep.mubr.bf16.mxu0 %v188
  %428 = vmatmul.mubr.bf16.gmra.mxu0 %v187
  %v429 = vpop.f32.mrf.mxu0
  %v430 = vadd.f32 0.0, %v429
  %v431 = vpop.f32.mrf.mxu0
  %v432 = vpop.f32.mrf.mxu0
  %v433 = vadd.f32 0.0, %v432
  %v434 = vpop.f32.mrf.mxu0
  %435 = vdwg.mxu0
  %436 = vmatprep.subr.bf16.mxu0 0
  %437 = vmatpush1.bf16.msra.mxu0 0
  %438 = vmatprep.subr.bf16.mxu0 0
  %439 = vmatpush1.bf16.msra.mxu0 0
  %440 = vmatprep.subr.bf16.mxu0 0
  %441 = vmatpush1.bf16.msra.mxu0 0
  %442 = vmatprep.subr.bf16.mxu0 0
  %443 = vmatpush1.bf16.msra.mxu0 0
  %444 = vmatprep.subr.bf16.mxu0 0
  %445 = vmatpush1.bf16.msra.mxu0 0
  %446 = vmatprep.subr.bf16.mxu0 0
  %447 = vmatpush1.bf16.msra.mxu0 0
  %448 = vmatprep.subr.bf16.mxu0 0
  %449 = vmatpush1.bf16.msra.mxu0 %v295
  %450 = vmatprep.subr.bf16.mxu0 0
  %451 = vmatpush1.bf16.msra.mxu0 %v294
  %452 = vmatprep.subr.bf16.mxu0 0
  %453 = vmatpush2.bf16.msra.mxu0 0
  %454 = vmatprep.subr.bf16.mxu0 0
  %455 = vmatpush2.bf16.msra.mxu0 0
  %456 = vmatprep.subr.bf16.mxu0 0
  %457 = vmatpush2.bf16.msra.mxu0 0
  %458 = vmatprep.subr.bf16.mxu0 0
  %459 = vmatpush2.bf16.msra.mxu0 0
  %460 = vmatprep.subr.bf16.mxu0 0
  %461 = vmatpush2.bf16.msra.mxu0 0
  %462 = vmatprep.subr.bf16.mxu0 0
  %463 = vmatpush2.bf16.msra.mxu0 0
  %464 = vmatprep.subr.bf16.mxu0 0
  %465 = vmatpush2.bf16.msra.mxu0 0
  %466 = vmatprep.subr.bf16.mxu0 0
  %467 = vmatpush2.bf16.msra.mxu0 0
  %468 = vmatprep.mubr.bf16.mxu0 0
  %469 = vmatmul.mubr.bf16.gmra.mxu0 %v316
  %v470 = vpop.f32.mrf.mxu0
  %v471 = vadd.f32 %v374, %v470
  %v472 = vpop.f32.mrf.mxu0
  %v473 = vpop.f32.mrf.mxu0
  %v474 = vadd.f32 %v377, %v473
  %v475 = vpop.f32.mrf.mxu0
  %476 = vmatprep.mubr.bf16.mxu0 0
  %477 = vmatmul.mubr.bf16.gmra.mxu0 %v319
  %v478 = vpop.f32.mrf.mxu0
  %v479 = vadd.f32 %v382, %v478
  %v480 = vpop.f32.mrf.mxu0
  %v481 = vpop.f32.mrf.mxu0
  %v482 = vadd.f32 %v385, %v481
  %v483 = vpop.f32.mrf.mxu0
  %484 = vmatprep.mubr.bf16.mxu0 0
  %485 = vmatmul.mubr.bf16.gmra.mxu0 %v322
  %v486 = vpop.f32.mrf.mxu0
  %v487 = vadd.f32 %v390, %v486
  %v488 = vpop.f32.mrf.mxu0
  %v489 = vpop.f32.mrf.mxu0
  %v490 = vadd.f32 %v393, %v489
  %v491 = vpop.f32.mrf.mxu0
  %492 = vmatprep.mubr.bf16.mxu0 0
  %493 = vmatmul.mubr.bf16.gmra.mxu0 %v325
  %v494 = vpop.f32.mrf.mxu0
  %v495 = vadd.f32 %v398, %v494
  %v496 = vpop.f32.mrf.mxu0
  %v497 = vpop.f32.mrf.mxu0
  %v498 = vadd.f32 %v401, %v497
  %v499 = vpop.f32.mrf.mxu0
  %500 = vmatprep.mubr.bf16.mxu0 0
  %501 = vmatmul.mubr.bf16.gmra.mxu0 %v328
  %v502 = vpop.f32.mrf.mxu0
  %v503 = vadd.f32 %v406, %v502
  %v504 = vpop.f32.mrf.mxu0
  %v505 = vpop.f32.mrf.mxu0
  %v506 = vadd.f32 %v409, %v505
  %v507 = vpop.f32.mrf.mxu0
  %508 = vmatprep.mubr.bf16.mxu0 0
  %509 = vmatmul.mubr.bf16.gmra.mxu0 %v331
  %v510 = vpop.f32.mrf.mxu0
  %v511 = vadd.f32 %v414, %v510
  %v512 = vpop.f32.mrf.mxu0
  %v513 = vpop.f32.mrf.mxu0
  %v514 = vadd.f32 %v417, %v513
  %v515 = vpop.f32.mrf.mxu0
  %516 = vmatprep.mubr.bf16.mxu0 0
  %517 = vmatmul.mubr.bf16.gmra.mxu0 %v334
  %v518 = vpop.f32.mrf.mxu0
  %v519 = vadd.f32 %v422, %v518
  %v520 = vpop.f32.mrf.mxu0
  %v521 = vpop.f32.mrf.mxu0
  %v522 = vadd.f32 %v425, %v521
  %v523 = vpop.f32.mrf.mxu0
  %524 = vmatprep.mubr.bf16.mxu0 0
  %525 = vmatmul.mubr.bf16.gmra.mxu0 %v337
  %v526 = vpop.f32.mrf.mxu0
  %v527 = vadd.f32 %v430, %v526
  %v528 = vpop.f32.mrf.mxu0
  %v529 = vpop.f32.mrf.mxu0
  %v530 = vadd.f32 %v433, %v529
  %v531 = vpop.f32.mrf.mxu0
  %532 = vdwg.mxu0
  %v533 = vmax.f32 %v471, 0.0
  %v534 = vmax.f32 %v474, 0.0
  %v535 = vmax.f32 %v479, 0.0
  %v536 = vmax.f32 %v482, 0.0
  %v537 = vmax.f32 %v487, 0.0
  %v538 = vmax.f32 %v490, 0.0
  %v539 = vmax.f32 %v495, 0.0
  %v540 = vmax.f32 %v498, 0.0
  %v541 = vmax.f32 %v503, 0.0
  %v542 = vmax.f32 %v506, 0.0
  %v543 = vmax.f32 %v511, 0.0
  %v544 = vmax.f32 %v514, 0.0
  %v545 = vmax.f32 %v519, 0.0
  %v546 = vmax.f32 %v522, 0.0
  %v547 = vmax.f32 %v527, 0.0
  %v548 = vmax.f32 %v530, 0.0
  %v549 = vpack.c.bf16 %v534, %v533
  %v550 = vpack.c.bf16 %v536, %v535
  %v551 = vpack.c.bf16 %v538, %v537
  %v552 = vpack.c.bf16 %v540, %v539
  %v553 = vpack.c.bf16 %v542, %v541
  %v554 = vpack.c.bf16 %v544, %v543
  %v555 = vpack.c.bf16 %v546, %v545
  %v556 = vpack.c.bf16 %v548, %v547
  %v557 = vld [vmem:[%s2] sm:$0xf]
  %v558 = vld [vmem:[%s2 + $0x4] sm:$0xf]
  %v559 = vld [vmem:[%s2 + $0x8] sm:$0xf]
  %v560 = vld [vmem:[%s2 + $0xc] sm:$0xf]
  %v561 = vld [vmem:[%s3] sm:$0x1]
  %v563 = vlaneseq
  %v564 = vshrl.u32 %v563, 7
  %v565 = vsub.s32 0, %v564
  %v566 = vrot.slane %v561, %v565
  %v572 = vunpack.c.l.b16 %v557
  %v573 = vunpack.c.l.b16 %v558
  %v574 = vunpack.c.l.b16 %v559
  %v575 = vunpack.c.l.b16 %v560
  %v576 = vpack.c.b16 %v573, %v572
  %v577 = vpack.c.b16 %v575, %v574
  %v581 = vsel %vm314, %v549, 0
  %v584 = vsel %vm314, %v550, 0
  %v587 = vsel %vm314, %v551, 0
  %v590 = vsel %vm314, %v552, 0
  %v593 = vsel %vm314, %v553, 0
  %v596 = vsel %vm314, %v554, 0
  %v599 = vsel %vm314, %v555, 0
  %v602 = vsel %vm314, %v556, 0
  %604 = vmatprep.subr.bf16.mxu0 0
  %605 = vmatpush1.bf16.msra.mxu0 0
  %606 = vmatprep.subr.bf16.mxu0 0
  %607 = vmatpush1.bf16.msra.mxu0 0
  %608 = vmatprep.subr.bf16.mxu0 0
  %609 = vmatpush1.bf16.msra.mxu0 0
  %610 = vmatprep.subr.bf16.mxu0 0
  %611 = vmatpush1.bf16.msra.mxu0 0
  %612 = vmatprep.subr.bf16.mxu0 0
  %613 = vmatpush1.bf16.msra.mxu0 0
  %614 = vmatprep.subr.bf16.mxu0 0
  %615 = vmatpush1.bf16.msra.mxu0 0
  %616 = vmatprep.subr.bf16.mxu0 0
  %617 = vmatpush1.bf16.msra.mxu0 %v577
  %618 = vmatprep.subr.bf16.mxu0 0
  %619 = vmatpush1.bf16.msra.mxu0 %v576
  %620 = vmatprep.subr.bf16.mxu0 0
  %621 = vmatpush2.bf16.msra.mxu0 0
  %622 = vmatprep.subr.bf16.mxu0 0
  %623 = vmatpush2.bf16.msra.mxu0 0
  %624 = vmatprep.subr.bf16.mxu0 0
  %625 = vmatpush2.bf16.msra.mxu0 0
  %626 = vmatprep.subr.bf16.mxu0 0
  %627 = vmatpush2.bf16.msra.mxu0 0
  %628 = vmatprep.subr.bf16.mxu0 0
  %629 = vmatpush2.bf16.msra.mxu0 0
  %630 = vmatprep.subr.bf16.mxu0 0
  %631 = vmatpush2.bf16.msra.mxu0 0
  %632 = vmatprep.subr.bf16.mxu0 0
  %633 = vmatpush2.bf16.msra.mxu0 0
  %634 = vmatprep.subr.bf16.mxu0 0
  %635 = vmatpush2.bf16.msra.mxu0 0
  %636 = vmatprep.mubr.bf16.mxu0 0
  %637 = vmatmul.mubr.bf16.gmra.mxu0 %v581
  %v638 = vpop.f32.mrf.mxu0
  %v639 = vadd.f32 %v566, %v638
  %v640 = vpop.f32.mrf.mxu0
  %v641 = vpop.f32.mrf.mxu0
  %v642 = vadd.f32 %v566, %v641
  %v643 = vpop.f32.mrf.mxu0
  %644 = vmatprep.mubr.bf16.mxu0 0
  %645 = vmatmul.mubr.bf16.gmra.mxu0 %v584
  %v646 = vpop.f32.mrf.mxu0
  %v647 = vadd.f32 %v566, %v646
  %v648 = vpop.f32.mrf.mxu0
  %v649 = vpop.f32.mrf.mxu0
  %v650 = vadd.f32 %v566, %v649
  %v651 = vpop.f32.mrf.mxu0
  %652 = vmatprep.mubr.bf16.mxu0 0
  %653 = vmatmul.mubr.bf16.gmra.mxu0 %v587
  %v654 = vpop.f32.mrf.mxu0
  %v655 = vadd.f32 %v566, %v654
  %v656 = vpop.f32.mrf.mxu0
  %v657 = vpop.f32.mrf.mxu0
  %v658 = vadd.f32 %v566, %v657
  %v659 = vpop.f32.mrf.mxu0
  %660 = vmatprep.mubr.bf16.mxu0 0
  %661 = vmatmul.mubr.bf16.gmra.mxu0 %v590
  %v662 = vpop.f32.mrf.mxu0
  %v663 = vadd.f32 %v566, %v662
  %v664 = vpop.f32.mrf.mxu0
  %v665 = vpop.f32.mrf.mxu0
  %v666 = vadd.f32 %v566, %v665
  %v667 = vpop.f32.mrf.mxu0
  %668 = vmatprep.mubr.bf16.mxu0 0
  %669 = vmatmul.mubr.bf16.gmra.mxu0 %v593
  %v670 = vpop.f32.mrf.mxu0
  %v671 = vadd.f32 %v566, %v670
  %v672 = vpop.f32.mrf.mxu0
  %v673 = vpop.f32.mrf.mxu0
  %v674 = vadd.f32 %v566, %v673
  %v675 = vpop.f32.mrf.mxu0
  %676 = vmatprep.mubr.bf16.mxu0 0
  %677 = vmatmul.mubr.bf16.gmra.mxu0 %v596
  %v678 = vpop.f32.mrf.mxu0
  %v679 = vadd.f32 %v566, %v678
  %v680 = vpop.f32.mrf.mxu0
  %v681 = vpop.f32.mrf.mxu0
  %v682 = vadd.f32 %v566, %v681
  %v683 = vpop.f32.mrf.mxu0
  %684 = vmatprep.mubr.bf16.mxu0 0
  %685 = vmatmul.mubr.bf16.gmra.mxu0 %v599
  %v686 = vpop.f32.mrf.mxu0
  %v687 = vadd.f32 %v566, %v686
  %v688 = vpop.f32.mrf.mxu0
  %v689 = vpop.f32.mrf.mxu0
  %v690 = vadd.f32 %v566, %v689
  %v691 = vpop.f32.mrf.mxu0
  %692 = vmatprep.mubr.bf16.mxu0 0
  %693 = vmatmul.mubr.bf16.gmra.mxu0 %v602
  %v694 = vpop.f32.mrf.mxu0
  %v695 = vadd.f32 %v566, %v694
  %v696 = vpop.f32.mrf.mxu0
  %v697 = vpop.f32.mrf.mxu0
  %v698 = vadd.f32 %v566, %v697
  %v699 = vpop.f32.mrf.mxu0
  %700 = vdwg.mxu0
  %vm701 = vcmask 146432
  %702 = vst.msk [vmem:[%s4] sm:$0xff] %vm701, %v639
  %703 = vst.msk [vmem:[%s4 + $0x8] sm:$0xff] %vm701, %v642
  %704 = vst.msk [vmem:[%s4 + $0x10] sm:$0xff] %vm701, %v647
  %705 = vst.msk [vmem:[%s4 + $0x18] sm:$0xff] %vm701, %v650
  %706 = vst.msk [vmem:[%s4 + $0x20] sm:$0xff] %vm701, %v655
  %707 = vst.msk [vmem:[%s4 + $0x28] sm:$0xff] %vm701, %v658
  %708 = vst.msk [vmem:[%s4 + $0x30] sm:$0xff] %vm701, %v663
  %709 = vst.msk [vmem:[%s4 + $0x38] sm:$0xff] %vm701, %v666
  %710 = vst.msk [vmem:[%s4 + $0x40] sm:$0xff] %vm701, %v671
  %711 = vst.msk [vmem:[%s4 + $0x48] sm:$0xff] %vm701, %v674
  %712 = vst.msk [vmem:[%s4 + $0x50] sm:$0xff] %vm701, %v679
  %713 = vst.msk [vmem:[%s4 + $0x58] sm:$0xff] %vm701, %v682
  %714 = vst.msk [vmem:[%s4 + $0x60] sm:$0xff] %vm701, %v687
  %715 = vst.msk [vmem:[%s4 + $0x68] sm:$0xff] %vm701, %v690
  %716 = vst.msk [vmem:[%s4 + $0x70] sm:$0xff] %vm701, %v695
  %717 = vst.msk [vmem:[%s4 + $0x78] sm:$0xff] %vm701, %v698
  // Predicated region
  $region18: #{single_forward.13} parent=0 // pred_check
    _
  $region19: #{single_forward.13} parent=0 // pred_check_branch
    %719 = sbr.rel (0) target = $region21
  $region20: #{single_forward.13} parent=0 // pred_region
    _
  $region21: #{single_forward.13} parent=0 // pred_fallthru
    _
  // Predicated region
  $region22: #{single_forward.13} parent=0 // pred_check
    _
  $region23: #{single_forward.13} parent=0 // pred_check_branch
    %721 = sbr.rel (0) target = $region25
  $region24: #{single_forward.13} parent=0 // pred_region
    _
  $region25: #{single_forward.13} parent=0 // pred_fallthru
    _

</llo_original>
